<compile_context>
chip_gen: v7x
topology: tpu7x:2x2x1
jax: 0.10.0
libtpu: 0.0.40
codegen_flags: <defaults>
</compile_context>

<pallas_src>
import functools

import numpy as np
import jax
import jax.numpy as jnp
from jax import lax
from jax.experimental import pallas as pl
from jax.experimental.pallas import tpu as pltpu

# ---------------- configuration (small, consistent with the module) ----------
BATCH = 2
SEQ = 8
INPUT_SIZE = 16
HIDDEN = 16                  # options.bi_rnn_hidden_state (power of two)
NUM_LAYERS = 2               # options.num_rnn_layers
OUTPUT_SIZE = 2 * HIDDEN     # bidirectional LSTM feature size
QUERY_SIZE = OUTPUT_SIZE     # 'general' attention broadcasts query against 2H
NUM_DIRS = 2
GATE_W = 4 * NUM_DIRS * HIDDEN   # 128 = fused (fwd+bwd) gate width


# ---------------- fused Pallas kernel -----------------------------------------
def _fused_encoder_kernel(x_ref, h0_ref, c0_ref, *rest, num_layers, T, B, H):
    """Entire SequenceEncoder forward in one kernel.

    x_ref:   (T, B, I)               time-major input
    h0_ref:  (num_layers, B, 2H)     initial hidden states, fwd|bwd fused
    c0_ref:  (num_layers, B, 2H)     initial cell states,   fwd|bwd fused
    per layer l (3 refs each):
      wih_l: (I_l, 8H)  direction-fused input weights, gate-major layout
      whh_l: (2H, 8H)   block-diagonal direction-fused recurrent weights
      b_l:   (1, 8H)    fused bias (b_ih + b_hh)
    wlin:  (D, D)  self.linear weight^T      blin:  (1, D)
    vattn: (1, D)  fixed_query @ W_attn  (host pre-folded)
    out_ref: (B, D)
    scratch: gx_scr (T, B, 8H), yf_scr (T, B, H), yb_scr (T, B, H)
    """
    lw = rest[:3 * num_layers]
    (wlin_ref, blin_ref, vattn_ref,
     out_ref, gx_scr, yf_scr, yb_scr) = rest[3 * num_layers:]

    D = 2 * H          # per-gate fused width (fwd H + bwd H) == feature size
    GH = 8 * H         # total fused gate width (128 lanes)

    # Forward-direction lane mask for the gate-major fused layout:
    # lanes with (lane mod 2H) < H belong to the forward direction.
    # (H is a power of two, so mod is a bitwise AND.)
    lane = lax.broadcasted_iota(jnp.int32, (T, B, GH), 2)
    fwd_mask = (lane & (2 * H - 1)) < H

    # time-major rows: row index = t * B + b
    layer_in_2d = x_ref[...].reshape(T * B, x_ref.shape[2])

    for layer in range(num_layers):
        wih_ref, whh_ref, b_ref = lw[3 * layer:3 * layer + 3]

        # --- hoisted input projection: all timesteps, both directions, one
        # --- 128-lane-wide matmul (no serial dependency). ------------------
        gx = (jnp.dot(layer_in_2d, wih_ref[...],
                      preferred_element_type=jnp.float32)
              + b_ref[...]).reshape(T, B, GH)
        # Pre-swizzle: row-block i of gx_scr holds fwd gates(t=i) in the
        # forward lanes and bwd gates(t=T-1-i) in the backward lanes, so the
        # serial recurrence needs exactly ONE load (no select) per step.
        gx_rev = jnp.stack([gx[t] for t in range(T - 1, -1, -1)], axis=0)
        gx_scr[...] = jnp.where(fwd_mask, gx, gx_rev)

        whh = whh_ref[...]                                  # (2H, 8H)
        h_init = h0_ref[layer].astype(jnp.float32)          # (B, 2H)
        c_init = c0_ref[layer].astype(jnp.float32)          # (B, 2H)

        def step(i, carry):
            h, c = carry                                    # (B, 2H) vregs
            gates = gx_scr[i] + jnp.dot(h, whh,
                                        preferred_element_type=jnp.float32)
            sig = jax.nn.sigmoid(gates)                     # full-width (EUP)
            tnh = jnp.tanh(gates)
            i_g = sig[:, 0 * D:1 * D]                       # 32-lane aligned
            f_g = sig[:, 1 * D:2 * D]
            g_g = tnh[:, 2 * D:3 * D]
            o_g = sig[:, 3 * D:4 * D]
            c_new = f_g * c + i_g * g_g                     # (B, 2H)
            h_new = o_g * jnp.tanh(c_new)                   # (B, 2H)
            yf_scr[i] = h_new[:, :H]                        # fwd output @ t=i
            yb_scr[T - 1 - i] = h_new[:, H:]                # bwd output @ t=T-1-i
            return (h_new, c_new)

        lax.fori_loop(0, T, step, (h_init, c_init), unroll=True)

        layer_in_2d = jnp.concatenate(
            [yf_scr[...], yb_scr[...]], axis=-1).reshape(T * B, D)
        # TODO(synk): LSTM recurrent dropout between layers is identity in eval mode.

    # ---------------- Linear + tanh + 'general' attention pooling ------------
    # self.dropout: eval-mode identity.
    trans = jnp.tanh(jnp.dot(layer_in_2d, wlin_ref[...],
                             preferred_element_type=jnp.float32)
                     + blin_ref[...])                       # (T*B, D)
    trans3 = trans.reshape(T, B, D)

    # score(t,b) = q . (trans(t,b) @ W_attn^T + b_attn)
    #            = trans(t,b) . (q @ W_attn) + (q . b_attn)
    # The constant (q . b_attn) is identical for all t, so it cancels in the
    # softmax over T; (q @ W_attn) is pre-folded on the host into vattn.
    scores = jnp.sum(trans3 * vattn_ref[...], axis=-1, keepdims=True)  # (T,B,1)
    m = jnp.max(scores, axis=0, keepdims=True)              # softmax over T
    e = jnp.exp(scores - m)
    denom = jnp.sum(e, axis=0, keepdims=True)               # (1, B, 1)
    w = e * pl.reciprocal(denom, approx=False)              # (T, B, 1)
    out_ref[...] = jnp.sum(w * trans3, axis=0).astype(out_ref.dtype)   # (B, D)


# ---------------- wrapper ------------------------------------------------------
_VMEM = pl.BlockSpec(memory_space=pltpu.MemorySpace.VMEM)


def _fused_call(x_tm, h0f, c0f, kp):
    T, B, _ = x_tm.shape
    H = HIDDEN
    kernel = functools.partial(_fused_encoder_kernel, num_layers=NUM_LAYERS,
                               T=T, B=B, H=H)
    flat_w = []
    for layer in range(NUM_LAYERS):
        flat_w += [kp["wih"][layer], kp["whh"][layer], kp["b"][layer]]
    n_in = 3 + len(flat_w) + 3
    return pl.pallas_call(
        kernel,
        out_shape=jax.ShapeDtypeStruct((B, 2 * H), jnp.float32),
        in_specs=[_VMEM] * n_in,
        out_specs=_VMEM,
        scratch_shapes=[pltpu.VMEM((T, B, GATE_W), jnp.float32),
                        pltpu.VMEM((T, B, H), jnp.float32),
                        pltpu.VMEM((T, B, H), jnp.float32)],
    )(x_tm, h0f, c0f, *flat_w, kp["wlin_t"], kp["blin"], kp["vattn"])


@jax.jit
def sequence_encoder_forward(x, h0, c0, kparams):
    """x: (B, T, INPUT_SIZE); h0, c0: (NUM_LAYERS*2, B, HIDDEN). Returns (B, 2H)."""
    B = x.shape[0]
    # Tiny layout ops only; everything else is one fused kernel.
    x_tm = jnp.transpose(x, (1, 0, 2))                      # time-major input
    # (L*2, B, H) -> (L, B, 2H): fwd|bwd fused initial states per layer.
    h0f = h0.reshape(NUM_LAYERS, NUM_DIRS, B, HIDDEN).transpose(0, 2, 1, 3) \
            .reshape(NUM_LAYERS, B, 2 * HIDDEN)
    c0f = c0.reshape(NUM_LAYERS, NUM_DIRS, B, HIDDEN).transpose(0, 2, 1, 3) \
            .reshape(NUM_LAYERS, B, 2 * HIDDEN)
    return _fused_call(x_tm, h0f, c0f, kparams)


# ---------------- one-time parameter fusion (host side) ------------------------
def _fuse_bidir_weights(wih_f, whh_f, b_f, wih_b, whh_b, b_b, *, hidden):
    """Fuse fwd/bwd LSTM weights into a gate-major 8H layout.

    Column layout: [i_f i_b | f_f f_b | g_f g_b | o_f o_b], each block H wide.
    whh is block-diagonal over (fwd-h rows -> fwd cols, bwd-h rows -> bwd cols).
    """
    H = hidden
    z = jnp.zeros((H, H), jnp.float32)
    wih_cols, b_cols, whh_blocks = [], [], []
    for g in range(4):                        # PyTorch gate order i, f, g, o
        sl = slice(g * H, (g + 1) * H)
        wih_cols += [wih_f[:, sl], wih_b[:, sl]]
        b_cols += [b_f[:, sl], b_b[:, sl]]
        top = jnp.concatenate([whh_f[:, sl], z], axis=1)      # fwd h rows
        bot = jnp.concatenate([z, whh_b[:, sl]], axis=1)      # bwd h rows
        whh_blocks.append(jnp.concatenate([top, bot], axis=0))
    return (jnp.concatenate(wih_cols, axis=1),       # (I, 8H)
            jnp.concatenate(whh_blocks, axis=1),     # (2H, 8H)
            jnp.concatenate(b_cols, axis=1))         # (1, 8H)


def prepare_kernel_params(params):
    assert HIDDEN & (HIDDEN - 1) == 0, "gate-lane mask assumes H is a power of 2"
    wih, whh, bias = [], [], []
    for layer in range(NUM_LAYERS):
        fwd = params["lstm"][layer * NUM_DIRS]
        bwd = params["lstm"][layer * NUM_DIRS + 1]
        wf, wr, bf = _fuse_bidir_weights(*fwd, *bwd, hidden=HIDDEN)
        wih.append(wf)
        whh.append(wr)
        bias.append(bf)
    # Fold query into the attention weight (parameter-only; done once on host):
    #   score = trans . (q @ W_attn) + q . b_attn.
    # The scalar q . b_attn cancels in softmax over T, so only (q @ W_attn)
    # is needed by the kernel.
    q2 = params["query"].reshape(1, QUERY_SIZE)
    vattn = jnp.dot(q2, jnp.transpose(params["wattn_t"]))    # (1, D) = q @ W_attn
    return {
        "wih": tuple(wih), "whh": tuple(whh), "b": tuple(bias),
        "wlin_t": params["wlin_t"], "blin": params["blin"],
        "vattn": vattn,
    }


# ---------------- pure-JAX reference (for a sanity check) ---------------------
def reference_forward(x, h0, c0, params):
    layer_in = jnp.transpose(x, (1, 0, 2))
    for layer in range(NUM_LAYERS):
        outs = []
        for d in range(NUM_DIRS):
            idx = layer * NUM_DIRS + d
            wih_t, whh_t, b = params["lstm"][idx]
            T = layer_in.shape[0]
            h, c = h0[idx], c0[idx]
            ys = [None] * T
            order = range(T - 1, -1, -1) if d == 1 else range(T)
            for t in order:
                gates = layer_in[t] @ wih_t + h @ whh_t + b
                i_g = jax.nn.sigmoid(gates[:, :HIDDEN])
                f_g = jax.nn.sigmoid(gates[:, HIDDEN:2 * HIDDEN])
                g_g = jnp.tanh(gates[:, 2 * HIDDEN:3 * HIDDEN])
                o_g = jax.nn.sigmoid(gates[:, 3 * HIDDEN:])
                c = f_g * c + i_g * g_g
                h = o_g * jnp.tanh(c)
                ys[t] = h
            outs.append(jnp.stack(ys, axis=0))
        layer_in = jnp.concatenate(outs, axis=-1)
    seq_rep = jnp.transpose(layer_in, (1, 0, 2))
    trans = jnp.tanh(seq_rep @ params["wlin_t"] + params["blin"][0])
    energy = trans @ params["wattn_t"] + params["battn"][0]
    q = params["query"].reshape(1, 1, QUERY_SIZE)
    scores = jnp.sum(q * energy, axis=2)               # (B, T)
    w = jax.nn.softmax(scores, axis=1)
    return jnp.einsum("bt,btd->bd", w, trans)


# ---------------- deterministic parameter / input construction ----------------
def build_params_and_inputs():
    key = jax.random.PRNGKey(0)
    keys = iter(jax.random.split(key, 64))

    def rnd(shape, scale=0.1):
        return (scale * jax.random.normal(next(keys), shape)).astype(jnp.float32)

    lstm = []
    for layer in range(NUM_LAYERS):
        in_dim = INPUT_SIZE if layer == 0 else OUTPUT_SIZE
        for _ in range(NUM_DIRS):
            wih_t = rnd((in_dim, 4 * HIDDEN))          # W_ih^T (gate order i,f,g,o)
            whh_t = rnd((HIDDEN, 4 * HIDDEN))          # W_hh^T
            b = rnd((1, 4 * HIDDEN))                   # b_ih + b_hh combined
            lstm.append((wih_t, whh_t, b))

    params = {
        "lstm": tuple(lstm),
        "wlin_t": rnd((OUTPUT_SIZE, OUTPUT_SIZE)),     # self.linear.weight^T
        "blin": rnd((1, OUTPUT_SIZE)),                 # self.linear.bias
        "wattn_t": rnd((OUTPUT_SIZE, OUTPUT_SIZE)),    # Attn.attn.weight^T ('general')
        "battn": rnd((1, OUTPUT_SIZE)),                # Attn.attn.bias
        "query": rnd((1, 1, QUERY_SIZE), scale=1.0),   # self.fixed_query
    }

    x = rnd((BATCH, SEQ, INPUT_SIZE), scale=0.5)
    h0 = rnd((NUM_LAYERS * NUM_DIRS, BATCH, HIDDEN), scale=0.1)
    c0 = rnd((NUM_LAYERS * NUM_DIRS, BATCH, HIDDEN), scale=0.1)
    return params, x, h0, c0


if __name__ == "__main__":
    params, x, h0, c0 = build_params_and_inputs()
    kparams = prepare_kernel_params(params)     # one-time weight fusion (host)

    out = sequence_encoder_forward(x, h0, c0, kparams)
    out = jax.block_until_ready(out)

    ref = jax.block_until_ready(reference_forward(x, h0, c0, params))
    np.testing.assert_allclose(np.asarray(out), np.asarray(ref),
                               rtol=1e-3, atol=1e-3)
    assert out.shape == (BATCH, OUTPUT_SIZE)

    print("KERNEL_OK")
</pallas_src>

<mosaic_0001>
module attributes {stable_mosaic.version = 11 : i64} {
  func.func @_fused_encoder_kernel(%arg0: memref<8x2x16xf32, #tpu.memory_space<vmem>>, %arg1: memref<2x2x32xf32, #tpu.memory_space<vmem>>, %arg2: memref<2x2x32xf32, #tpu.memory_space<vmem>>, %arg3: memref<16x128xf32, #tpu.memory_space<vmem>>, %arg4: memref<32x128xf32, #tpu.memory_space<vmem>>, %arg5: memref<1x128xf32, #tpu.memory_space<vmem>>, %arg6: memref<32x128xf32, #tpu.memory_space<vmem>>, %arg7: memref<32x128xf32, #tpu.memory_space<vmem>>, %arg8: memref<1x128xf32, #tpu.memory_space<vmem>>, %arg9: memref<32x32xf32, #tpu.memory_space<vmem>>, %arg10: memref<1x32xf32, #tpu.memory_space<vmem>>, %arg11: memref<1x32xf32, #tpu.memory_space<vmem>>, %arg12: memref<2x32xf32, #tpu.memory_space<vmem>>, %arg13: memref<8x2x128xf32, #tpu.memory_space<vmem>>, %arg14: memref<8x2x16xf32, #tpu.memory_space<vmem>>, %arg15: memref<8x2x16xf32, #tpu.memory_space<vmem>>) attributes {dimension_semantics = [], scalar_prefetch = 0 : i64, scratch_operands = 3 : i64, tpu.core_type = #tpu.core_type<tc>} {
    %0 = tpu.iota {dimensions = array<i32: 2>} : vector<8x2x128xi32>
    %c31_i32 = arith.constant 31 : i32
    %1 = vector.broadcast %c31_i32 : i32 to vector<8x2x128xi32>
    %2 = arith.andi %0, %1 : vector<8x2x128xi32>
    %c16_i32 = arith.constant 16 : i32
    %3 = vector.broadcast %c16_i32 : i32 to vector<8x2x128xi32>
    %4 = arith.cmpi slt, %2, %3 : vector<8x2x128xi32>
    %c0 = arith.constant 0 : index
    %c0_0 = arith.constant 0 : index
    %c0_1 = arith.constant 0 : index
    %5 = vector.load %arg0[%c0, %c0_0, %c0_1] : memref<8x2x16xf32, #tpu.memory_space<vmem>>, vector<8x2x16xf32>
    %6 = vector.shape_cast %5 : vector<8x2x16xf32> to vector<16x16xf32>
    %c0_2 = arith.constant 0 : index
    %c0_3 = arith.constant 0 : index
    %7 = vector.load %arg3[%c0_2, %c0_3] : memref<16x128xf32, #tpu.memory_space<vmem>>, vector<16x128xf32>
    %cst = arith.constant dense<0.000000e+00> : vector<16x128xf32>
    %8 = tpu.matmul %6, %7, %cst {dimension_numbers = #tpu.dot_dimension_numbers<[1], [0], [0], [1], [0, 0, 1, 1], [], []>} : vector<16x16xf32>, vector<16x128xf32>, vector<16x128xf32> -> vector<16x128xf32>
    %c0_4 = arith.constant 0 : index
    %c0_5 = arith.constant 0 : index
    %9 = vector.load %arg5[%c0_4, %c0_5] : memref<1x128xf32, #tpu.memory_space<vmem>>, vector<1x128xf32>
    %10 = vector.broadcast %9 : vector<1x128xf32> to vector<16x128xf32>
    %11 = arith.addf %8, %10 : vector<16x128xf32>
    %12 = vector.shape_cast %11 : vector<16x128xf32> to vector<8x2x128xf32>
    %13 = vector.extract_strided_slice %12 {offsets = [7, 0, 0], sizes = [1, 2, 128], strides = [1, 1, 1]} : vector<8x2x128xf32> to vector<1x2x128xf32>
    %14 = vector.shape_cast %13 : vector<1x2x128xf32> to vector<2x128xf32>
    %15 = vector.extract_strided_slice %12 {offsets = [6, 0, 0], sizes = [1, 2, 128], strides = [1, 1, 1]} : vector<8x2x128xf32> to vector<1x2x128xf32>
    %16 = vector.shape_cast %15 : vector<1x2x128xf32> to vector<2x128xf32>
    %17 = vector.extract_strided_slice %12 {offsets = [5, 0, 0], sizes = [1, 2, 128], strides = [1, 1, 1]} : vector<8x2x128xf32> to vector<1x2x128xf32>
    %18 = vector.shape_cast %17 : vector<1x2x128xf32> to vector<2x128xf32>
    %19 = vector.extract_strided_slice %12 {offsets = [4, 0, 0], sizes = [1, 2, 128], strides = [1, 1, 1]} : vector<8x2x128xf32> to vector<1x2x128xf32>
    %20 = vector.shape_cast %19 : vector<1x2x128xf32> to vector<2x128xf32>
    %21 = vector.extract_strided_slice %12 {offsets = [3, 0, 0], sizes = [1, 2, 128], strides = [1, 1, 1]} : vector<8x2x128xf32> to vector<1x2x128xf32>
    %22 = vector.shape_cast %21 : vector<1x2x128xf32> to vector<2x128xf32>
    %23 = vector.extract_strided_slice %12 {offsets = [2, 0, 0], sizes = [1, 2, 128], strides = [1, 1, 1]} : vector<8x2x128xf32> to vector<1x2x128xf32>
    %24 = vector.shape_cast %23 : vector<1x2x128xf32> to vector<2x128xf32>
    %25 = vector.extract_strided_slice %12 {offsets = [1, 0, 0], sizes = [1, 2, 128], strides = [1, 1, 1]} : vector<8x2x128xf32> to vector<1x2x128xf32>
    %26 = vector.shape_cast %25 : vector<1x2x128xf32> to vector<2x128xf32>
    %27 = vector.extract_strided_slice %12 {offsets = [0, 0, 0], sizes = [1, 2, 128], strides = [1, 1, 1]} : vector<8x2x128xf32> to vector<1x2x128xf32>
    %28 = vector.shape_cast %27 : vector<1x2x128xf32> to vector<2x128xf32>
    %29 = vector.shape_cast %14 : vector<2x128xf32> to vector<1x2x128xf32>
    %30 = vector.shape_cast %16 : vector<2x128xf32> to vector<1x2x128xf32>
    %31 = vector.shape_cast %18 : vector<2x128xf32> to vector<1x2x128xf32>
    %32 = vector.shape_cast %20 : vector<2x128xf32> to vector<1x2x128xf32>
    %33 = vector.shape_cast %22 : vector<2x128xf32> to vector<1x2x128xf32>
    %34 = vector.shape_cast %24 : vector<2x128xf32> to vector<1x2x128xf32>
    %35 = vector.shape_cast %26 : vector<2x128xf32> to vector<1x2x128xf32>
    %36 = vector.shape_cast %28 : vector<2x128xf32> to vector<1x2x128xf32>
    %37 = tpu.concatenate %29, %30, %31, %32, %33, %34, %35, %36 in 0 : vector<1x2x128xf32>, vector<1x2x128xf32>, vector<1x2x128xf32>, vector<1x2x128xf32>, vector<1x2x128xf32>, vector<1x2x128xf32>, vector<1x2x128xf32>, vector<1x2x128xf32> -> vector<8x2x128xf32>
    %38 = arith.select %4, %12, %37 : vector<8x2x128xi1>, vector<8x2x128xf32>
    %c0_6 = arith.constant 0 : index
    %c0_7 = arith.constant 0 : index
    %c0_8 = arith.constant 0 : index
    %39 = vector.load %arg13[%c0_6, %c0_7, %c0_8] : memref<8x2x128xf32, #tpu.memory_space<vmem>>, vector<8x2x128xf32>
    tpu.vector_store %arg13[%c0_6, %c0_7, %c0_8], %38 {strides = array<i32>} : memref<8x2x128xf32, #tpu.memory_space<vmem>>, vector<8x2x128xf32>,
    %c0_9 = arith.constant 0 : index
    %c0_10 = arith.constant 0 : index
    %40 = vector.load %arg4[%c0_9, %c0_10] : memref<32x128xf32, #tpu.memory_space<vmem>>, vector<32x128xf32>
    %c0_11 = arith.constant 0 : index
    %c0_12 = arith.constant 0 : index
    %c0_13 = arith.constant 0 : index
    %41 = vector.load %arg1[%c0_11, %c0_12, %c0_13] : memref<2x2x32xf32, #tpu.memory_space<vmem>>, vector<1x2x32xf32>
    %42 = vector.shape_cast %41 : vector<1x2x32xf32> to vector<2x32xf32>
    %c0_14 = arith.constant 0 : index
    %c0_15 = arith.constant 0 : index
    %c0_16 = arith.constant 0 : index
    %43 = vector.load %arg2[%c0_14, %c0_15, %c0_16] : memref<2x2x32xf32, #tpu.memory_space<vmem>>, vector<1x2x32xf32>
    %44 = vector.shape_cast %43 : vector<1x2x32xf32> to vector<2x32xf32>
    %c0_i32 = arith.constant 0 : i32
    %45 = arith.index_cast %c0_i32 : i32 to index
    %c0_17 = arith.constant 0 : index
    %c0_18 = arith.constant 0 : index
    %46 = vector.load %arg13[%45, %c0_17, %c0_18] : memref<8x2x128xf32, #tpu.memory_space<vmem>>, vector<1x2x128xf32>
    %47 = vector.shape_cast %46 : vector<1x2x128xf32> to vector<2x128xf32>
    %cst_19 = arith.constant dense<0.000000e+00> : vector<2x128xf32>
    %48 = tpu.matmul %42, %40, %cst_19 {dimension_numbers = #tpu.dot_dimension_numbers<[1], [0], [0], [1], [0, 0, 1, 1], [], []>} : vector<2x32xf32>, vector<32x128xf32>, vector<2x128xf32> -> vector<2x128xf32>
    %49 = arith.addf %47, %48 : vector<2x128xf32>
    %50 = arith.negf %49 : vector<2x128xf32>
    %51 = math.exp %50 : vector<2x128xf32>
    %cst_20 = arith.constant 1.000000e+00 : f32
    %52 = vector.broadcast %cst_20 : f32 to vector<2x128xf32>
    %53 = arith.addf %52, %51 : vector<2x128xf32>
    %54 = arith.divf %52, %53 : vector<2x128xf32>
    %55 = math.tanh %49 : vector<2x128xf32>
    %56 = vector.extract_strided_slice %54 {offsets = [0, 0], sizes = [2, 32], strides = [1, 1]} : vector<2x128xf32> to vector<2x32xf32>
    %57 = vector.extract_strided_slice %54 {offsets = [0, 32], sizes = [2, 32], strides = [1, 1]} : vector<2x128xf32> to vector<2x32xf32>
    %58 = vector.extract_strided_slice %55 {offsets = [0, 64], sizes = [2, 32], strides = [1, 1]} : vector<2x128xf32> to vector<2x32xf32>
    %59 = vector.extract_strided_slice %54 {offsets = [0, 96], sizes = [2, 32], strides = [1, 1]} : vector<2x128xf32> to vector<2x32xf32>
    %60 = arith.mulf %57, %44 : vector<2x32xf32>
    %61 = arith.mulf %56, %58 : vector<2x32xf32>
    %62 = arith.addf %60, %61 : vector<2x32xf32>
    %63 = math.tanh %62 : vector<2x32xf32>
    %64 = arith.mulf %59, %63 : vector<2x32xf32>
    %65 = vector.extract_strided_slice %64 {offsets = [0, 0], sizes = [2, 16], strides = [1, 1]} : vector<2x32xf32> to vector<2x16xf32>
    %66 = arith.index_cast %c0_i32 : i32 to index
    %c0_21 = arith.constant 0 : index
    %c0_22 = arith.constant 0 : index
    %67 = vector.load %arg14[%66, %c0_21, %c0_22] : memref<8x2x16xf32, #tpu.memory_space<vmem>>, vector<1x2x16xf32>
    %68 = vector.shape_cast %67 : vector<1x2x16xf32> to vector<2x16xf32>
    %69 = vector.shape_cast %65 : vector<2x16xf32> to vector<1x2x16xf32>
    tpu.vector_store %arg14[%66, %c0_21, %c0_22], %69 {strides = array<i32>} : memref<8x2x16xf32, #tpu.memory_space<vmem>>, vector<1x2x16xf32>,
    %70 = vector.extract_strided_slice %64 {offsets = [0, 16], sizes = [2, 16], strides = [1, 1]} : vector<2x32xf32> to vector<2x16xf32>
    %c7_i32 = arith.constant 7 : i32
    %71 = arith.subi %c7_i32, %c0_i32 : i32
    %72 = arith.index_cast %71 : i32 to index
    %c0_23 = arith.constant 0 : index
    %c0_24 = arith.constant 0 : index
    %73 = vector.load %arg15[%72, %c0_23, %c0_24] : memref<8x2x16xf32, #tpu.memory_space<vmem>>, vector<1x2x16xf32>
    %74 = vector.shape_cast %73 : vector<1x2x16xf32> to vector<2x16xf32>
    %75 = vector.shape_cast %70 : vector<2x16xf32> to vector<1x2x16xf32>
    tpu.vector_store %arg15[%72, %c0_23, %c0_24], %75 {strides = array<i32>} : memref<8x2x16xf32, #tpu.memory_space<vmem>>, vector<1x2x16xf32>,
    %c1_i32 = arith.constant 1 : i32
    %76 = arith.index_cast %c1_i32 : i32 to index
    %c0_25 = arith.constant 0 : index
    %c0_26 = arith.constant 0 : index
    %77 = vector.load %arg13[%76, %c0_25, %c0_26] : memref<8x2x128xf32, #tpu.memory_space<vmem>>, vector<1x2x128xf32>
    %78 = vector.shape_cast %77 : vector<1x2x128xf32> to vector<2x128xf32>
    %cst_27 = arith.constant dense<0.000000e+00> : vector<2x128xf32>
    %79 = tpu.matmul %64, %40, %cst_27 {dimension_numbers = #tpu.dot_dimension_numbers<[1], [0], [0], [1], [0, 0, 1, 1], [], []>} : vector<2x32xf32>, vector<32x128xf32>, vector<2x128xf32> -> vector<2x128xf32>
    %80 = arith.addf %78, %79 : vector<2x128xf32>
    %81 = arith.negf %80 : vector<2x128xf32>
    %82 = math.exp %81 : vector<2x128xf32>
    %cst_28 = arith.constant 1.000000e+00 : f32
    %83 = vector.broadcast %cst_28 : f32 to vector<2x128xf32>
    %84 = arith.addf %83, %82 : vector<2x128xf32>
    %85 = arith.divf %83, %84 : vector<2x128xf32>
    %86 = math.tanh %80 : vector<2x128xf32>
    %87 = vector.extract_strided_slice %85 {offsets = [0, 0], sizes = [2, 32], strides = [1, 1]} : vector<2x128xf32> to vector<2x32xf32>
    %88 = vector.extract_strided_slice %85 {offsets = [0, 32], sizes = [2, 32], strides = [1, 1]} : vector<2x128xf32> to vector<2x32xf32>
    %89 = vector.extract_strided_slice %86 {offsets = [0, 64], sizes = [2, 32], strides = [1, 1]} : vector<2x128xf32> to vector<2x32xf32>
    %90 = vector.extract_strided_slice %85 {offsets = [0, 96], sizes = [2, 32], strides = [1, 1]} : vector<2x128xf32> to vector<2x32xf32>
    %91 = arith.mulf %88, %62 : vector<2x32xf32>
    %92 = arith.mulf %87, %89 : vector<2x32xf32>
    %93 = arith.addf %91, %92 : vector<2x32xf32>
    %94 = math.tanh %93 : vector<2x32xf32>
    %95 = arith.mulf %90, %94 : vector<2x32xf32>
    %96 = vector.extract_strided_slice %95 {offsets = [0, 0], sizes = [2, 16], strides = [1, 1]} : vector<2x32xf32> to vector<2x16xf32>
    %97 = arith.index_cast %c1_i32 : i32 to index
    %c0_29 = arith.constant 0 : index
    %c0_30 = arith.constant 0 : index
    %98 = vector.load %arg14[%97, %c0_29, %c0_30] : memref<8x2x16xf32, #tpu.memory_space<vmem>>, vector<1x2x16xf32>
    %99 = vector.shape_cast %98 : vector<1x2x16xf32> to vector<2x16xf32>
    %100 = vector.shape_cast %96 : vector<2x16xf32> to vector<1x2x16xf32>
    tpu.vector_store %arg14[%97, %c0_29, %c0_30], %100 {strides = array<i32>} : memref<8x2x16xf32, #tpu.memory_space<vmem>>, vector<1x2x16xf32>,
    %101 = vector.extract_strided_slice %95 {offsets = [0, 16], sizes = [2, 16], strides = [1, 1]} : vector<2x32xf32> to vector<2x16xf32>
    %c7_i32_31 = arith.constant 7 : i32
    %102 = arith.subi %c7_i32_31, %c1_i32 : i32
    %103 = arith.index_cast %102 : i32 to index
    %c0_32 = arith.constant 0 : index
    %c0_33 = arith.constant 0 : index
    %104 = vector.load %arg15[%103, %c0_32, %c0_33] : memref<8x2x16xf32, #tpu.memory_space<vmem>>, vector<1x2x16xf32>
    %105 = vector.shape_cast %104 : vector<1x2x16xf32> to vector<2x16xf32>
    %106 = vector.shape_cast %101 : vector<2x16xf32> to vector<1x2x16xf32>
    tpu.vector_store %arg15[%103, %c0_32, %c0_33], %106 {strides = array<i32>} : memref<8x2x16xf32, #tpu.memory_space<vmem>>, vector<1x2x16xf32>,
    %c2_i32 = arith.constant 2 : i32
    %107 = arith.index_cast %c2_i32 : i32 to index
    %c0_34 = arith.constant 0 : index
    %c0_35 = arith.constant 0 : index
    %108 = vector.load %arg13[%107, %c0_34, %c0_35] : memref<8x2x128xf32, #tpu.memory_space<vmem>>, vector<1x2x128xf32>
    %109 = vector.shape_cast %108 : vector<1x2x128xf32> to vector<2x128xf32>
    %cst_36 = arith.constant dense<0.000000e+00> : vector<2x128xf32>
    %110 = tpu.matmul %95, %40, %cst_36 {dimension_numbers = #tpu.dot_dimension_numbers<[1], [0], [0], [1], [0, 0, 1, 1], [], []>} : vector<2x32xf32>, vector<32x128xf32>, vector<2x128xf32> -> vector<2x128xf32>
    %111 = arith.addf %109, %110 : vector<2x128xf32>
    %112 = arith.negf %111 : vector<2x128xf32>
    %113 = math.exp %112 : vector<2x128xf32>
    %cst_37 = arith.constant 1.000000e+00 : f32
    %114 = vector.broadcast %cst_37 : f32 to vector<2x128xf32>
    %115 = arith.addf %114, %113 : vector<2x128xf32>
    %116 = arith.divf %114, %115 : vector<2x128xf32>
    %117 = math.tanh %111 : vector<2x128xf32>
    %118 = vector.extract_strided_slice %116 {offsets = [0, 0], sizes = [2, 32], strides = [1, 1]} : vector<2x128xf32> to vector<2x32xf32>
    %119 = vector.extract_strided_slice %116 {offsets = [0, 32], sizes = [2, 32], strides = [1, 1]} : vector<2x128xf32> to vector<2x32xf32>
    %120 = vector.extract_strided_slice %117 {offsets = [0, 64], sizes = [2, 32], strides = [1, 1]} : vector<2x128xf32> to vector<2x32xf32>
    %121 = vector.extract_strided_slice %116 {offsets = [0, 96], sizes = [2, 32], strides = [1, 1]} : vector<2x128xf32> to vector<2x32xf32>
    %122 = arith.mulf %119, %93 : vector<2x32xf32>
    %123 = arith.mulf %118, %120 : vector<2x32xf32>
    %124 = arith.addf %122, %123 : vector<2x32xf32>
    %125 = math.tanh %124 : vector<2x32xf32>
    %126 = arith.mulf %121, %125 : vector<2x32xf32>
    %127 = vector.extract_strided_slice %126 {offsets = [0, 0], sizes = [2, 16], strides = [1, 1]} : vector<2x32xf32> to vector<2x16xf32>
    %128 = arith.index_cast %c2_i32 : i32 to index
    %c0_38 = arith.constant 0 : index
    %c0_39 = arith.constant 0 : index
    %129 = vector.load %arg14[%128, %c0_38, %c0_39] : memref<8x2x16xf32, #tpu.memory_space<vmem>>, vector<1x2x16xf32>
    %130 = vector.shape_cast %129 : vector<1x2x16xf32> to vector<2x16xf32>
    %131 = vector.shape_cast %127 : vector<2x16xf32> to vector<1x2x16xf32>
    tpu.vector_store %arg14[%128, %c0_38, %c0_39], %131 {strides = array<i32>} : memref<8x2x16xf32, #tpu.memory_space<vmem>>, vector<1x2x16xf32>,
    %132 = vector.extract_strided_slice %126 {offsets = [0, 16], sizes = [2, 16], strides = [1, 1]} : vector<2x32xf32> to vector<2x16xf32>
    %c7_i32_40 = arith.constant 7 : i32
    %133 = arith.subi %c7_i32_40, %c2_i32 : i32
    %134 = arith.index_cast %133 : i32 to index
    %c0_41 = arith.constant 0 : index
    %c0_42 = arith.constant 0 : index
    %135 = vector.load %arg15[%134, %c0_41, %c0_42] : memref<8x2x16xf32, #tpu.memory_space<vmem>>, vector<1x2x16xf32>
    %136 = vector.shape_cast %135 : vector<1x2x16xf32> to vector<2x16xf32>
    %137 = vector.shape_cast %132 : vector<2x16xf32> to vector<1x2x16xf32>
    tpu.vector_store %arg15[%134, %c0_41, %c0_42], %137 {strides = array<i32>} : memref<8x2x16xf32, #tpu.memory_space<vmem>>, vector<1x2x16xf32>,
    %c3_i32 = arith.constant 3 : i32
    %138 = arith.index_cast %c3_i32 : i32 to index
    %c0_43 = arith.constant 0 : index
    %c0_44 = arith.constant 0 : index
    %139 = vector.load %arg13[%138, %c0_43, %c0_44] : memref<8x2x128xf32, #tpu.memory_space<vmem>>, vector<1x2x128xf32>
    %140 = vector.shape_cast %139 : vector<1x2x128xf32> to vector<2x128xf32>
    %cst_45 = arith.constant dense<0.000000e+00> : vector<2x128xf32>
    %141 = tpu.matmul %126, %40, %cst_45 {dimension_numbers = #tpu.dot_dimension_numbers<[1], [0], [0], [1], [0, 0, 1, 1], [], []>} : vector<2x32xf32>, vector<32x128xf32>, vector<2x128xf32> -> vector<2x128xf32>
    %142 = arith.addf %140, %141 : vector<2x128xf32>
    %143 = arith.negf %142 : vector<2x128xf32>
    %144 = math.exp %143 : vector<2x128xf32>
    %cst_46 = arith.constant 1.000000e+00 : f32
    %145 = vector.broadcast %cst_46 : f32 to vector<2x128xf32>
    %146 = arith.addf %145, %144 : vector<2x128xf32>
    %147 = arith.divf %145, %146 : vector<2x128xf32>
    %148 = math.tanh %142 : vector<2x128xf32>
    %149 = vector.extract_strided_slice %147 {offsets = [0, 0], sizes = [2, 32], strides = [1, 1]} : vector<2x128xf32> to vector<2x32xf32>
    %150 = vector.extract_strided_slice %147 {offsets = [0, 32], sizes = [2, 32], strides = [1, 1]} : vector<2x128xf32> to vector<2x32xf32>
    %151 = vector.extract_strided_slice %148 {offsets = [0, 64], sizes = [2, 32], strides = [1, 1]} : vector<2x128xf32> to vector<2x32xf32>
    %152 = vector.extract_strided_slice %147 {offsets = [0, 96], sizes = [2, 32], strides = [1, 1]} : vector<2x128xf32> to vector<2x32xf32>
    %153 = arith.mulf %150, %124 : vector<2x32xf32>
    %154 = arith.mulf %149, %151 : vector<2x32xf32>
    %155 = arith.addf %153, %154 : vector<2x32xf32>
    %156 = math.tanh %155 : vector<2x32xf32>
    %157 = arith.mulf %152, %156 : vector<2x32xf32>
    %158 = vector.extract_strided_slice %157 {offsets = [0, 0], sizes = [2, 16], strides = [1, 1]} : vector<2x32xf32> to vector<2x16xf32>
    %159 = arith.index_cast %c3_i32 : i32 to index
    %c0_47 = arith.constant 0 : index
    %c0_48 = arith.constant 0 : index
    %160 = vector.load %arg14[%159, %c0_47, %c0_48] : memref<8x2x16xf32, #tpu.memory_space<vmem>>, vector<1x2x16xf32>
    %161 = vector.shape_cast %160 : vector<1x2x16xf32> to vector<2x16xf32>
    %162 = vector.shape_cast %158 : vector<2x16xf32> to vector<1x2x16xf32>
    tpu.vector_store %arg14[%159, %c0_47, %c0_48], %162 {strides = array<i32>} : memref<8x2x16xf32, #tpu.memory_space<vmem>>, vector<1x2x16xf32>,
    %163 = vector.extract_strided_slice %157 {offsets = [0, 16], sizes = [2, 16], strides = [1, 1]} : vector<2x32xf32> to vector<2x16xf32>
    %c7_i32_49 = arith.constant 7 : i32
    %164 = arith.subi %c7_i32_49, %c3_i32 : i32
    %165 = arith.index_cast %164 : i32 to index
    %c0_50 = arith.constant 0 : index
    %c0_51 = arith.constant 0 : index
    %166 = vector.load %arg15[%165, %c0_50, %c0_51] : memref<8x2x16xf32, #tpu.memory_space<vmem>>, vector<1x2x16xf32>
    %167 = vector.shape_cast %166 : vector<1x2x16xf32> to vector<2x16xf32>
    %168 = vector.shape_cast %163 : vector<2x16xf32> to vector<1x2x16xf32>
    tpu.vector_store %arg15[%165, %c0_50, %c0_51], %168 {strides = array<i32>} : memref<8x2x16xf32, #tpu.memory_space<vmem>>, vector<1x2x16xf32>,
    %c4_i32 = arith.constant 4 : i32
    %169 = arith.index_cast %c4_i32 : i32 to index
    %c0_52 = arith.constant 0 : index
    %c0_53 = arith.constant 0 : index
    %170 = vector.load %arg13[%169, %c0_52, %c0_53] : memref<8x2x128xf32, #tpu.memory_space<vmem>>, vector<1x2x128xf32>
    %171 = vector.shape_cast %170 : vector<1x2x128xf32> to vector<2x128xf32>
    %cst_54 = arith.constant dense<0.000000e+00> : vector<2x128xf32>
    %172 = tpu.matmul %157, %40, %cst_54 {dimension_numbers = #tpu.dot_dimension_numbers<[1], [0], [0], [1], [0, 0, 1, 1], [], []>} : vector<2x32xf32>, vector<32x128xf32>, vector<2x128xf32> -> vector<2x128xf32>
    %173 = arith.addf %171, %172 : vector<2x128xf32>
    %174 = arith.negf %173 : vector<2x128xf32>
    %175 = math.exp %174 : vector<2x128xf32>
    %cst_55 = arith.constant 1.000000e+00 : f32
    %176 = vector.broadcast %cst_55 : f32 to vector<2x128xf32>
    %177 = arith.addf %176, %175 : vector<2x128xf32>
    %178 = arith.divf %176, %177 : vector<2x128xf32>
    %179 = math.tanh %173 : vector<2x128xf32>
    %180 = vector.extract_strided_slice %178 {offsets = [0, 0], sizes = [2, 32], strides = [1, 1]} : vector<2x128xf32> to vector<2x32xf32>
    %181 = vector.extract_strided_slice %178 {offsets = [0, 32], sizes = [2, 32], strides = [1, 1]} : vector<2x128xf32> to vector<2x32xf32>
    %182 = vector.extract_strided_slice %179 {offsets = [0, 64], sizes = [2, 32], strides = [1, 1]} : vector<2x128xf32> to vector<2x32xf32>
    %183 = vector.extract_strided_slice %178 {offsets = [0, 96], sizes = [2, 32], strides = [1, 1]} : vector<2x128xf32> to vector<2x32xf32>
    %184 = arith.mulf %181, %155 : vector<2x32xf32>
    %185 = arith.mulf %180, %182 : vector<2x32xf32>
    %186 = arith.addf %184, %185 : vector<2x32xf32>
    %187 = math.tanh %186 : vector<2x32xf32>
    %188 = arith.mulf %183, %187 : vector<2x32xf32>
    %189 = vector.extract_strided_slice %188 {offsets = [0, 0], sizes = [2, 16], strides = [1, 1]} : vector<2x32xf32> to vector<2x16xf32>
    %190 = arith.index_cast %c4_i32 : i32 to index
    %c0_56 = arith.constant 0 : index
    %c0_57 = arith.constant 0 : index
    %191 = vector.load %arg14[%190, %c0_56, %c0_57] : memref<8x2x16xf32, #tpu.memory_space<vmem>>, vector<1x2x16xf32>
    %192 = vector.shape_cast %191 : vector<1x2x16xf32> to vector<2x16xf32>
    %193 = vector.shape_cast %189 : vector<2x16xf32> to vector<1x2x16xf32>
    tpu.vector_store %arg14[%190, %c0_56, %c0_57], %193 {strides = array<i32>} : memref<8x2x16xf32, #tpu.memory_space<vmem>>, vector<1x2x16xf32>,
    %194 = vector.extract_strided_slice %188 {offsets = [0, 16], sizes = [2, 16], strides = [1, 1]} : vector<2x32xf32> to vector<2x16xf32>
    %c7_i32_58 = arith.constant 7 : i32
    %195 = arith.subi %c7_i32_58, %c4_i32 : i32
    %196 = arith.index_cast %195 : i32 to index
    %c0_59 = arith.constant 0 : index
    %c0_60 = arith.constant 0 : index
    %197 = vector.load %arg15[%196, %c0_59, %c0_60] : memref<8x2x16xf32, #tpu.memory_space<vmem>>, vector<1x2x16xf32>
    %198 = vector.shape_cast %197 : vector<1x2x16xf32> to vector<2x16xf32>
    %199 = vector.shape_cast %194 : vector<2x16xf32> to vector<1x2x16xf32>
    tpu.vector_store %arg15[%196, %c0_59, %c0_60], %199 {strides = array<i32>} : memref<8x2x16xf32, #tpu.memory_space<vmem>>, vector<1x2x16xf32>,
    %c5_i32 = arith.constant 5 : i32
    %200 = arith.index_cast %c5_i32 : i32 to index
    %c0_61 = arith.constant 0 : index
    %c0_62 = arith.constant 0 : index
    %201 = vector.load %arg13[%200, %c0_61, %c0_62] : memref<8x2x128xf32, #tpu.memory_space<vmem>>, vector<1x2x128xf32>
    %202 = vector.shape_cast %201 : vector<1x2x128xf32> to vector<2x128xf32>
    %cst_63 = arith.constant dense<0.000000e+00> : vector<2x128xf32>
    %203 = tpu.matmul %188, %40, %cst_63 {dimension_numbers = #tpu.dot_dimension_numbers<[1], [0], [0], [1], [0, 0, 1, 1], [], []>} : vector<2x32xf32>, vector<32x128xf32>, vector<2x128xf32> -> vector<2x128xf32>
    %204 = arith.addf %202, %203 : vector<2x128xf32>
    %205 = arith.negf %204 : vector<2x128xf32>
    %206 = math.exp %205 : vector<2x128xf32>
    %cst_64 = arith.constant 1.000000e+00 : f32
    %207 = vector.broadcast %cst_64 : f32 to vector<2x128xf32>
    %208 = arith.addf %207, %206 : vector<2x128xf32>
    %209 = arith.divf %207, %208 : vector<2x128xf32>
    %210 = math.tanh %204 : vector<2x128xf32>
    %211 = vector.extract_strided_slice %209 {offsets = [0, 0], sizes = [2, 32], strides = [1, 1]} : vector<2x128xf32> to vector<2x32xf32>
    %212 = vector.extract_strided_slice %209 {offsets = [0, 32], sizes = [2, 32], strides = [1, 1]} : vector<2x128xf32> to vector<2x32xf32>
    %213 = vector.extract_strided_slice %210 {offsets = [0, 64], sizes = [2, 32], strides = [1, 1]} : vector<2x128xf32> to vector<2x32xf32>
    %214 = vector.extract_strided_slice %209 {offsets = [0, 96], sizes = [2, 32], strides = [1, 1]} : vector<2x128xf32> to vector<2x32xf32>
    %215 = arith.mulf %212, %186 : vector<2x32xf32>
    %216 = arith.mulf %211, %213 : vector<2x32xf32>
    %217 = arith.addf %215, %216 : vector<2x32xf32>
    %218 = math.tanh %217 : vector<2x32xf32>
    %219 = arith.mulf %214, %218 : vector<2x32xf32>
    %220 = vector.extract_strided_slice %219 {offsets = [0, 0], sizes = [2, 16], strides = [1, 1]} : vector<2x32xf32> to vector<2x16xf32>
    %221 = arith.index_cast %c5_i32 : i32 to index
    %c0_65 = arith.constant 0 : index
    %c0_66 = arith.constant 0 : index
    %222 = vector.load %arg14[%221, %c0_65, %c0_66] : memref<8x2x16xf32, #tpu.memory_space<vmem>>, vector<1x2x16xf32>
    %223 = vector.shape_cast %222 : vector<1x2x16xf32> to vector<2x16xf32>
    %224 = vector.shape_cast %220 : vector<2x16xf32> to vector<1x2x16xf32>
    tpu.vector_store %arg14[%221, %c0_65, %c0_66], %224 {strides = array<i32>} : memref<8x2x16xf32, #tpu.memory_space<vmem>>, vector<1x2x16xf32>,
    %225 = vector.extract_strided_slice %219 {offsets = [0, 16], sizes = [2, 16], strides = [1, 1]} : vector<2x32xf32> to vector<2x16xf32>
    %c7_i32_67 = arith.constant 7 : i32
    %226 = arith.subi %c7_i32_67, %c5_i32 : i32
    %227 = arith.index_cast %226 : i32 to index
    %c0_68 = arith.constant 0 : index
    %c0_69 = arith.constant 0 : index
    %228 = vector.load %arg15[%227, %c0_68, %c0_69] : memref<8x2x16xf32, #tpu.memory_space<vmem>>, vector<1x2x16xf32>
    %229 = vector.shape_cast %228 : vector<1x2x16xf32> to vector<2x16xf32>
    %230 = vector.shape_cast %225 : vector<2x16xf32> to vector<1x2x16xf32>
    tpu.vector_store %arg15[%227, %c0_68, %c0_69], %230 {strides = array<i32>} : memref<8x2x16xf32, #tpu.memory_space<vmem>>, vector<1x2x16xf32>,
    %c6_i32 = arith.constant 6 : i32
    %231 = arith.index_cast %c6_i32 : i32 to index
    %c0_70 = arith.constant 0 : index
    %c0_71 = arith.constant 0 : index
    %232 = vector.load %arg13[%231, %c0_70, %c0_71] : memref<8x2x128xf32, #tpu.memory_space<vmem>>, vector<1x2x128xf32>
    %233 = vector.shape_cast %232 : vector<1x2x128xf32> to vector<2x128xf32>
    %cst_72 = arith.constant dense<0.000000e+00> : vector<2x128xf32>
    %234 = tpu.matmul %219, %40, %cst_72 {dimension_numbers = #tpu.dot_dimension_numbers<[1], [0], [0], [1], [0, 0, 1, 1], [], []>} : vector<2x32xf32>, vector<32x128xf32>, vector<2x128xf32> -> vector<2x128xf32>
    %235 = arith.addf %233, %234 : vector<2x128xf32>
    %236 = arith.negf %235 : vector<2x128xf32>
    %237 = math.exp %236 : vector<2x128xf32>
    %cst_73 = arith.constant 1.000000e+00 : f32
    %238 = vector.broadcast %cst_73 : f32 to vector<2x128xf32>
    %239 = arith.addf %238, %237 : vector<2x128xf32>
    %240 = arith.divf %238, %239 : vector<2x128xf32>
    %241 = math.tanh %235 : vector<2x128xf32>
    %242 = vector.extract_strided_slice %240 {offsets = [0, 0], sizes = [2, 32], strides = [1, 1]} : vector<2x128xf32> to vector<2x32xf32>
    %243 = vector.extract_strided_slice %240 {offsets = [0, 32], sizes = [2, 32], strides = [1, 1]} : vector<2x128xf32> to vector<2x32xf32>
    %244 = vector.extract_strided_slice %241 {offsets = [0, 64], sizes = [2, 32], strides = [1, 1]} : vector<2x128xf32> to vector<2x32xf32>
    %245 = vector.extract_strided_slice %240 {offsets = [0, 96], sizes = [2, 32], strides = [1, 1]} : vector<2x128xf32> to vector<2x32xf32>
    %246 = arith.mulf %243, %217 : vector<2x32xf32>
    %247 = arith.mulf %242, %244 : vector<2x32xf32>
    %248 = arith.addf %246, %247 : vector<2x32xf32>
    %249 = math.tanh %248 : vector<2x32xf32>
    %250 = arith.mulf %245, %249 : vector<2x32xf32>
    %251 = vector.extract_strided_slice %250 {offsets = [0, 0], sizes = [2, 16], strides = [1, 1]} : vector<2x32xf32> to vector<2x16xf32>
    %252 = arith.index_cast %c6_i32 : i32 to index
    %c0_74 = arith.constant 0 : index
    %c0_75 = arith.constant 0 : index
    %253 = vector.load %arg14[%252, %c0_74, %c0_75] : memref<8x2x16xf32, #tpu.memory_space<vmem>>, vector<1x2x16xf32>
    %254 = vector.shape_cast %253 : vector<1x2x16xf32> to vector<2x16xf32>
    %255 = vector.shape_cast %251 : vector<2x16xf32> to vector<1x2x16xf32>
    tpu.vector_store %arg14[%252, %c0_74, %c0_75], %255 {strides = array<i32>} : memref<8x2x16xf32, #tpu.memory_space<vmem>>, vector<1x2x16xf32>,
    %256 = vector.extract_strided_slice %250 {offsets = [0, 16], sizes = [2, 16], strides = [1, 1]} : vector<2x32xf32> to vector<2x16xf32>
    %c7_i32_76 = arith.constant 7 : i32
    %257 = arith.subi %c7_i32_76, %c6_i32 : i32
    %258 = arith.index_cast %257 : i32 to index
    %c0_77 = arith.constant 0 : index
    %c0_78 = arith.constant 0 : index
    %259 = vector.load %arg15[%258, %c0_77, %c0_78] : memref<8x2x16xf32, #tpu.memory_space<vmem>>, vector<1x2x16xf32>
    %260 = vector.shape_cast %259 : vector<1x2x16xf32> to vector<2x16xf32>
    %261 = vector.shape_cast %256 : vector<2x16xf32> to vector<1x2x16xf32>
    tpu.vector_store %arg15[%258, %c0_77, %c0_78], %261 {strides = array<i32>} : memref<8x2x16xf32, #tpu.memory_space<vmem>>, vector<1x2x16xf32>,
    %c7_i32_79 = arith.constant 7 : i32
    %262 = arith.index_cast %c7_i32_79 : i32 to index
    %c0_80 = arith.constant 0 : index
    %c0_81 = arith.constant 0 : index
    %263 = vector.load %arg13[%262, %c0_80, %c0_81] : memref<8x2x128xf32, #tpu.memory_space<vmem>>, vector<1x2x128xf32>
    %264 = vector.shape_cast %263 : vector<1x2x128xf32> to vector<2x128xf32>
    %cst_82 = arith.constant dense<0.000000e+00> : vector<2x128xf32>
    %265 = tpu.matmul %250, %40, %cst_82 {dimension_numbers = #tpu.dot_dimension_numbers<[1], [0], [0], [1], [0, 0, 1, 1], [], []>} : vector<2x32xf32>, vector<32x128xf32>, vector<2x128xf32> -> vector<2x128xf32>
    %266 = arith.addf %264, %265 : vector<2x128xf32>
    %267 = arith.negf %266 : vector<2x128xf32>
    %268 = math.exp %267 : vector<2x128xf32>
    %cst_83 = arith.constant 1.000000e+00 : f32
    %269 = vector.broadcast %cst_83 : f32 to vector<2x128xf32>
    %270 = arith.addf %269, %268 : vector<2x128xf32>
    %271 = arith.divf %269, %270 : vector<2x128xf32>
    %272 = math.tanh %266 : vector<2x128xf32>
    %273 = vector.extract_strided_slice %271 {offsets = [0, 0], sizes = [2, 32], strides = [1, 1]} : vector<2x128xf32> to vector<2x32xf32>
    %274 = vector.extract_strided_slice %271 {offsets = [0, 32], sizes = [2, 32], strides = [1, 1]} : vector<2x128xf32> to vector<2x32xf32>
    %275 = vector.extract_strided_slice %272 {offsets = [0, 64], sizes = [2, 32], strides = [1, 1]} : vector<2x128xf32> to vector<2x32xf32>
    %276 = vector.extract_strided_slice %271 {offsets = [0, 96], sizes = [2, 32], strides = [1, 1]} : vector<2x128xf32> to vector<2x32xf32>
    %277 = arith.mulf %274, %248 : vector<2x32xf32>
    %278 = arith.mulf %273, %275 : vector<2x32xf32>
    %279 = arith.addf %277, %278 : vector<2x32xf32>
    %280 = math.tanh %279 : vector<2x32xf32>
    %281 = arith.mulf %276, %280 : vector<2x32xf32>
    %282 = vector.extract_strided_slice %281 {offsets = [0, 0], sizes = [2, 16], strides = [1, 1]} : vector<2x32xf32> to vector<2x16xf32>
    %283 = arith.index_cast %c7_i32_79 : i32 to index
    %c0_84 = arith.constant 0 : index
    %c0_85 = arith.constant 0 : index
    %284 = vector.load %arg14[%283, %c0_84, %c0_85] : memref<8x2x16xf32, #tpu.memory_space<vmem>>, vector<1x2x16xf32>
    %285 = vector.shape_cast %284 : vector<1x2x16xf32> to vector<2x16xf32>
    %286 = vector.shape_cast %282 : vector<2x16xf32> to vector<1x2x16xf32>
    tpu.vector_store %arg14[%283, %c0_84, %c0_85], %286 {strides = array<i32>} : memref<8x2x16xf32, #tpu.memory_space<vmem>>, vector<1x2x16xf32>,
    %287 = vector.extract_strided_slice %281 {offsets = [0, 16], sizes = [2, 16], strides = [1, 1]} : vector<2x32xf32> to vector<2x16xf32>
    %c7_i32_86 = arith.constant 7 : i32
    %288 = arith.subi %c7_i32_86, %c7_i32_79 : i32
    %289 = arith.index_cast %288 : i32 to index
    %c0_87 = arith.constant 0 : index
    %c0_88 = arith.constant 0 : index
    %290 = vector.load %arg15[%289, %c0_87, %c0_88] : memref<8x2x16xf32, #tpu.memory_space<vmem>>, vector<1x2x16xf32>
    %291 = vector.shape_cast %290 : vector<1x2x16xf32> to vector<2x16xf32>
    %292 = vector.shape_cast %287 : vector<2x16xf32> to vector<1x2x16xf32>
    tpu.vector_store %arg15[%289, %c0_87, %c0_88], %292 {strides = array<i32>} : memref<8x2x16xf32, #tpu.memory_space<vmem>>, vector<1x2x16xf32>,
    %c8_i32 = arith.constant 8 : i32
    %c0_89 = arith.constant 0 : index
    %c0_90 = arith.constant 0 : index
    %c0_91 = arith.constant 0 : index
    %293 = vector.load %arg14[%c0_89, %c0_90, %c0_91] : memref<8x2x16xf32, #tpu.memory_space<vmem>>, vector<8x2x16xf32>
    %c0_92 = arith.constant 0 : index
    %c0_93 = arith.constant 0 : index
    %c0_94 = arith.constant 0 : index
    %294 = vector.load %arg15[%c0_92, %c0_93, %c0_94] : memref<8x2x16xf32, #tpu.memory_space<vmem>>, vector<8x2x16xf32>
    %295 = tpu.concatenate %293, %294 in 2 : vector<8x2x16xf32>, vector<8x2x16xf32> -> vector<8x2x32xf32>
    %296 = vector.shape_cast %295 : vector<8x2x32xf32> to vector<16x32xf32>
    %c0_95 = arith.constant 0 : index
    %c0_96 = arith.constant 0 : index
    %297 = vector.load %arg6[%c0_95, %c0_96] : memref<32x128xf32, #tpu.memory_space<vmem>>, vector<32x128xf32>
    %cst_97 = arith.constant dense<0.000000e+00> : vector<16x128xf32>
    %298 = tpu.matmul %296, %297, %cst_97 {dimension_numbers = #tpu.dot_dimension_numbers<[1], [0], [0], [1], [0, 0, 1, 1], [], []>} : vector<16x32xf32>, vector<32x128xf32>, vector<16x128xf32> -> vector<16x128xf32>
    %c0_98 = arith.constant 0 : index
    %c0_99 = arith.constant 0 : index
    %299 = vector.load %arg8[%c0_98, %c0_99] : memref<1x128xf32, #tpu.memory_space<vmem>>, vector<1x128xf32>
    %300 = vector.broadcast %299 : vector<1x128xf32> to vector<16x128xf32>
    %301 = arith.addf %298, %300 : vector<16x128xf32>
    %302 = vector.shape_cast %301 : vector<16x128xf32> to vector<8x2x128xf32>
    %303 = vector.extract_strided_slice %302 {offsets = [7, 0, 0], sizes = [1, 2, 128], strides = [1, 1, 1]} : vector<8x2x128xf32> to vector<1x2x128xf32>
    %304 = vector.shape_cast %303 : vector<1x2x128xf32> to vector<2x128xf32>
    %305 = vector.extract_strided_slice %302 {offsets = [6, 0, 0], sizes = [1, 2, 128], strides = [1, 1, 1]} : vector<8x2x128xf32> to vector<1x2x128xf32>
    %306 = vector.shape_cast %305 : vector<1x2x128xf32> to vector<2x128xf32>
    %307 = vector.extract_strided_slice %302 {offsets = [5, 0, 0], sizes = [1, 2, 128], strides = [1, 1, 1]} : vector<8x2x128xf32> to vector<1x2x128xf32>
    %308 = vector.shape_cast %307 : vector<1x2x128xf32> to vector<2x128xf32>
    %309 = vector.extract_strided_slice %302 {offsets = [4, 0, 0], sizes = [1, 2, 128], strides = [1, 1, 1]} : vector<8x2x128xf32> to vector<1x2x128xf32>
    %310 = vector.shape_cast %309 : vector<1x2x128xf32> to vector<2x128xf32>
    %311 = vector.extract_strided_slice %302 {offsets = [3, 0, 0], sizes = [1, 2, 128], strides = [1, 1, 1]} : vector<8x2x128xf32> to vector<1x2x128xf32>
    %312 = vector.shape_cast %311 : vector<1x2x128xf32> to vector<2x128xf32>
    %313 = vector.extract_strided_slice %302 {offsets = [2, 0, 0], sizes = [1, 2, 128], strides = [1, 1, 1]} : vector<8x2x128xf32> to vector<1x2x128xf32>
    %314 = vector.shape_cast %313 : vector<1x2x128xf32> to vector<2x128xf32>
    %315 = vector.extract_strided_slice %302 {offsets = [1, 0, 0], sizes = [1, 2, 128], strides = [1, 1, 1]} : vector<8x2x128xf32> to vector<1x2x128xf32>
    %316 = vector.shape_cast %315 : vector<1x2x128xf32> to vector<2x128xf32>
    %317 = vector.extract_strided_slice %302 {offsets = [0, 0, 0], sizes = [1, 2, 128], strides = [1, 1, 1]} : vector<8x2x128xf32> to vector<1x2x128xf32>
    %318 = vector.shape_cast %317 : vector<1x2x128xf32> to vector<2x128xf32>
    %319 = vector.shape_cast %304 : vector<2x128xf32> to vector<1x2x128xf32>
    %320 = vector.shape_cast %306 : vector<2x128xf32> to vector<1x2x128xf32>
    %321 = vector.shape_cast %308 : vector<2x128xf32> to vector<1x2x128xf32>
    %322 = vector.shape_cast %310 : vector<2x128xf32> to vector<1x2x128xf32>
    %323 = vector.shape_cast %312 : vector<2x128xf32> to vector<1x2x128xf32>
    %324 = vector.shape_cast %314 : vector<2x128xf32> to vector<1x2x128xf32>
    %325 = vector.shape_cast %316 : vector<2x128xf32> to vector<1x2x128xf32>
    %326 = vector.shape_cast %318 : vector<2x128xf32> to vector<1x2x128xf32>
    %327 = tpu.concatenate %319, %320, %321, %322, %323, %324, %325, %326 in 0 : vector<1x2x128xf32>, vector<1x2x128xf32>, vector<1x2x128xf32>, vector<1x2x128xf32>, vector<1x2x128xf32>, vector<1x2x128xf32>, vector<1x2x128xf32>, vector<1x2x128xf32> -> vector<8x2x128xf32>
    %328 = arith.select %4, %302, %327 : vector<8x2x128xi1>, vector<8x2x128xf32>
    %c0_100 = arith.constant 0 : index
    %c0_101 = arith.constant 0 : index
    %c0_102 = arith.constant 0 : index
    %329 = vector.load %arg13[%c0_100, %c0_101, %c0_102] : memref<8x2x128xf32, #tpu.memory_space<vmem>>, vector<8x2x128xf32>
    tpu.vector_store %arg13[%c0_100, %c0_101, %c0_102], %328 {strides = array<i32>} : memref<8x2x128xf32, #tpu.memory_space<vmem>>, vector<8x2x128xf32>,
    %c0_103 = arith.constant 0 : index
    %c0_104 = arith.constant 0 : index
    %330 = vector.load %arg7[%c0_103, %c0_104] : memref<32x128xf32, #tpu.memory_space<vmem>>, vector<32x128xf32>
    %c1 = arith.constant 1 : index
    %c0_105 = arith.constant 0 : index
    %c0_106 = arith.constant 0 : index
    %331 = vector.load %arg1[%c1, %c0_105, %c0_106] : memref<2x2x32xf32, #tpu.memory_space<vmem>>, vector<1x2x32xf32>
    %332 = vector.shape_cast %331 : vector<1x2x32xf32> to vector<2x32xf32>
    %c1_107 = arith.constant 1 : index
    %c0_108 = arith.constant 0 : index
    %c0_109 = arith.constant 0 : index
    %333 = vector.load %arg2[%c1_107, %c0_108, %c0_109] : memref<2x2x32xf32, #tpu.memory_space<vmem>>, vector<1x2x32xf32>
    %334 = vector.shape_cast %333 : vector<1x2x32xf32> to vector<2x32xf32>
    %c0_i32_110 = arith.constant 0 : i32
    %335 = arith.index_cast %c0_i32_110 : i32 to index
    %c0_111 = arith.constant 0 : index
    %c0_112 = arith.constant 0 : index
    %336 = vector.load %arg13[%335, %c0_111, %c0_112] : memref<8x2x128xf32, #tpu.memory_space<vmem>>, vector<1x2x128xf32>
    %337 = vector.shape_cast %336 : vector<1x2x128xf32> to vector<2x128xf32>
    %cst_113 = arith.constant dense<0.000000e+00> : vector<2x128xf32>
    %338 = tpu.matmul %332, %330, %cst_113 {dimension_numbers = #tpu.dot_dimension_numbers<[1], [0], [0], [1], [0, 0, 1, 1], [], []>} : vector<2x32xf32>, vector<32x128xf32>, vector<2x128xf32> -> vector<2x128xf32>
    %339 = arith.addf %337, %338 : vector<2x128xf32>
    %340 = arith.negf %339 : vector<2x128xf32>
    %341 = math.exp %340 : vector<2x128xf32>
    %cst_114 = arith.constant 1.000000e+00 : f32
    %342 = vector.broadcast %cst_114 : f32 to vector<2x128xf32>
    %343 = arith.addf %342, %341 : vector<2x128xf32>
    %344 = arith.divf %342, %343 : vector<2x128xf32>
    %345 = math.tanh %339 : vector<2x128xf32>
    %346 = vector.extract_strided_slice %344 {offsets = [0, 0], sizes = [2, 32], strides = [1, 1]} : vector<2x128xf32> to vector<2x32xf32>
    %347 = vector.extract_strided_slice %344 {offsets = [0, 32], sizes = [2, 32], strides = [1, 1]} : vector<2x128xf32> to vector<2x32xf32>
    %348 = vector.extract_strided_slice %345 {offsets = [0, 64], sizes = [2, 32], strides = [1, 1]} : vector<2x128xf32> to vector<2x32xf32>
    %349 = vector.extract_strided_slice %344 {offsets = [0, 96], sizes = [2, 32], strides = [1, 1]} : vector<2x128xf32> to vector<2x32xf32>
    %350 = arith.mulf %347, %334 : vector<2x32xf32>
    %351 = arith.mulf %346, %348 : vector<2x32xf32>
    %352 = arith.addf %350, %351 : vector<2x32xf32>
    %353 = math.tanh %352 : vector<2x32xf32>
    %354 = arith.mulf %349, %353 : vector<2x32xf32>
    %355 = vector.extract_strided_slice %354 {offsets = [0, 0], sizes = [2, 16], strides = [1, 1]} : vector<2x32xf32> to vector<2x16xf32>
    %356 = arith.index_cast %c0_i32_110 : i32 to index
    %c0_115 = arith.constant 0 : index
    %c0_116 = arith.constant 0 : index
    %357 = vector.load %arg14[%356, %c0_115, %c0_116] : memref<8x2x16xf32, #tpu.memory_space<vmem>>, vector<1x2x16xf32>
    %358 = vector.shape_cast %357 : vector<1x2x16xf32> to vector<2x16xf32>
    %359 = vector.shape_cast %355 : vector<2x16xf32> to vector<1x2x16xf32>
    tpu.vector_store %arg14[%356, %c0_115, %c0_116], %359 {strides = array<i32>} : memref<8x2x16xf32, #tpu.memory_space<vmem>>, vector<1x2x16xf32>,
    %360 = vector.extract_strided_slice %354 {offsets = [0, 16], sizes = [2, 16], strides = [1, 1]} : vector<2x32xf32> to vector<2x16xf32>
    %c7_i32_117 = arith.constant 7 : i32
    %361 = arith.subi %c7_i32_117, %c0_i32_110 : i32
    %362 = arith.index_cast %361 : i32 to index
    %c0_118 = arith.constant 0 : index
    %c0_119 = arith.constant 0 : index
    %363 = vector.load %arg15[%362, %c0_118, %c0_119] : memref<8x2x16xf32, #tpu.memory_space<vmem>>, vector<1x2x16xf32>
    %364 = vector.shape_cast %363 : vector<1x2x16xf32> to vector<2x16xf32>
    %365 = vector.shape_cast %360 : vector<2x16xf32> to vector<1x2x16xf32>
    tpu.vector_store %arg15[%362, %c0_118, %c0_119], %365 {strides = array<i32>} : memref<8x2x16xf32, #tpu.memory_space<vmem>>, vector<1x2x16xf32>,
    %c1_i32_120 = arith.constant 1 : i32
    %366 = arith.index_cast %c1_i32_120 : i32 to index
    %c0_121 = arith.constant 0 : index
    %c0_122 = arith.constant 0 : index
    %367 = vector.load %arg13[%366, %c0_121, %c0_122] : memref<8x2x128xf32, #tpu.memory_space<vmem>>, vector<1x2x128xf32>
    %368 = vector.shape_cast %367 : vector<1x2x128xf32> to vector<2x128xf32>
    %cst_123 = arith.constant dense<0.000000e+00> : vector<2x128xf32>
    %369 = tpu.matmul %354, %330, %cst_123 {dimension_numbers = #tpu.dot_dimension_numbers<[1], [0], [0], [1], [0, 0, 1, 1], [], []>} : vector<2x32xf32>, vector<32x128xf32>, vector<2x128xf32> -> vector<2x128xf32>
    %370 = arith.addf %368, %369 : vector<2x128xf32>
    %371 = arith.negf %370 : vector<2x128xf32>
    %372 = math.exp %371 : vector<2x128xf32>
    %cst_124 = arith.constant 1.000000e+00 : f32
    %373 = vector.broadcast %cst_124 : f32 to vector<2x128xf32>
    %374 = arith.addf %373, %372 : vector<2x128xf32>
    %375 = arith.divf %373, %374 : vector<2x128xf32>
    %376 = math.tanh %370 : vector<2x128xf32>
    %377 = vector.extract_strided_slice %375 {offsets = [0, 0], sizes = [2, 32], strides = [1, 1]} : vector<2x128xf32> to vector<2x32xf32>
    %378 = vector.extract_strided_slice %375 {offsets = [0, 32], sizes = [2, 32], strides = [1, 1]} : vector<2x128xf32> to vector<2x32xf32>
    %379 = vector.extract_strided_slice %376 {offsets = [0, 64], sizes = [2, 32], strides = [1, 1]} : vector<2x128xf32> to vector<2x32xf32>
    %380 = vector.extract_strided_slice %375 {offsets = [0, 96], sizes = [2, 32], strides = [1, 1]} : vector<2x128xf32> to vector<2x32xf32>
    %381 = arith.mulf %378, %352 : vector<2x32xf32>
    %382 = arith.mulf %377, %379 : vector<2x32xf32>
    %383 = arith.addf %381, %382 : vector<2x32xf32>
    %384 = math.tanh %383 : vector<2x32xf32>
    %385 = arith.mulf %380, %384 : vector<2x32xf32>
    %386 = vector.extract_strided_slice %385 {offsets = [0, 0], sizes = [2, 16], strides = [1, 1]} : vector<2x32xf32> to vector<2x16xf32>
    %387 = arith.index_cast %c1_i32_120 : i32 to index
    %c0_125 = arith.constant 0 : index
    %c0_126 = arith.constant 0 : index
    %388 = vector.load %arg14[%387, %c0_125, %c0_126] : memref<8x2x16xf32, #tpu.memory_space<vmem>>, vector<1x2x16xf32>
    %389 = vector.shape_cast %388 : vector<1x2x16xf32> to vector<2x16xf32>
    %390 = vector.shape_cast %386 : vector<2x16xf32> to vector<1x2x16xf32>
    tpu.vector_store %arg14[%387, %c0_125, %c0_126], %390 {strides = array<i32>} : memref<8x2x16xf32, #tpu.memory_space<vmem>>, vector<1x2x16xf32>,
    %391 = vector.extract_strided_slice %385 {offsets = [0, 16], sizes = [2, 16], strides = [1, 1]} : vector<2x32xf32> to vector<2x16xf32>
    %c7_i32_127 = arith.constant 7 : i32
    %392 = arith.subi %c7_i32_127, %c1_i32_120 : i32
    %393 = arith.index_cast %392 : i32 to index
    %c0_128 = arith.constant 0 : index
    %c0_129 = arith.constant 0 : index
    %394 = vector.load %arg15[%393, %c0_128, %c0_129] : memref<8x2x16xf32, #tpu.memory_space<vmem>>, vector<1x2x16xf32>
    %395 = vector.shape_cast %394 : vector<1x2x16xf32> to vector<2x16xf32>
    %396 = vector.shape_cast %391 : vector<2x16xf32> to vector<1x2x16xf32>
    tpu.vector_store %arg15[%393, %c0_128, %c0_129], %396 {strides = array<i32>} : memref<8x2x16xf32, #tpu.memory_space<vmem>>, vector<1x2x16xf32>,
    %c2_i32_130 = arith.constant 2 : i32
    %397 = arith.index_cast %c2_i32_130 : i32 to index
    %c0_131 = arith.constant 0 : index
    %c0_132 = arith.constant 0 : index
    %398 = vector.load %arg13[%397, %c0_131, %c0_132] : memref<8x2x128xf32, #tpu.memory_space<vmem>>, vector<1x2x128xf32>
    %399 = vector.shape_cast %398 : vector<1x2x128xf32> to vector<2x128xf32>
    %cst_133 = arith.constant dense<0.000000e+00> : vector<2x128xf32>
    %400 = tpu.matmul %385, %330, %cst_133 {dimension_numbers = #tpu.dot_dimension_numbers<[1], [0], [0], [1], [0, 0, 1, 1], [], []>} : vector<2x32xf32>, vector<32x128xf32>, vector<2x128xf32> -> vector<2x128xf32>
    %401 = arith.addf %399, %400 : vector<2x128xf32>
    %402 = arith.negf %401 : vector<2x128xf32>
    %403 = math.exp %402 : vector<2x128xf32>
    %cst_134 = arith.constant 1.000000e+00 : f32
    %404 = vector.broadcast %cst_134 : f32 to vector<2x128xf32>
    %405 = arith.addf %404, %403 : vector<2x128xf32>
    %406 = arith.divf %404, %405 : vector<2x128xf32>
    %407 = math.tanh %401 : vector<2x128xf32>
    %408 = vector.extract_strided_slice %406 {offsets = [0, 0], sizes = [2, 32], strides = [1, 1]} : vector<2x128xf32> to vector<2x32xf32>
    %409 = vector.extract_strided_slice %406 {offsets = [0, 32], sizes = [2, 32], strides = [1, 1]} : vector<2x128xf32> to vector<2x32xf32>
    %410 = vector.extract_strided_slice %407 {offsets = [0, 64], sizes = [2, 32], strides = [1, 1]} : vector<2x128xf32> to vector<2x32xf32>
    %411 = vector.extract_strided_slice %406 {offsets = [0, 96], sizes = [2, 32], strides = [1, 1]} : vector<2x128xf32> to vector<2x32xf32>
    %412 = arith.mulf %409, %383 : vector<2x32xf32>
    %413 = arith.mulf %408, %410 : vector<2x32xf32>
    %414 = arith.addf %412, %413 : vector<2x32xf32>
    %415 = math.tanh %414 : vector<2x32xf32>
    %416 = arith.mulf %411, %415 : vector<2x32xf32>
    %417 = vector.extract_strided_slice %416 {offsets = [0, 0], sizes = [2, 16], strides = [1, 1]} : vector<2x32xf32> to vector<2x16xf32>
    %418 = arith.index_cast %c2_i32_130 : i32 to index
    %c0_135 = arith.constant 0 : index
    %c0_136 = arith.constant 0 : index
    %419 = vector.load %arg14[%418, %c0_135, %c0_136] : memref<8x2x16xf32, #tpu.memory_space<vmem>>, vector<1x2x16xf32>
    %420 = vector.shape_cast %419 : vector<1x2x16xf32> to vector<2x16xf32>
    %421 = vector.shape_cast %417 : vector<2x16xf32> to vector<1x2x16xf32>
    tpu.vector_store %arg14[%418, %c0_135, %c0_136], %421 {strides = array<i32>} : memref<8x2x16xf32, #tpu.memory_space<vmem>>, vector<1x2x16xf32>,
    %422 = vector.extract_strided_slice %416 {offsets = [0, 16], sizes = [2, 16], strides = [1, 1]} : vector<2x32xf32> to vector<2x16xf32>
    %c7_i32_137 = arith.constant 7 : i32
    %423 = arith.subi %c7_i32_137, %c2_i32_130 : i32
    %424 = arith.index_cast %423 : i32 to index
    %c0_138 = arith.constant 0 : index
    %c0_139 = arith.constant 0 : index
    %425 = vector.load %arg15[%424, %c0_138, %c0_139] : memref<8x2x16xf32, #tpu.memory_space<vmem>>, vector<1x2x16xf32>
    %426 = vector.shape_cast %425 : vector<1x2x16xf32> to vector<2x16xf32>
    %427 = vector.shape_cast %422 : vector<2x16xf32> to vector<1x2x16xf32>
    tpu.vector_store %arg15[%424, %c0_138, %c0_139], %427 {strides = array<i32>} : memref<8x2x16xf32, #tpu.memory_space<vmem>>, vector<1x2x16xf32>,
    %c3_i32_140 = arith.constant 3 : i32
    %428 = arith.index_cast %c3_i32_140 : i32 to index
    %c0_141 = arith.constant 0 : index
    %c0_142 = arith.constant 0 : index
    %429 = vector.load %arg13[%428, %c0_141, %c0_142] : memref<8x2x128xf32, #tpu.memory_space<vmem>>, vector<1x2x128xf32>
    %430 = vector.shape_cast %429 : vector<1x2x128xf32> to vector<2x128xf32>
    %cst_143 = arith.constant dense<0.000000e+00> : vector<2x128xf32>
    %431 = tpu.matmul %416, %330, %cst_143 {dimension_numbers = #tpu.dot_dimension_numbers<[1], [0], [0], [1], [0, 0, 1, 1], [], []>} : vector<2x32xf32>, vector<32x128xf32>, vector<2x128xf32> -> vector<2x128xf32>
    %432 = arith.addf %430, %431 : vector<2x128xf32>
    %433 = arith.negf %432 : vector<2x128xf32>
    %434 = math.exp %433 : vector<2x128xf32>
    %cst_144 = arith.constant 1.000000e+00 : f32
    %435 = vector.broadcast %cst_144 : f32 to vector<2x128xf32>
    %436 = arith.addf %435, %434 : vector<2x128xf32>
    %437 = arith.divf %435, %436 : vector<2x128xf32>
    %438 = math.tanh %432 : vector<2x128xf32>
    %439 = vector.extract_strided_slice %437 {offsets = [0, 0], sizes = [2, 32], strides = [1, 1]} : vector<2x128xf32> to vector<2x32xf32>
    %440 = vector.extract_strided_slice %437 {offsets = [0, 32], sizes = [2, 32], strides = [1, 1]} : vector<2x128xf32> to vector<2x32xf32>
    %441 = vector.extract_strided_slice %438 {offsets = [0, 64], sizes = [2, 32], strides = [1, 1]} : vector<2x128xf32> to vector<2x32xf32>
    %442 = vector.extract_strided_slice %437 {offsets = [0, 96], sizes = [2, 32], strides = [1, 1]} : vector<2x128xf32> to vector<2x32xf32>
    %443 = arith.mulf %440, %414 : vector<2x32xf32>
    %444 = arith.mulf %439, %441 : vector<2x32xf32>
    %445 = arith.addf %443, %444 : vector<2x32xf32>
    %446 = math.tanh %445 : vector<2x32xf32>
    %447 = arith.mulf %442, %446 : vector<2x32xf32>
    %448 = vector.extract_strided_slice %447 {offsets = [0, 0], sizes = [2, 16], strides = [1, 1]} : vector<2x32xf32> to vector<2x16xf32>
    %449 = arith.index_cast %c3_i32_140 : i32 to index
    %c0_145 = arith.constant 0 : index
    %c0_146 = arith.constant 0 : index
    %450 = vector.load %arg14[%449, %c0_145, %c0_146] : memref<8x2x16xf32, #tpu.memory_space<vmem>>, vector<1x2x16xf32>
    %451 = vector.shape_cast %450 : vector<1x2x16xf32> to vector<2x16xf32>
    %452 = vector.shape_cast %448 : vector<2x16xf32> to vector<1x2x16xf32>
    tpu.vector_store %arg14[%449, %c0_145, %c0_146], %452 {strides = array<i32>} : memref<8x2x16xf32, #tpu.memory_space<vmem>>, vector<1x2x16xf32>,
    %453 = vector.extract_strided_slice %447 {offsets = [0, 16], sizes = [2, 16], strides = [1, 1]} : vector<2x32xf32> to vector<2x16xf32>
    %c7_i32_147 = arith.constant 7 : i32
    %454 = arith.subi %c7_i32_147, %c3_i32_140 : i32
    %455 = arith.index_cast %454 : i32 to index
    %c0_148 = arith.constant 0 : index
    %c0_149 = arith.constant 0 : index
    %456 = vector.load %arg15[%455, %c0_148, %c0_149] : memref<8x2x16xf32, #tpu.memory_space<vmem>>, vector<1x2x16xf32>
    %457 = vector.shape_cast %456 : vector<1x2x16xf32> to vector<2x16xf32>
    %458 = vector.shape_cast %453 : vector<2x16xf32> to vector<1x2x16xf32>
    tpu.vector_store %arg15[%455, %c0_148, %c0_149], %458 {strides = array<i32>} : memref<8x2x16xf32, #tpu.memory_space<vmem>>, vector<1x2x16xf32>,
    %c4_i32_150 = arith.constant 4 : i32
    %459 = arith.index_cast %c4_i32_150 : i32 to index
    %c0_151 = arith.constant 0 : index
    %c0_152 = arith.constant 0 : index
    %460 = vector.load %arg13[%459, %c0_151, %c0_152] : memref<8x2x128xf32, #tpu.memory_space<vmem>>, vector<1x2x128xf32>
    %461 = vector.shape_cast %460 : vector<1x2x128xf32> to vector<2x128xf32>
    %cst_153 = arith.constant dense<0.000000e+00> : vector<2x128xf32>
    %462 = tpu.matmul %447, %330, %cst_153 {dimension_numbers = #tpu.dot_dimension_numbers<[1], [0], [0], [1], [0, 0, 1, 1], [], []>} : vector<2x32xf32>, vector<32x128xf32>, vector<2x128xf32> -> vector<2x128xf32>
    %463 = arith.addf %461, %462 : vector<2x128xf32>
    %464 = arith.negf %463 : vector<2x128xf32>
    %465 = math.exp %464 : vector<2x128xf32>
    %cst_154 = arith.constant 1.000000e+00 : f32
    %466 = vector.broadcast %cst_154 : f32 to vector<2x128xf32>
    %467 = arith.addf %466, %465 : vector<2x128xf32>
    %468 = arith.divf %466, %467 : vector<2x128xf32>
    %469 = math.tanh %463 : vector<2x128xf32>
    %470 = vector.extract_strided_slice %468 {offsets = [0, 0], sizes = [2, 32], strides = [1, 1]} : vector<2x128xf32> to vector<2x32xf32>
    %471 = vector.extract_strided_slice %468 {offsets = [0, 32], sizes = [2, 32], strides = [1, 1]} : vector<2x128xf32> to vector<2x32xf32>
    %472 = vector.extract_strided_slice %469 {offsets = [0, 64], sizes = [2, 32], strides = [1, 1]} : vector<2x128xf32> to vector<2x32xf32>
    %473 = vector.extract_strided_slice %468 {offsets = [0, 96], sizes = [2, 32], strides = [1, 1]} : vector<2x128xf32> to vector<2x32xf32>
    %474 = arith.mulf %471, %445 : vector<2x32xf32>
    %475 = arith.mulf %470, %472 : vector<2x32xf32>
    %476 = arith.addf %474, %475 : vector<2x32xf32>
    %477 = math.tanh %476 : vector<2x32xf32>
    %478 = arith.mulf %473, %477 : vector<2x32xf32>
    %479 = vector.extract_strided_slice %478 {offsets = [0, 0], sizes = [2, 16], strides = [1, 1]} : vector<2x32xf32> to vector<2x16xf32>
    %480 = arith.index_cast %c4_i32_150 : i32 to index
    %c0_155 = arith.constant 0 : index
    %c0_156 = arith.constant 0 : index
    %481 = vector.load %arg14[%480, %c0_155, %c0_156] : memref<8x2x16xf32, #tpu.memory_space<vmem>>, vector<1x2x16xf32>
    %482 = vector.shape_cast %481 : vector<1x2x16xf32> to vector<2x16xf32>
    %483 = vector.shape_cast %479 : vector<2x16xf32> to vector<1x2x16xf32>
    tpu.vector_store %arg14[%480, %c0_155, %c0_156], %483 {strides = array<i32>} : memref<8x2x16xf32, #tpu.memory_space<vmem>>, vector<1x2x16xf32>,
    %484 = vector.extract_strided_slice %478 {offsets = [0, 16], sizes = [2, 16], strides = [1, 1]} : vector<2x32xf32> to vector<2x16xf32>
    %c7_i32_157 = arith.constant 7 : i32
    %485 = arith.subi %c7_i32_157, %c4_i32_150 : i32
    %486 = arith.index_cast %485 : i32 to index
    %c0_158 = arith.constant 0 : index
    %c0_159 = arith.constant 0 : index
    %487 = vector.load %arg15[%486, %c0_158, %c0_159] : memref<8x2x16xf32, #tpu.memory_space<vmem>>, vector<1x2x16xf32>
    %488 = vector.shape_cast %487 : vector<1x2x16xf32> to vector<2x16xf32>
    %489 = vector.shape_cast %484 : vector<2x16xf32> to vector<1x2x16xf32>
    tpu.vector_store %arg15[%486, %c0_158, %c0_159], %489 {strides = array<i32>} : memref<8x2x16xf32, #tpu.memory_space<vmem>>, vector<1x2x16xf32>,
    %c5_i32_160 = arith.constant 5 : i32
    %490 = arith.index_cast %c5_i32_160 : i32 to index
    %c0_161 = arith.constant 0 : index
    %c0_162 = arith.constant 0 : index
    %491 = vector.load %arg13[%490, %c0_161, %c0_162] : memref<8x2x128xf32, #tpu.memory_space<vmem>>, vector<1x2x128xf32>
    %492 = vector.shape_cast %491 : vector<1x2x128xf32> to vector<2x128xf32>
    %cst_163 = arith.constant dense<0.000000e+00> : vector<2x128xf32>
    %493 = tpu.matmul %478, %330, %cst_163 {dimension_numbers = #tpu.dot_dimension_numbers<[1], [0], [0], [1], [0, 0, 1, 1], [], []>} : vector<2x32xf32>, vector<32x128xf32>, vector<2x128xf32> -> vector<2x128xf32>
    %494 = arith.addf %492, %493 : vector<2x128xf32>
    %495 = arith.negf %494 : vector<2x128xf32>
    %496 = math.exp %495 : vector<2x128xf32>
    %cst_164 = arith.constant 1.000000e+00 : f32
    %497 = vector.broadcast %cst_164 : f32 to vector<2x128xf32>
    %498 = arith.addf %497, %496 : vector<2x128xf32>
    %499 = arith.divf %497, %498 : vector<2x128xf32>
    %500 = math.tanh %494 : vector<2x128xf32>
    %501 = vector.extract_strided_slice %499 {offsets = [0, 0], sizes = [2, 32], strides = [1, 1]} : vector<2x128xf32> to vector<2x32xf32>
    %502 = vector.extract_strided_slice %499 {offsets = [0, 32], sizes = [2, 32], strides = [1, 1]} : vector<2x128xf32> to vector<2x32xf32>
    %503 = vector.extract_strided_slice %500 {offsets = [0, 64], sizes = [2, 32], strides = [1, 1]} : vector<2x128xf32> to vector<2x32xf32>
    %504 = vector.extract_strided_slice %499 {offsets = [0, 96], sizes = [2, 32], strides = [1, 1]} : vector<2x128xf32> to vector<2x32xf32>
    %505 = arith.mulf %502, %476 : vector<2x32xf32>
    %506 = arith.mulf %501, %503 : vector<2x32xf32>
    %507 = arith.addf %505, %506 : vector<2x32xf32>
    %508 = math.tanh %507 : vector<2x32xf32>
    %509 = arith.mulf %504, %508 : vector<2x32xf32>
    %510 = vector.extract_strided_slice %509 {offsets = [0, 0], sizes = [2, 16], strides = [1, 1]} : vector<2x32xf32> to vector<2x16xf32>
    %511 = arith.index_cast %c5_i32_160 : i32 to index
    %c0_165 = arith.constant 0 : index
    %c0_166 = arith.constant 0 : index
    %512 = vector.load %arg14[%511, %c0_165, %c0_166] : memref<8x2x16xf32, #tpu.memory_space<vmem>>, vector<1x2x16xf32>
    %513 = vector.shape_cast %512 : vector<1x2x16xf32> to vector<2x16xf32>
    %514 = vector.shape_cast %510 : vector<2x16xf32> to vector<1x2x16xf32>
    tpu.vector_store %arg14[%511, %c0_165, %c0_166], %514 {strides = array<i32>} : memref<8x2x16xf32, #tpu.memory_space<vmem>>, vector<1x2x16xf32>,
    %515 = vector.extract_strided_slice %509 {offsets = [0, 16], sizes = [2, 16], strides = [1, 1]} : vector<2x32xf32> to vector<2x16xf32>
    %c7_i32_167 = arith.constant 7 : i32
    %516 = arith.subi %c7_i32_167, %c5_i32_160 : i32
    %517 = arith.index_cast %516 : i32 to index
    %c0_168 = arith.constant 0 : index
    %c0_169 = arith.constant 0 : index
    %518 = vector.load %arg15[%517, %c0_168, %c0_169] : memref<8x2x16xf32, #tpu.memory_space<vmem>>, vector<1x2x16xf32>
    %519 = vector.shape_cast %518 : vector<1x2x16xf32> to vector<2x16xf32>
    %520 = vector.shape_cast %515 : vector<2x16xf32> to vector<1x2x16xf32>
    tpu.vector_store %arg15[%517, %c0_168, %c0_169], %520 {strides = array<i32>} : memref<8x2x16xf32, #tpu.memory_space<vmem>>, vector<1x2x16xf32>,
    %c6_i32_170 = arith.constant 6 : i32
    %521 = arith.index_cast %c6_i32_170 : i32 to index
    %c0_171 = arith.constant 0 : index
    %c0_172 = arith.constant 0 : index
    %522 = vector.load %arg13[%521, %c0_171, %c0_172] : memref<8x2x128xf32, #tpu.memory_space<vmem>>, vector<1x2x128xf32>
    %523 = vector.shape_cast %522 : vector<1x2x128xf32> to vector<2x128xf32>
    %cst_173 = arith.constant dense<0.000000e+00> : vector<2x128xf32>
    %524 = tpu.matmul %509, %330, %cst_173 {dimension_numbers = #tpu.dot_dimension_numbers<[1], [0], [0], [1], [0, 0, 1, 1], [], []>} : vector<2x32xf32>, vector<32x128xf32>, vector<2x128xf32> -> vector<2x128xf32>
    %525 = arith.addf %523, %524 : vector<2x128xf32>
    %526 = arith.negf %525 : vector<2x128xf32>
    %527 = math.exp %526 : vector<2x128xf32>
    %cst_174 = arith.constant 1.000000e+00 : f32
    %528 = vector.broadcast %cst_174 : f32 to vector<2x128xf32>
    %529 = arith.addf %528, %527 : vector<2x128xf32>
    %530 = arith.divf %528, %529 : vector<2x128xf32>
    %531 = math.tanh %525 : vector<2x128xf32>
    %532 = vector.extract_strided_slice %530 {offsets = [0, 0], sizes = [2, 32], strides = [1, 1]} : vector<2x128xf32> to vector<2x32xf32>
    %533 = vector.extract_strided_slice %530 {offsets = [0, 32], sizes = [2, 32], strides = [1, 1]} : vector<2x128xf32> to vector<2x32xf32>
    %534 = vector.extract_strided_slice %531 {offsets = [0, 64], sizes = [2, 32], strides = [1, 1]} : vector<2x128xf32> to vector<2x32xf32>
    %535 = vector.extract_strided_slice %530 {offsets = [0, 96], sizes = [2, 32], strides = [1, 1]} : vector<2x128xf32> to vector<2x32xf32>
    %536 = arith.mulf %533, %507 : vector<2x32xf32>
    %537 = arith.mulf %532, %534 : vector<2x32xf32>
    %538 = arith.addf %536, %537 : vector<2x32xf32>
    %539 = math.tanh %538 : vector<2x32xf32>
    %540 = arith.mulf %535, %539 : vector<2x32xf32>
    %541 = vector.extract_strided_slice %540 {offsets = [0, 0], sizes = [2, 16], strides = [1, 1]} : vector<2x32xf32> to vector<2x16xf32>
    %542 = arith.index_cast %c6_i32_170 : i32 to index
    %c0_175 = arith.constant 0 : index
    %c0_176 = arith.constant 0 : index
    %543 = vector.load %arg14[%542, %c0_175, %c0_176] : memref<8x2x16xf32, #tpu.memory_space<vmem>>, vector<1x2x16xf32>
    %544 = vector.shape_cast %543 : vector<1x2x16xf32> to vector<2x16xf32>
    %545 = vector.shape_cast %541 : vector<2x16xf32> to vector<1x2x16xf32>
    tpu.vector_store %arg14[%542, %c0_175, %c0_176], %545 {strides = array<i32>} : memref<8x2x16xf32, #tpu.memory_space<vmem>>, vector<1x2x16xf32>,
    %546 = vector.extract_strided_slice %540 {offsets = [0, 16], sizes = [2, 16], strides = [1, 1]} : vector<2x32xf32> to vector<2x16xf32>
    %c7_i32_177 = arith.constant 7 : i32
    %547 = arith.subi %c7_i32_177, %c6_i32_170 : i32
    %548 = arith.index_cast %547 : i32 to index
    %c0_178 = arith.constant 0 : index
    %c0_179 = arith.constant 0 : index
    %549 = vector.load %arg15[%548, %c0_178, %c0_179] : memref<8x2x16xf32, #tpu.memory_space<vmem>>, vector<1x2x16xf32>
    %550 = vector.shape_cast %549 : vector<1x2x16xf32> to vector<2x16xf32>
    %551 = vector.shape_cast %546 : vector<2x16xf32> to vector<1x2x16xf32>
    tpu.vector_store %arg15[%548, %c0_178, %c0_179], %551 {strides = array<i32>} : memref<8x2x16xf32, #tpu.memory_space<vmem>>, vector<1x2x16xf32>,
    %c7_i32_180 = arith.constant 7 : i32
    %552 = arith.index_cast %c7_i32_180 : i32 to index
    %c0_181 = arith.constant 0 : index
    %c0_182 = arith.constant 0 : index
    %553 = vector.load %arg13[%552, %c0_181, %c0_182] : memref<8x2x128xf32, #tpu.memory_space<vmem>>, vector<1x2x128xf32>
    %554 = vector.shape_cast %553 : vector<1x2x128xf32> to vector<2x128xf32>
    %cst_183 = arith.constant dense<0.000000e+00> : vector<2x128xf32>
    %555 = tpu.matmul %540, %330, %cst_183 {dimension_numbers = #tpu.dot_dimension_numbers<[1], [0], [0], [1], [0, 0, 1, 1], [], []>} : vector<2x32xf32>, vector<32x128xf32>, vector<2x128xf32> -> vector<2x128xf32>
    %556 = arith.addf %554, %555 : vector<2x128xf32>
    %557 = arith.negf %556 : vector<2x128xf32>
    %558 = math.exp %557 : vector<2x128xf32>
    %cst_184 = arith.constant 1.000000e+00 : f32
    %559 = vector.broadcast %cst_184 : f32 to vector<2x128xf32>
    %560 = arith.addf %559, %558 : vector<2x128xf32>
    %561 = arith.divf %559, %560 : vector<2x128xf32>
    %562 = math.tanh %556 : vector<2x128xf32>
    %563 = vector.extract_strided_slice %561 {offsets = [0, 0], sizes = [2, 32], strides = [1, 1]} : vector<2x128xf32> to vector<2x32xf32>
    %564 = vector.extract_strided_slice %561 {offsets = [0, 32], sizes = [2, 32], strides = [1, 1]} : vector<2x128xf32> to vector<2x32xf32>
    %565 = vector.extract_strided_slice %562 {offsets = [0, 64], sizes = [2, 32], strides = [1, 1]} : vector<2x128xf32> to vector<2x32xf32>
    %566 = vector.extract_strided_slice %561 {offsets = [0, 96], sizes = [2, 32], strides = [1, 1]} : vector<2x128xf32> to vector<2x32xf32>
    %567 = arith.mulf %564, %538 : vector<2x32xf32>
    %568 = arith.mulf %563, %565 : vector<2x32xf32>
    %569 = arith.addf %567, %568 : vector<2x32xf32>
    %570 = math.tanh %569 : vector<2x32xf32>
    %571 = arith.mulf %566, %570 : vector<2x32xf32>
    %572 = vector.extract_strided_slice %571 {offsets = [0, 0], sizes = [2, 16], strides = [1, 1]} : vector<2x32xf32> to vector<2x16xf32>
    %573 = arith.index_cast %c7_i32_180 : i32 to index
    %c0_185 = arith.constant 0 : index
    %c0_186 = arith.constant 0 : index
    %574 = vector.load %arg14[%573, %c0_185, %c0_186] : memref<8x2x16xf32, #tpu.memory_space<vmem>>, vector<1x2x16xf32>
    %575 = vector.shape_cast %574 : vector<1x2x16xf32> to vector<2x16xf32>
    %576 = vector.shape_cast %572 : vector<2x16xf32> to vector<1x2x16xf32>
    tpu.vector_store %arg14[%573, %c0_185, %c0_186], %576 {strides = array<i32>} : memref<8x2x16xf32, #tpu.memory_space<vmem>>, vector<1x2x16xf32>,
    %577 = vector.extract_strided_slice %571 {offsets = [0, 16], sizes = [2, 16], strides = [1, 1]} : vector<2x32xf32> to vector<2x16xf32>
    %c7_i32_187 = arith.constant 7 : i32
    %578 = arith.subi %c7_i32_187, %c7_i32_180 : i32
    %579 = arith.index_cast %578 : i32 to index
    %c0_188 = arith.constant 0 : index
    %c0_189 = arith.constant 0 : index
    %580 = vector.load %arg15[%579, %c0_188, %c0_189] : memref<8x2x16xf32, #tpu.memory_space<vmem>>, vector<1x2x16xf32>
    %581 = vector.shape_cast %580 : vector<1x2x16xf32> to vector<2x16xf32>
    %582 = vector.shape_cast %577 : vector<2x16xf32> to vector<1x2x16xf32>
    tpu.vector_store %arg15[%579, %c0_188, %c0_189], %582 {strides = array<i32>} : memref<8x2x16xf32, #tpu.memory_space<vmem>>, vector<1x2x16xf32>,
    %c8_i32_190 = arith.constant 8 : i32
    %c0_191 = arith.constant 0 : index
    %c0_192 = arith.constant 0 : index
    %c0_193 = arith.constant 0 : index
    %583 = vector.load %arg14[%c0_191, %c0_192, %c0_193] : memref<8x2x16xf32, #tpu.memory_space<vmem>>, vector<8x2x16xf32>
    %c0_194 = arith.constant 0 : index
    %c0_195 = arith.constant 0 : index
    %c0_196 = arith.constant 0 : index
    %584 = vector.load %arg15[%c0_194, %c0_195, %c0_196] : memref<8x2x16xf32, #tpu.memory_space<vmem>>, vector<8x2x16xf32>
    %585 = tpu.concatenate %583, %584 in 2 : vector<8x2x16xf32>, vector<8x2x16xf32> -> vector<8x2x32xf32>
    %586 = vector.shape_cast %585 : vector<8x2x32xf32> to vector<16x32xf32>
    %c0_197 = arith.constant 0 : index
    %c0_198 = arith.constant 0 : index
    %587 = vector.load %arg9[%c0_197, %c0_198] : memref<32x32xf32, #tpu.memory_space<vmem>>, vector<32x32xf32>
    %cst_199 = arith.constant dense<0.000000e+00> : vector<16x32xf32>
    %588 = tpu.matmul %586, %587, %cst_199 {dimension_numbers = #tpu.dot_dimension_numbers<[1], [0], [0], [1], [0, 0, 1, 1], [], []>} : vector<16x32xf32>, vector<32x32xf32>, vector<16x32xf32> -> vector<16x32xf32>
    %c0_200 = arith.constant 0 : index
    %c0_201 = arith.constant 0 : index
    %589 = vector.load %arg10[%c0_200, %c0_201] : memref<1x32xf32, #tpu.memory_space<vmem>>, vector<1x32xf32>
    %590 = vector.broadcast %589 : vector<1x32xf32> to vector<16x32xf32>
    %591 = arith.addf %588, %590 : vector<16x32xf32>
    %592 = math.tanh %591 : vector<16x32xf32>
    %593 = vector.shape_cast %592 : vector<16x32xf32> to vector<8x2x32xf32>
    %c0_202 = arith.constant 0 : index
    %c0_203 = arith.constant 0 : index
    %594 = vector.load %arg11[%c0_202, %c0_203] : memref<1x32xf32, #tpu.memory_space<vmem>>, vector<1x32xf32>
    %595 = vector.shape_cast %594 : vector<1x32xf32> to vector<1x1x32xf32>
    %596 = vector.broadcast %595 : vector<1x1x32xf32> to vector<8x2x32xf32>
    %597 = arith.mulf %593, %596 : vector<8x2x32xf32>
    %cst_204 = arith.constant dense<0.000000e+00> : vector<8x2xf32>
    %598 = vector.multi_reduction <add>, %597, %cst_204 [2] : vector<8x2x32xf32> to vector<8x2xf32>
    %599 = vector.shape_cast %598 : vector<8x2xf32> to vector<8x2x1xf32>
    %cst_205 = arith.constant dense<0xFF800000> : vector<2x1xf32>
    %600 = vector.multi_reduction <maximumf>, %599, %cst_205 [0] : vector<8x2x1xf32> to vector<2x1xf32>
    %601 = vector.shape_cast %600 : vector<2x1xf32> to vector<1x2x1xf32>
    %602 = vector.broadcast %601 : vector<1x2x1xf32> to vector<8x2x1xf32>
    %603 = arith.subf %599, %602 : vector<8x2x1xf32>
    %604 = math.exp %603 : vector<8x2x1xf32>
    %cst_206 = arith.constant dense<0.000000e+00> : vector<2x1xf32>
    %605 = vector.multi_reduction <add>, %604, %cst_206 [0] : vector<8x2x1xf32> to vector<2x1xf32>
    %606 = vector.shape_cast %605 : vector<2x1xf32> to vector<1x2x1xf32>
    %607 = tpu.reciprocal %606 : vector<1x2x1xf32> -> vector<1x2x1xf32>
    %608 = vector.broadcast %607 : vector<1x2x1xf32> to vector<8x2x1xf32>
    %609 = arith.mulf %604, %608 : vector<8x2x1xf32>
    %610 = vector.broadcast %609 : vector<8x2x1xf32> to vector<8x2x32xf32>
    %611 = arith.mulf %610, %593 : vector<8x2x32xf32>
    %cst_207 = arith.constant dense<0.000000e+00> : vector<2x32xf32>
    %612 = vector.multi_reduction <add>, %611, %cst_207 [0] : vector<8x2x32xf32> to vector<2x32xf32>
    %c0_208 = arith.constant 0 : index
    %c0_209 = arith.constant 0 : index
    %613 = vector.load %arg12[%c0_208, %c0_209] : memref<2x32xf32, #tpu.memory_space<vmem>>, vector<2x32xf32>
    tpu.vector_store %arg12[%c0_208, %c0_209], %612 {strides = array<i32>} : memref<2x32xf32, #tpu.memory_space<vmem>>, vector<2x32xf32>,
    return
  }
}

</mosaic_0001>

<llo_original>
// kernel: sequence_encoder_forward.1
$region0: #{sequence_encoder_forward.1}
  #allocation0 [shape = 'u32[]', space=smem, size = 0x4, offset = 0x4, fixed_abs, tag = 'smem constant byte address 0x4 - core index']
  #allocation1 [shape = 'u32[144,128]{1,0:T(1,128)}', space=vmem, size = 0x12000, scoped, tag = 'internal scratch']
  #allocation2 [shape = 'f32[8,2,128]{2,1,0:T(2,128)}', space=vmem, size = 0x2000, scoped, tag = 'scratch operand']
  #allocation3 [shape = 'f32[8,2,16]{2,1,0:T(2,128)}', space=vmem, size = 0x2000, scoped, tag = 'scratch operand']
  #allocation4 [shape = 'f32[8,2,16]{2,1,0:T(2,128)}', space=vmem, size = 0x2000, scoped, tag = 'scratch operand']
  %s0 = inlined_call_operand.vmem [shape: f32[8,2,16], index: 0, kind: input, shape index: {}]
  %s1 = inlined_call_operand.vmem [shape: f32[2,2,32], index: 1, kind: input, shape index: {}]
  %s2 = inlined_call_operand.vmem [shape: f32[2,2,32], index: 2, kind: input, shape index: {}]
  %s3 = inlined_call_operand.hbm [shape: f32[16,128], index: 3, kind: input, shape index: {}]
  %s4 = inlined_call_operand.vmem [shape: f32[32,128], index: 4, kind: input, shape index: {}]
  %s5 = inlined_call_operand.vmem [shape: f32[1,128], index: 5, kind: input, shape index: {}]
  %s6 = inlined_call_operand.vmem [shape: f32[32,128], index: 6, kind: input, shape index: {}]
  %s7 = inlined_call_operand.vmem [shape: f32[32,128], index: 7, kind: input, shape index: {}]
  %s8 = inlined_call_operand.hbm [shape: f32[1,128], index: 8, kind: input, shape index: {}]
  %s9 = inlined_call_operand.vmem [shape: f32[32,32], index: 9, kind: input, shape index: {}]
  %s10 = inlined_call_operand.hbm [shape: f32[1,32], index: 10, kind: input, shape index: {}]
  %s11 = inlined_call_operand.hbm [shape: f32[1,32], index: 11, kind: input, shape index: {}]
  %s12 = inlined_call_operand.hbm [shape: f32[2,32], index: 12, kind: output, shape index: {}]
  %s13 = sld [smem:[#allocation0]]
  $region74: #{sequence_encoder_forward.1} parent=0
    _
  %s15 = ssub.s32 1, %s13
  %s16 = scalar_select 0, %s15, %s13
  $region1: #{sequence_encoder_forward.1} parent=0
    #allocation5 [shape = 'u8[8192]{0}', space=vmem, size = 0x2000, scoped, tag = 'input window, operand 3, single buffered']
    #allocation6 [shape = 's32[1]{0}', space=sflag, size = 0x4, scoped, tag = 'scoped memory for sequence_encoder_forward.1']
    #allocation7 [shape = 's32[1]{0}', space=sflag, size = 0x4, scoped, tag = 'scoped memory for sequence_encoder_forward.1']
    #allocation8 [shape = 'u8[512]{0}', space=vmem, size = 0x400, scoped, tag = 'input window, operand 8, single buffered']
    #allocation9 [shape = 's32[1]{0}', space=sflag, size = 0x4, scoped, tag = 'scoped memory for sequence_encoder_forward.1']
    #allocation10 [shape = 'u8[512]{0}', space=vmem, size = 0x400, scoped, tag = 'input window, operand 10, single buffered']
    #allocation11 [shape = 'u8[512]{0}', space=vmem, size = 0x400, scoped, tag = 'input window, operand 11, single buffered']
    #allocation12 [shape = 's32[1]{0}', space=sflag, size = 0x4, scoped, tag = 'scoped memory for sequence_encoder_forward.1']
    #allocation13 [shape = 'u8[1024]{0}', space=vmem, size = 0x400, scoped, tag = 'output window, operand 0, single buffered']
    %17 = vsyncpa [#allocation6], 0
    %18 = vsyncpa [#allocation9], 0
    %19 = vsyncpa [#allocation12], 0
    %20 = vsyncpa [#allocation7], 0
    // Predicated region
    $region2: #{sequence_encoder_forward.1} parent=1 // pred_check
      _
    $region3: #{sequence_encoder_forward.1} parent=1 // pred_check_branch
      %22 = sbr.rel (0) target = $region5
    $region4: #{sequence_encoder_forward.1} parent=1 // pred_region
      _
    $region5: #{sequence_encoder_forward.1} parent=1 // pred_fallthru
      _
    // Predicated region
    $region6: #{sequence_encoder_forward.1} parent=1 // pred_check
      _
    $region7: #{sequence_encoder_forward.1} parent=1 // pred_check_branch
      %24 = sbr.rel (0) target = $region9
    $region8: #{sequence_encoder_forward.1} parent=1 // pred_region
      _
    $region9: #{sequence_encoder_forward.1} parent=1 // pred_fallthru
      _
    // Predicated region
    $region10: #{sequence_encoder_forward.1} parent=1 // pred_check
      _
    $region11: #{sequence_encoder_forward.1} parent=1 // pred_check_branch
      %26 = sbr.rel (0) target = $region13
    $region12: #{sequence_encoder_forward.1} parent=1 // pred_region
      _
    $region13: #{sequence_encoder_forward.1} parent=1 // pred_fallthru
      _
    // Predicated region
    $region14: #{sequence_encoder_forward.1} parent=1 // pred_check
      _
    $region15: #{sequence_encoder_forward.1} parent=1 // pred_check_branch
      %28 = sbr.rel (0) target = $region17
    $region16: #{sequence_encoder_forward.1} parent=1 // pred_region
      %s30 = ssub.s32 256, 256
      %31 = vsyncadd [#allocation6], %s30
      %s32 = sshll.u32 [#allocation5], 4
      %s33 = int_to_ptr.vmem [resolvable:$true] %s32
      %38 = dma.hbm_to_vmem [thread:$0]  %s3, 256, %s33, [#allocation6], 128, 128, 8
    $region17: #{sequence_encoder_forward.1} parent=1 // pred_fallthru
      _
    // Predicated region
    $region18: #{sequence_encoder_forward.1} parent=1 // pred_check
      _
    $region19: #{sequence_encoder_forward.1} parent=1 // pred_check_branch
      %40 = sbr.rel (0) target = $region21
    $region20: #{sequence_encoder_forward.1} parent=1 // pred_region
      _
    $region21: #{sequence_encoder_forward.1} parent=1 // pred_fallthru
      _
    // Predicated region
    $region22: #{sequence_encoder_forward.1} parent=1 // pred_check
      _
    $region23: #{sequence_encoder_forward.1} parent=1 // pred_check_branch
      %42 = sbr.rel (0) target = $region25
    $region24: #{sequence_encoder_forward.1} parent=1 // pred_region
      _
    $region25: #{sequence_encoder_forward.1} parent=1 // pred_fallthru
      _
    // Predicated region
    $region26: #{sequence_encoder_forward.1} parent=1 // pred_check
      _
    $region27: #{sequence_encoder_forward.1} parent=1 // pred_check_branch
      %44 = sbr.rel (0) target = $region29
    $region28: #{sequence_encoder_forward.1} parent=1 // pred_region
      _
    $region29: #{sequence_encoder_forward.1} parent=1 // pred_fallthru
      _
    // Predicated region
    $region30: #{sequence_encoder_forward.1} parent=1 // pred_check
      _
    $region31: #{sequence_encoder_forward.1} parent=1 // pred_check_branch
      %46 = sbr.rel (0) target = $region33
    $region32: #{sequence_encoder_forward.1} parent=1 // pred_region
      _
    $region33: #{sequence_encoder_forward.1} parent=1 // pred_fallthru
      _
    // Predicated region
    $region34: #{sequence_encoder_forward.1} parent=1 // pred_check
      _
    $region35: #{sequence_encoder_forward.1} parent=1 // pred_check_branch
      %48 = sbr.rel (0) target = $region37
    $region36: #{sequence_encoder_forward.1} parent=1 // pred_region
      %s50 = ssub.s32 16, 16
      %51 = vsyncadd [#allocation9], %s50
      %s53 = sshll.u32 [#allocation8], 4
      %s54 = int_to_ptr.vmem [resolvable:$true] %s53
      %56 = dma.hbm_to_vmem [thread:$0]  %s8, 16, %s54, [#allocation9]
    $region37: #{sequence_encoder_forward.1} parent=1 // pred_fallthru
      _
    // Predicated region
    $region38: #{sequence_encoder_forward.1} parent=1 // pred_check
      _
    $region39: #{sequence_encoder_forward.1} parent=1 // pred_check_branch
      %58 = sbr.rel (0) target = $region41
    $region40: #{sequence_encoder_forward.1} parent=1 // pred_region
      _
    $region41: #{sequence_encoder_forward.1} parent=1 // pred_fallthru
      _
    // Predicated region
    $region42: #{sequence_encoder_forward.1} parent=1 // pred_check
      _
    $region43: #{sequence_encoder_forward.1} parent=1 // pred_check_branch
      %60 = sbr.rel (0) target = $region45
    $region44: #{sequence_encoder_forward.1} parent=1 // pred_region
      %s62 = ssub.s32 16, 16
      %63 = vsyncadd [#allocation9], %s62
      %s65 = sshll.u32 [#allocation10], 4
      %s66 = int_to_ptr.vmem [resolvable:$true] %s65
      %68 = dma.hbm_to_vmem [thread:$0]  %s10, 16, %s66, [#allocation9]
    $region45: #{sequence_encoder_forward.1} parent=1 // pred_fallthru
      _
    // Predicated region
    $region46: #{sequence_encoder_forward.1} parent=1 // pred_check
      _
    $region47: #{sequence_encoder_forward.1} parent=1 // pred_check_branch
      %70 = sbr.rel (0) target = $region49
    $region48: #{sequence_encoder_forward.1} parent=1 // pred_region
      %s72 = ssub.s32 16, 16
      %73 = vsyncadd [#allocation12], %s72
      %s75 = sshll.u32 [#allocation11], 4
      %s76 = int_to_ptr.vmem [resolvable:$true] %s75
      %78 = dma.hbm_to_vmem [thread:$0]  %s11, 16, %s76, [#allocation12]
    $region49: #{sequence_encoder_forward.1} parent=1 // pred_fallthru
      _
    // Predicated region
    $region50: #{sequence_encoder_forward.1} parent=1 // pred_check
      _
    $region51: #{sequence_encoder_forward.1} parent=1 // pred_check_branch
      %80 = sbr.rel (0) target = $region53
    $region52: #{sequence_encoder_forward.1} parent=1 // pred_region
      %81 = dma.done [#allocation6], 256
    $region53: #{sequence_encoder_forward.1} parent=1 // pred_fallthru
      _
    // Predicated region
    $region54: #{sequence_encoder_forward.1} parent=1 // pred_check
      _
    $region55: #{sequence_encoder_forward.1} parent=1 // pred_check_branch
      %83 = sbr.rel (0) target = $region57
    $region56: #{sequence_encoder_forward.1} parent=1 // pred_region
      %84 = dma.done [#allocation9], 16
    $region57: #{sequence_encoder_forward.1} parent=1 // pred_fallthru
      _
    // Predicated region
    $region58: #{sequence_encoder_forward.1} parent=1 // pred_check
      _
    $region59: #{sequence_encoder_forward.1} parent=1 // pred_check_branch
      %86 = sbr.rel (0) target = $region61
    $region60: #{sequence_encoder_forward.1} parent=1 // pred_region
      %87 = dma.done [#allocation9], 16
    $region61: #{sequence_encoder_forward.1} parent=1 // pred_fallthru
      _
    // Predicated region
    $region62: #{sequence_encoder_forward.1} parent=1 // pred_check
      _
    $region63: #{sequence_encoder_forward.1} parent=1 // pred_check_branch
      %89 = sbr.rel (0) target = $region65
    $region64: #{sequence_encoder_forward.1} parent=1 // pred_region
      %90 = dma.done [#allocation12], 16
    $region65: #{sequence_encoder_forward.1} parent=1 // pred_fallthru
      _
    %v91 = vlaneseq
    %v92 = vand.u32 %v91, 127
    %v93 = vand.u32 %v92, 31
    %vm94 = vcmp.lt.s32.totalorder %v93, 16
    %v95 = vld [vmem:[%s0] sm:$0x3]
    %v96 = vld [vmem:[%s0 + $0x2] sm:$0x3]
    %v97 = vld [vmem:[%s0 + $0x4] sm:$0x3]
    %v98 = vld [vmem:[%s0 + $0x6] sm:$0x3]
    %v99 = vld [vmem:[%s0 + $0x8] sm:$0x3]
    %v100 = vld [vmem:[%s0 + $0xa] sm:$0x3]
    %v101 = vld [vmem:[%s0 + $0xc] sm:$0x3]
    %v102 = vld [vmem:[%s0 + $0xe] sm:$0x3]
    %v103 = vld [vmem:[#allocation5] sm:$0xff]
    %v104 = vld [vmem:[#allocation5 + $0x8] sm:$0xff]
    %v105 = vld [vmem:[%s5] sm:$0x1]
    %v107 = vlaneseq
    %v108 = vshrl.u32 %v107, 7
    %v109 = vsub.s32 0, %v108
    %v110 = vrot.slane %v105, %v109
    %v120 = vcombine.low %v95, %v96
    %v121 = vcombine.low %v97, %v98
    %v123 = vunpack.c.l.s4 1983009808
    %v124 = vunpack.c.0.s8 %v123
    %v125 = vlaneseq
    %v126 = vshrl.u32 %v125, 7
    %v127 = vsub.s32 %v124, %v126
    %v128 = vrot.slane %v120, %v127
    %v130 = vunpack.c.l.s4 1983009808
    %v131 = vunpack.c.0.s8 %v130
    %v132 = vlaneseq
    %v133 = vshrl.u32 %v132, 7
    %v134 = vsub.s32 %v131, %v133
    %v135 = vrot.slane %v121, %v134
    %v136 = vcombine.low %v128, %v135
    %v137 = vcombine.low %v99, %v100
    %v138 = vcombine.low %v101, %v102
    %v140 = vunpack.c.l.s4 1983009808
    %v141 = vunpack.c.0.s8 %v140
    %v142 = vlaneseq
    %v143 = vshrl.u32 %v142, 7
    %v144 = vsub.s32 %v141, %v143
    %v145 = vrot.slane %v137, %v144
    %v147 = vunpack.c.l.s4 1983009808
    %v148 = vunpack.c.0.s8 %v147
    %v149 = vlaneseq
    %v150 = vshrl.u32 %v149, 7
    %v151 = vsub.s32 %v148, %v150
    %v152 = vrot.slane %v138, %v151
    %v153 = vcombine.low %v145, %v152
    %vm154 = vcmask 130048
    %v155 = vsel %vm154, %v136, 0
    %v157 = vsel %vm154, %v153, 0
    %159 = vmatprep.subr.mxu0 0.0
    %160 = vmatpush1.msra.mxu0 %v103
    %161 = vmatprep.subr.mxu0 0.0
    %162 = vmatpush1.msra.mxu0 %v104
    %163 = vmatprep.subr.mxu0 0.0
    %164 = vmatpush1.msra.mxu0 0.0
    %165 = vmatprep.subr.mxu0 0.0
    %166 = vmatpush1.msra.mxu0 0.0
    %167 = vmatprep.subr.mxu0 0.0
    %168 = vmatpush1.msra.mxu0 0.0
    %169 = vmatprep.subr.mxu0 0.0
    %170 = vmatpush1.msra.mxu0 0.0
    %171 = vmatprep.subr.mxu0 0.0
    %172 = vmatpush1.msra.mxu0 0.0
    %173 = vmatprep.subr.mxu0 0.0
    %174 = vmatpush1.msra.mxu0 0.0
    %175 = vmatprep.subr.mxu0 0.0
    %176 = vmatpush1.msra.mxu0 0.0
    %177 = vmatprep.subr.mxu0 0.0
    %178 = vmatpush1.msra.mxu0 0.0
    %179 = vmatprep.subr.mxu0 0.0
    %180 = vmatpush1.msra.mxu0 0.0
    %181 = vmatprep.subr.mxu0 0.0
    %182 = vmatpush1.msra.mxu0 0.0
    %183 = vmatprep.subr.mxu0 0.0
    %184 = vmatpush1.msra.mxu0 0.0
    %185 = vmatprep.subr.mxu0 0.0
    %186 = vmatpush1.msra.mxu0 0.0
    %187 = vmatprep.subr.mxu0 0.0
    %188 = vmatpush1.msra.mxu0 0.0
    %189 = vmatprep.subr.mxu0 0.0
    %190 = vmatpush1.msra.mxu0 0.0
    %191 = vmatprep.subr.mxu0 0.0
    %192 = vmatpush1.msra.mxu0 0.0
    %193 = vmatprep.subr.mxu0 0.0
    %194 = vmatpush1.msra.mxu0 0.0
    %195 = vmatprep.subr.mxu0 0.0
    %196 = vmatpush1.msra.mxu0 0.0
    %197 = vmatprep.subr.mxu0 0.0
    %198 = vmatpush1.msra.mxu0 0.0
    %199 = vmatprep.subr.mxu0 0.0
    %200 = vmatpush1.msra.mxu0 0.0
    %201 = vmatprep.subr.mxu0 0.0
    %202 = vmatpush1.msra.mxu0 0.0
    %203 = vmatprep.subr.mxu0 0.0
    %204 = vmatpush1.msra.mxu0 0.0
    %205 = vmatprep.subr.mxu0 0.0
    %206 = vmatpush1.msra.mxu0 0.0
    %207 = vmatprep.subr.mxu0 0.0
    %208 = vmatpush1.msra.mxu0 0.0
    %209 = vmatprep.subr.mxu0 0.0
    %210 = vmatpush1.msra.mxu0 0.0
    %211 = vmatprep.subr.mxu0 0.0
    %212 = vmatpush1.msra.mxu0 0.0
    %213 = vmatprep.subr.mxu0 0.0
    %214 = vmatpush1.msra.mxu0 0.0
    %215 = vmatprep.subr.mxu0 0.0
    %216 = vmatpush1.msra.mxu0 0.0
    %217 = vmatprep.subr.mxu0 0.0
    %218 = vmatpush1.msra.mxu0 0.0
    %219 = vmatprep.subr.mxu0 0.0
    %220 = vmatpush1.msra.mxu0 0.0
    %221 = vmatprep.subr.mxu0 0.0
    %222 = vmatpush1.msra.mxu0 0.0
    %223 = vmatprep.mubr.f32.mxu0 0.0
    %224 = vmatmul.mubr.f32.gmra.mrb[0].mxu0 %v155
    %v225 = vpop.f32.mrb[0].mxu0
    %v226 = vadd.f32 %v110, %v225
    %v227 = vpop.f32.mrb[0].mxu0
    %228 = vmatprep.mubr.f32.mxu0 0.0
    %229 = vmatmul.mubr.f32.gmra.mrb[0].mxu0 %v157
    %v230 = vpop.f32.mrb[0].mxu0
    %v231 = vadd.f32 %v110, %v230
    %v232 = vpop.f32.mrb[0].mxu0
    %233 = vdwg.mxu0
    %v236 = vcombine.high %v226, %v226
    %v238 = vunpack.c.l.s4 1983009808
    %v239 = vunpack.c.0.s8 %v238
    %v240 = vlaneseq
    %v241 = vshrl.u32 %v240, 7
    %v242 = vsub.s32 %v239, %v241
    %v243 = vrot.slane %v226, %v242
    %v245 = vunpack.c.l.s4 1983009808
    %v246 = vunpack.c.0.s8 %v245
    %v247 = vlaneseq
    %v248 = vshrl.u32 %v247, 7
    %v249 = vsub.s32 %v246, %v248
    %v250 = vrot.slane %v236, %v249
    %v251 = vcombine.high %v243, %v243
    %v252 = vcombine.high %v250, %v250
    %v253 = vcombine.high %v231, %v231
    %v255 = vunpack.c.l.s4 1983009808
    %v256 = vunpack.c.0.s8 %v255
    %v257 = vlaneseq
    %v258 = vshrl.u32 %v257, 7
    %v259 = vsub.s32 %v256, %v258
    %v260 = vrot.slane %v231, %v259
    %v262 = vunpack.c.l.s4 1983009808
    %v263 = vunpack.c.0.s8 %v262
    %v264 = vlaneseq
    %v265 = vshrl.u32 %v264, 7
    %v266 = vsub.s32 %v263, %v265
    %v267 = vrot.slane %v253, %v266
    %v268 = vcombine.high %v260, %v260
    %v269 = vcombine.high %v267, %v267
    %v278 = vsel %vm94, %v243, %v269
    %v279 = vsel %vm94, %v251, %v267
    %v280 = vsel %vm94, %v250, %v268
    %v281 = vsel %vm94, %v252, %v260
    %v282 = vsel %vm94, %v260, %v252
    %v283 = vsel %vm94, %v268, %v250
    %v284 = vsel %vm94, %v267, %v251
    %v285 = vsel %vm94, %v269, %v243
    %286 = vst [vmem:[#allocation2] sm:$0x3] %v278
    %287 = vst [vmem:[#allocation2 + $0x2] sm:$0x3] %v279
    %288 = vst [vmem:[#allocation2 + $0x4] sm:$0x3] %v280
    %289 = vst [vmem:[#allocation2 + $0x6] sm:$0x3] %v281
    %290 = vst [vmem:[#allocation2 + $0x8] sm:$0x3] %v282
    %291 = vst [vmem:[#allocation2 + $0xa] sm:$0x3] %v283
    %292 = vst [vmem:[#allocation2 + $0xc] sm:$0x3] %v284
    %293 = vst [vmem:[#allocation2 + $0xe] sm:$0x3] %v285
    %v294 = vld [vmem:[%s4] sm:$0xff]
    %v295 = vld [vmem:[%s4 + $0x8] sm:$0xff]
    %v296 = vld [vmem:[%s4 + $0x10] sm:$0xff]
    %v297 = vld [vmem:[%s4 + $0x18] sm:$0xff]
    %v298 = vld [vmem:[%s1] sm:$0x3]
    %v299 = vld [vmem:[%s2] sm:$0x3]
    %v300 = vld [vmem:[#allocation2] sm:$0x3]
    %vm301 = vcmask 261120
    %v303 = vsel %vm301, %v298, 0
    %305 = vmatprep.subr.mxu0 0.0
    %306 = vmatpush1.msra.mxu0 %v294
    %307 = vmatprep.subr.mxu0 0.0
    %308 = vmatpush1.msra.mxu0 %v295
    %309 = vmatprep.subr.mxu0 0.0
    %310 = vmatpush1.msra.mxu0 %v296
    %311 = vmatprep.subr.mxu0 0.0
    %312 = vmatpush1.msra.mxu0 %v297
    %313 = vmatprep.subr.mxu0 0.0
    %314 = vmatpush1.msra.mxu0 0.0
    %315 = vmatprep.subr.mxu0 0.0
    %316 = vmatpush1.msra.mxu0 0.0
    %317 = vmatprep.subr.mxu0 0.0
    %318 = vmatpush1.msra.mxu0 0.0
    %319 = vmatprep.subr.mxu0 0.0
    %320 = vmatpush1.msra.mxu0 0.0
    %321 = vmatprep.subr.mxu0 0.0
    %322 = vmatpush1.msra.mxu0 0.0
    %323 = vmatprep.subr.mxu0 0.0
    %324 = vmatpush1.msra.mxu0 0.0
    %325 = vmatprep.subr.mxu0 0.0
    %326 = vmatpush1.msra.mxu0 0.0
    %327 = vmatprep.subr.mxu0 0.0
    %328 = vmatpush1.msra.mxu0 0.0
    %329 = vmatprep.subr.mxu0 0.0
    %330 = vmatpush1.msra.mxu0 0.0
    %331 = vmatprep.subr.mxu0 0.0
    %332 = vmatpush1.msra.mxu0 0.0
    %333 = vmatprep.subr.mxu0 0.0
    %334 = vmatpush1.msra.mxu0 0.0
    %335 = vmatprep.subr.mxu0 0.0
    %336 = vmatpush1.msra.mxu0 0.0
    %337 = vmatprep.subr.mxu0 0.0
    %338 = vmatpush1.msra.mxu0 0.0
    %339 = vmatprep.subr.mxu0 0.0
    %340 = vmatpush1.msra.mxu0 0.0
    %341 = vmatprep.subr.mxu0 0.0
    %342 = vmatpush1.msra.mxu0 0.0
    %343 = vmatprep.subr.mxu0 0.0
    %344 = vmatpush1.msra.mxu0 0.0
    %345 = vmatprep.subr.mxu0 0.0
    %346 = vmatpush1.msra.mxu0 0.0
    %347 = vmatprep.subr.mxu0 0.0
    %348 = vmatpush1.msra.mxu0 0.0
    %349 = vmatprep.subr.mxu0 0.0
    %350 = vmatpush1.msra.mxu0 0.0
    %351 = vmatprep.subr.mxu0 0.0
    %352 = vmatpush1.msra.mxu0 0.0
    %353 = vmatprep.subr.mxu0 0.0
    %354 = vmatpush1.msra.mxu0 0.0
    %355 = vmatprep.subr.mxu0 0.0
    %356 = vmatpush1.msra.mxu0 0.0
    %357 = vmatprep.subr.mxu0 0.0
    %358 = vmatpush1.msra.mxu0 0.0
    %359 = vmatprep.subr.mxu0 0.0
    %360 = vmatpush1.msra.mxu0 0.0
    %361 = vmatprep.subr.mxu0 0.0
    %362 = vmatpush1.msra.mxu0 0.0
    %363 = vmatprep.subr.mxu0 0.0
    %364 = vmatpush1.msra.mxu0 0.0
    %365 = vmatprep.subr.mxu0 0.0
    %366 = vmatpush1.msra.mxu0 0.0
    %367 = vmatprep.subr.mxu0 0.0
    %368 = vmatpush1.msra.mxu0 0.0
    %369 = vmatprep.mubr.f32.mxu0 0.0
    %370 = vmatmul.mubr.f32.gmra.mrb[0].mxu0 %v303
    %v371 = vpop.f32.mrb[0].mxu0
    %v372 = vadd.f32 0.0, %v371
    %v373 = vpop.f32.mrb[0].mxu0
    %374 = vdwg.mxu0
    %v375 = vadd.f32 %v300, %v372
    %v376 = vxor.u32 %v375, 2147483648
    %v377 = vmul.f32 %v376, 1.442695
    %v378 = vpow.pop %v377
    %v379 = vadd.f32 %v378, 1.0
    %v380 = vrcp.pop %v379
    %v381 = vmul.f32 1.0, %v380
    %v382 = vtanh.pop %v375
    %384 = vrot.lane.b32.xlu0 %v299, 32
    %v385 = vpop.permute.xlu0 %384
    %v387 = vmul.f32 %v381, %v385
    %389 = vrot.lane.b32.xlu0 %v382, 64
    %v390 = vpop.permute.xlu0 %389
    %v392 = vmul.f32 %v381, %v390
    %394 = vrot.lane.b32.xlu0 %v392, 32
    %v395 = vpop.permute.xlu0 %394
    %v397 = vadd.f32 %v387, %v395
    %v398 = vtanh.pop %v397
    %400 = vrot.lane.b32.xlu0 %v398, 64
    %v401 = vpop.permute.xlu0 %400
    %v403 = vmul.f32 %v381, %v401
    %405 = vrot.lane.b32.xlu0 %v403, 32
    %v406 = vpop.permute.xlu0 %405
    %vm408 = vcmask 123904
    %409 = vst.msk [vmem:[#allocation3] sm:$0x3] %vm408, %v406
    %410 = vrot.lane.b32.xlu0 %v403, 16
    %v411 = vpop.permute.xlu0 %410
    %s413 = scalar_lea.vmem [#allocation4], 14
    %414 = vst.msk [vmem:[%s413] sm:$0x3] %vm408, %v411
    %s415 = scalar_lea.vmem [#allocation2], 2
    %v416 = vld [vmem:[%s415] sm:$0x3]
    %v417 = vsel %vm301, %v406, 0
    %419 = vmatprep.subr.mxu0 0.0
    %420 = vmatpush1.msra.mxu0 %v294
    %421 = vmatprep.subr.mxu0 0.0
    %422 = vmatpush1.msra.mxu0 %v295
    %423 = vmatprep.subr.mxu0 0.0
    %424 = vmatpush1.msra.mxu0 %v296
    %425 = vmatprep.subr.mxu0 0.0
    %426 = vmatpush1.msra.mxu0 %v297
    %427 = vmatprep.subr.mxu0 0.0
    %428 = vmatpush1.msra.mxu0 0.0
    %429 = vmatprep.subr.mxu0 0.0
    %430 = vmatpush1.msra.mxu0 0.0
    %431 = vmatprep.subr.mxu0 0.0
    %432 = vmatpush1.msra.mxu0 0.0
    %433 = vmatprep.subr.mxu0 0.0
    %434 = vmatpush1.msra.mxu0 0.0
    %435 = vmatprep.subr.mxu0 0.0
    %436 = vmatpush1.msra.mxu0 0.0
    %437 = vmatprep.subr.mxu0 0.0
    %438 = vmatpush1.msra.mxu0 0.0
    %439 = vmatprep.subr.mxu0 0.0
    %440 = vmatpush1.msra.mxu0 0.0
    %441 = vmatprep.subr.mxu0 0.0
    %442 = vmatpush1.msra.mxu0 0.0
    %443 = vmatprep.subr.mxu0 0.0
    %444 = vmatpush1.msra.mxu0 0.0
    %445 = vmatprep.subr.mxu0 0.0
    %446 = vmatpush1.msra.mxu0 0.0
    %447 = vmatprep.subr.mxu0 0.0
    %448 = vmatpush1.msra.mxu0 0.0
    %449 = vmatprep.subr.mxu0 0.0
    %450 = vmatpush1.msra.mxu0 0.0
    %451 = vmatprep.subr.mxu0 0.0
    %452 = vmatpush1.msra.mxu0 0.0
    %453 = vmatprep.subr.mxu0 0.0
    %454 = vmatpush1.msra.mxu0 0.0
    %455 = vmatprep.subr.mxu0 0.0
    %456 = vmatpush1.msra.mxu0 0.0
    %457 = vmatprep.subr.mxu0 0.0
    %458 = vmatpush1.msra.mxu0 0.0
    %459 = vmatprep.subr.mxu0 0.0
    %460 = vmatpush1.msra.mxu0 0.0
    %461 = vmatprep.subr.mxu0 0.0
    %462 = vmatpush1.msra.mxu0 0.0
    %463 = vmatprep.subr.mxu0 0.0
    %464 = vmatpush1.msra.mxu0 0.0
    %465 = vmatprep.subr.mxu0 0.0
    %466 = vmatpush1.msra.mxu0 0.0
    %467 = vmatprep.subr.mxu0 0.0
    %468 = vmatpush1.msra.mxu0 0.0
    %469 = vmatprep.subr.mxu0 0.0
    %470 = vmatpush1.msra.mxu0 0.0
    %471 = vmatprep.subr.mxu0 0.0
    %472 = vmatpush1.msra.mxu0 0.0
    %473 = vmatprep.subr.mxu0 0.0
    %474 = vmatpush1.msra.mxu0 0.0
    %475 = vmatprep.subr.mxu0 0.0
    %476 = vmatpush1.msra.mxu0 0.0
    %477 = vmatprep.subr.mxu0 0.0
    %478 = vmatpush1.msra.mxu0 0.0
    %479 = vmatprep.subr.mxu0 0.0
    %480 = vmatpush1.msra.mxu0 0.0
    %481 = vmatprep.subr.mxu0 0.0
    %482 = vmatpush1.msra.mxu0 0.0
    %483 = vmatprep.mubr.f32.mxu0 0.0
    %484 = vmatmul.mubr.f32.gmra.mrb[0].mxu0 %v417
    %v485 = vpop.f32.mrb[0].mxu0
    %v486 = vadd.f32 0.0, %v485
    %v487 = vpop.f32.mrb[0].mxu0
    %488 = vdwg.mxu0
    %v489 = vadd.f32 %v416, %v486
    %v490 = vxor.u32 %v489, 2147483648
    %v491 = vmul.f32 %v490, 1.442695
    %v492 = vpow.pop %v491
    %v493 = vadd.f32 %v492, 1.0
    %v494 = vrcp.pop %v493
    %v495 = vmul.f32 1.0, %v494
    %v496 = vtanh.pop %v489
    %v497 = vmul.f32 %v495, %v397
    %499 = vrot.lane.b32.xlu0 %v496, 64
    %v500 = vpop.permute.xlu0 %499
    %v502 = vmul.f32 %v495, %v500
    %504 = vrot.lane.b32.xlu0 %v502, 32
    %v505 = vpop.permute.xlu0 %504
    %v507 = vadd.f32 %v497, %v505
    %v508 = vtanh.pop %v507
    %510 = vrot.lane.b32.xlu0 %v508, 64
    %v511 = vpop.permute.xlu0 %510
    %v513 = vmul.f32 %v495, %v511
    %515 = vrot.lane.b32.xlu0 %v513, 32
    %v516 = vpop.permute.xlu0 %515
    %s518 = scalar_lea.vmem [#allocation3], 2
    %519 = vst.msk [vmem:[%s518] sm:$0x3] %vm408, %v516
    %520 = vrot.lane.b32.xlu0 %v513, 16
    %v521 = vpop.permute.xlu0 %520
    %s523 = scalar_lea.vmem [#allocation4], 12
    %524 = vst.msk [vmem:[%s523] sm:$0x3] %vm408, %v521
    %s525 = scalar_lea.vmem [#allocation2], 4
    %v526 = vld [vmem:[%s525] sm:$0x3]
    %v527 = vsel %vm301, %v516, 0
    %529 = vmatprep.subr.mxu0 0.0
    %530 = vmatpush1.msra.mxu0 %v294
    %531 = vmatprep.subr.mxu0 0.0
    %532 = vmatpush1.msra.mxu0 %v295
    %533 = vmatprep.subr.mxu0 0.0
    %534 = vmatpush1.msra.mxu0 %v296
    %535 = vmatprep.subr.mxu0 0.0
    %536 = vmatpush1.msra.mxu0 %v297
    %537 = vmatprep.subr.mxu0 0.0
    %538 = vmatpush1.msra.mxu0 0.0
    %539 = vmatprep.subr.mxu0 0.0
    %540 = vmatpush1.msra.mxu0 0.0
    %541 = vmatprep.subr.mxu0 0.0
    %542 = vmatpush1.msra.mxu0 0.0
    %543 = vmatprep.subr.mxu0 0.0
    %544 = vmatpush1.msra.mxu0 0.0
    %545 = vmatprep.subr.mxu0 0.0
    %546 = vmatpush1.msra.mxu0 0.0
    %547 = vmatprep.subr.mxu0 0.0
    %548 = vmatpush1.msra.mxu0 0.0
    %549 = vmatprep.subr.mxu0 0.0
    %550 = vmatpush1.msra.mxu0 0.0
    %551 = vmatprep.subr.mxu0 0.0
    %552 = vmatpush1.msra.mxu0 0.0
    %553 = vmatprep.subr.mxu0 0.0
    %554 = vmatpush1.msra.mxu0 0.0
    %555 = vmatprep.subr.mxu0 0.0
    %556 = vmatpush1.msra.mxu0 0.0
    %557 = vmatprep.subr.mxu0 0.0
    %558 = vmatpush1.msra.mxu0 0.0
    %559 = vmatprep.subr.mxu0 0.0
    %560 = vmatpush1.msra.mxu0 0.0
    %561 = vmatprep.subr.mxu0 0.0
    %562 = vmatpush1.msra.mxu0 0.0
    %563 = vmatprep.subr.mxu0 0.0
    %564 = vmatpush1.msra.mxu0 0.0
    %565 = vmatprep.subr.mxu0 0.0
    %566 = vmatpush1.msra.mxu0 0.0
    %567 = vmatprep.subr.mxu0 0.0
    %568 = vmatpush1.msra.mxu0 0.0
    %569 = vmatprep.subr.mxu0 0.0
    %570 = vmatpush1.msra.mxu0 0.0
    %571 = vmatprep.subr.mxu0 0.0
    %572 = vmatpush1.msra.mxu0 0.0
    %573 = vmatprep.subr.mxu0 0.0
    %574 = vmatpush1.msra.mxu0 0.0
    %575 = vmatprep.subr.mxu0 0.0
    %576 = vmatpush1.msra.mxu0 0.0
    %577 = vmatprep.subr.mxu0 0.0
    %578 = vmatpush1.msra.mxu0 0.0
    %579 = vmatprep.subr.mxu0 0.0
    %580 = vmatpush1.msra.mxu0 0.0
    %581 = vmatprep.subr.mxu0 0.0
    %582 = vmatpush1.msra.mxu0 0.0
    %583 = vmatprep.subr.mxu0 0.0
    %584 = vmatpush1.msra.mxu0 0.0
    %585 = vmatprep.subr.mxu0 0.0
    %586 = vmatpush1.msra.mxu0 0.0
    %587 = vmatprep.subr.mxu0 0.0
    %588 = vmatpush1.msra.mxu0 0.0
    %589 = vmatprep.subr.mxu0 0.0
    %590 = vmatpush1.msra.mxu0 0.0
    %591 = vmatprep.subr.mxu0 0.0
    %592 = vmatpush1.msra.mxu0 0.0
    %593 = vmatprep.mubr.f32.mxu0 0.0
    %594 = vmatmul.mubr.f32.gmra.mrb[0].mxu0 %v527
    %v595 = vpop.f32.mrb[0].mxu0
    %v596 = vadd.f32 0.0, %v595
    %v597 = vpop.f32.mrb[0].mxu0
    %598 = vdwg.mxu0
    %v599 = vadd.f32 %v526, %v596
    %v600 = vxor.u32 %v599, 2147483648
    %v601 = vmul.f32 %v600, 1.442695
    %v602 = vpow.pop %v601
    %v603 = vadd.f32 %v602, 1.0
    %v604 = vrcp.pop %v603
    %v605 = vmul.f32 1.0, %v604
    %v606 = vtanh.pop %v599
    %v607 = vmul.f32 %v605, %v507
    %609 = vrot.lane.b32.xlu0 %v606, 64
    %v610 = vpop.permute.xlu0 %609
    %v612 = vmul.f32 %v605, %v610
    %614 = vrot.lane.b32.xlu0 %v612, 32
    %v615 = vpop.permute.xlu0 %614
    %v617 = vadd.f32 %v607, %v615
    %v618 = vtanh.pop %v617
    %620 = vrot.lane.b32.xlu0 %v618, 64
    %v621 = vpop.permute.xlu0 %620
    %v623 = vmul.f32 %v605, %v621
    %625 = vrot.lane.b32.xlu0 %v623, 32
    %v626 = vpop.permute.xlu0 %625
    %s628 = scalar_lea.vmem [#allocation3], 4
    %629 = vst.msk [vmem:[%s628] sm:$0x3] %vm408, %v626
    %630 = vrot.lane.b32.xlu0 %v623, 16
    %v631 = vpop.permute.xlu0 %630
    %s633 = scalar_lea.vmem [#allocation4], 10
    %634 = vst.msk [vmem:[%s633] sm:$0x3] %vm408, %v631
    %s635 = scalar_lea.vmem [#allocation2], 6
    %v636 = vld [vmem:[%s635] sm:$0x3]
    %v637 = vsel %vm301, %v626, 0
    %639 = vmatprep.subr.mxu0 0.0
    %640 = vmatpush1.msra.mxu0 %v294
    %641 = vmatprep.subr.mxu0 0.0
    %642 = vmatpush1.msra.mxu0 %v295
    %643 = vmatprep.subr.mxu0 0.0
    %644 = vmatpush1.msra.mxu0 %v296
    %645 = vmatprep.subr.mxu0 0.0
    %646 = vmatpush1.msra.mxu0 %v297
    %647 = vmatprep.subr.mxu0 0.0
    %648 = vmatpush1.msra.mxu0 0.0
    %649 = vmatprep.subr.mxu0 0.0
    %650 = vmatpush1.msra.mxu0 0.0
    %651 = vmatprep.subr.mxu0 0.0
    %652 = vmatpush1.msra.mxu0 0.0
    %653 = vmatprep.subr.mxu0 0.0
    %654 = vmatpush1.msra.mxu0 0.0
    %655 = vmatprep.subr.mxu0 0.0
    %656 = vmatpush1.msra.mxu0 0.0
    %657 = vmatprep.subr.mxu0 0.0
    %658 = vmatpush1.msra.mxu0 0.0
    %659 = vmatprep.subr.mxu0 0.0
    %660 = vmatpush1.msra.mxu0 0.0
    %661 = vmatprep.subr.mxu0 0.0
    %662 = vmatpush1.msra.mxu0 0.0
    %663 = vmatprep.subr.mxu0 0.0
    %664 = vmatpush1.msra.mxu0 0.0
    %665 = vmatprep.subr.mxu0 0.0
    %666 = vmatpush1.msra.mxu0 0.0
    %667 = vmatprep.subr.mxu0 0.0
    %668 = vmatpush1.msra.mxu0 0.0
    %669 = vmatprep.subr.mxu0 0.0
    %670 = vmatpush1.msra.mxu0 0.0
    %671 = vmatprep.subr.mxu0 0.0
    %672 = vmatpush1.msra.mxu0 0.0
    %673 = vmatprep.subr.mxu0 0.0
    %674 = vmatpush1.msra.mxu0 0.0
    %675 = vmatprep.subr.mxu0 0.0
    %676 = vmatpush1.msra.mxu0 0.0
    %677 = vmatprep.subr.mxu0 0.0
    %678 = vmatpush1.msra.mxu0 0.0
    %679 = vmatprep.subr.mxu0 0.0
    %680 = vmatpush1.msra.mxu0 0.0
    %681 = vmatprep.subr.mxu0 0.0
    %682 = vmatpush1.msra.mxu0 0.0
    %683 = vmatprep.subr.mxu0 0.0
    %684 = vmatpush1.msra.mxu0 0.0
    %685 = vmatprep.subr.mxu0 0.0
    %686 = vmatpush1.msra.mxu0 0.0
    %687 = vmatprep.subr.mxu0 0.0
    %688 = vmatpush1.msra.mxu0 0.0
    %689 = vmatprep.subr.mxu0 0.0
    %690 = vmatpush1.msra.mxu0 0.0
    %691 = vmatprep.subr.mxu0 0.0
    %692 = vmatpush1.msra.mxu0 0.0
    %693 = vmatprep.subr.mxu0 0.0
    %694 = vmatpush1.msra.mxu0 0.0
    %695 = vmatprep.subr.mxu0 0.0
    %696 = vmatpush1.msra.mxu0 0.0
    %697 = vmatprep.subr.mxu0 0.0
    %698 = vmatpush1.msra.mxu0 0.0
    %699 = vmatprep.subr.mxu0 0.0
    %700 = vmatpush1.msra.mxu0 0.0
    %701 = vmatprep.subr.mxu0 0.0
    %702 = vmatpush1.msra.mxu0 0.0
    %703 = vmatprep.mubr.f32.mxu0 0.0
    %704 = vmatmul.mubr.f32.gmra.mrb[0].mxu0 %v637
    %v705 = vpop.f32.mrb[0].mxu0
    %v706 = vadd.f32 0.0, %v705
    %v707 = vpop.f32.mrb[0].mxu0
    %708 = vdwg.mxu0
    %v709 = vadd.f32 %v636, %v706
    %v710 = vxor.u32 %v709, 2147483648
    %v711 = vmul.f32 %v710, 1.442695
    %v712 = vpow.pop %v711
    %v713 = vadd.f32 %v712, 1.0
    %v714 = vrcp.pop %v713
    %v715 = vmul.f32 1.0, %v714
    %v716 = vtanh.pop %v709
    %v717 = vmul.f32 %v715, %v617
    %719 = vrot.lane.b32.xlu0 %v716, 64
    %v720 = vpop.permute.xlu0 %719
    %v722 = vmul.f32 %v715, %v720
    %724 = vrot.lane.b32.xlu0 %v722, 32
    %v725 = vpop.permute.xlu0 %724
    %v727 = vadd.f32 %v717, %v725
    %v728 = vtanh.pop %v727
    %730 = vrot.lane.b32.xlu0 %v728, 64
    %v731 = vpop.permute.xlu0 %730
    %v733 = vmul.f32 %v715, %v731
    %735 = vrot.lane.b32.xlu0 %v733, 32
    %v736 = vpop.permute.xlu0 %735
    %s738 = scalar_lea.vmem [#allocation3], 6
    %739 = vst.msk [vmem:[%s738] sm:$0x3] %vm408, %v736
    %740 = vrot.lane.b32.xlu0 %v733, 16
    %v741 = vpop.permute.xlu0 %740
    %s743 = scalar_lea.vmem [#allocation4], 8
    %744 = vst.msk [vmem:[%s743] sm:$0x3] %vm408, %v741
    %s745 = scalar_lea.vmem [#allocation2], 8
    %v746 = vld [vmem:[%s745] sm:$0x3]
    %v747 = vsel %vm301, %v736, 0
    %749 = vmatprep.subr.mxu0 0.0
    %750 = vmatpush1.msra.mxu0 %v294
    %751 = vmatprep.subr.mxu0 0.0
    %752 = vmatpush1.msra.mxu0 %v295
    %753 = vmatprep.subr.mxu0 0.0
    %754 = vmatpush1.msra.mxu0 %v296
    %755 = vmatprep.subr.mxu0 0.0
    %756 = vmatpush1.msra.mxu0 %v297
    %757 = vmatprep.subr.mxu0 0.0
    %758 = vmatpush1.msra.mxu0 0.0
    %759 = vmatprep.subr.mxu0 0.0
    %760 = vmatpush1.msra.mxu0 0.0
    %761 = vmatprep.subr.mxu0 0.0
    %762 = vmatpush1.msra.mxu0 0.0
    %763 = vmatprep.subr.mxu0 0.0
    %764 = vmatpush1.msra.mxu0 0.0
    %765 = vmatprep.subr.mxu0 0.0
    %766 = vmatpush1.msra.mxu0 0.0
    %767 = vmatprep.subr.mxu0 0.0
    %768 = vmatpush1.msra.mxu0 0.0
    %769 = vmatprep.subr.mxu0 0.0
    %770 = vmatpush1.msra.mxu0 0.0
    %771 = vmatprep.subr.mxu0 0.0
    %772 = vmatpush1.msra.mxu0 0.0
    %773 = vmatprep.subr.mxu0 0.0
    %774 = vmatpush1.msra.mxu0 0.0
    %775 = vmatprep.subr.mxu0 0.0
    %776 = vmatpush1.msra.mxu0 0.0
    %777 = vmatprep.subr.mxu0 0.0
    %778 = vmatpush1.msra.mxu0 0.0
    %779 = vmatprep.subr.mxu0 0.0
    %780 = vmatpush1.msra.mxu0 0.0
    %781 = vmatprep.subr.mxu0 0.0
    %782 = vmatpush1.msra.mxu0 0.0
    %783 = vmatprep.subr.mxu0 0.0
    %784 = vmatpush1.msra.mxu0 0.0
    %785 = vmatprep.subr.mxu0 0.0
    %786 = vmatpush1.msra.mxu0 0.0
    %787 = vmatprep.subr.mxu0 0.0
    %788 = vmatpush1.msra.mxu0 0.0
    %789 = vmatprep.subr.mxu0 0.0
    %790 = vmatpush1.msra.mxu0 0.0
    %791 = vmatprep.subr.mxu0 0.0
    %792 = vmatpush1.msra.mxu0 0.0
    %793 = vmatprep.subr.mxu0 0.0
    %794 = vmatpush1.msra.mxu0 0.0
    %795 = vmatprep.subr.mxu0 0.0
    %796 = vmatpush1.msra.mxu0 0.0
    %797 = vmatprep.subr.mxu0 0.0
    %798 = vmatpush1.msra.mxu0 0.0
    %799 = vmatprep.subr.mxu0 0.0
    %800 = vmatpush1.msra.mxu0 0.0
    %801 = vmatprep.subr.mxu0 0.0
    %802 = vmatpush1.msra.mxu0 0.0
    %803 = vmatprep.subr.mxu0 0.0
    %804 = vmatpush1.msra.mxu0 0.0
    %805 = vmatprep.subr.mxu0 0.0
    %806 = vmatpush1.msra.mxu0 0.0
    %807 = vmatprep.subr.mxu0 0.0
    %808 = vmatpush1.msra.mxu0 0.0
    %809 = vmatprep.subr.mxu0 0.0
    %810 = vmatpush1.msra.mxu0 0.0
    %811 = vmatprep.subr.mxu0 0.0
    %812 = vmatpush1.msra.mxu0 0.0
    %813 = vmatprep.mubr.f32.mxu0 0.0
    %814 = vmatmul.mubr.f32.gmra.mrb[0].mxu0 %v747
    %v815 = vpop.f32.mrb[0].mxu0
    %v816 = vadd.f32 0.0, %v815
    %v817 = vpop.f32.mrb[0].mxu0
    %818 = vdwg.mxu0
    %v819 = vadd.f32 %v746, %v816
    %v820 = vxor.u32 %v819, 2147483648
    %v821 = vmul.f32 %v820, 1.442695
    %v822 = vpow.pop %v821
    %v823 = vadd.f32 %v822, 1.0
    %v824 = vrcp.pop %v823
    %v825 = vmul.f32 1.0, %v824
    %v826 = vtanh.pop %v819
    %v827 = vmul.f32 %v825, %v727
    %829 = vrot.lane.b32.xlu0 %v826, 64
    %v830 = vpop.permute.xlu0 %829
    %v832 = vmul.f32 %v825, %v830
    %834 = vrot.lane.b32.xlu0 %v832, 32
    %v835 = vpop.permute.xlu0 %834
    %v837 = vadd.f32 %v827, %v835
    %v838 = vtanh.pop %v837
    %840 = vrot.lane.b32.xlu0 %v838, 64
    %v841 = vpop.permute.xlu0 %840
    %v843 = vmul.f32 %v825, %v841
    %845 = vrot.lane.b32.xlu0 %v843, 32
    %v846 = vpop.permute.xlu0 %845
    %s848 = scalar_lea.vmem [#allocation3], 8
    %849 = vst.msk [vmem:[%s848] sm:$0x3] %vm408, %v846
    %850 = vrot.lane.b32.xlu0 %v843, 16
    %v851 = vpop.permute.xlu0 %850
    %s853 = scalar_lea.vmem [#allocation4], 6
    %854 = vst.msk [vmem:[%s853] sm:$0x3] %vm408, %v851
    %s855 = scalar_lea.vmem [#allocation2], 10
    %v856 = vld [vmem:[%s855] sm:$0x3]
    %v857 = vsel %vm301, %v846, 0
    %859 = vmatprep.subr.mxu0 0.0
    %860 = vmatpush1.msra.mxu0 %v294
    %861 = vmatprep.subr.mxu0 0.0
    %862 = vmatpush1.msra.mxu0 %v295
    %863 = vmatprep.subr.mxu0 0.0
    %864 = vmatpush1.msra.mxu0 %v296
    %865 = vmatprep.subr.mxu0 0.0
    %866 = vmatpush1.msra.mxu0 %v297
    %867 = vmatprep.subr.mxu0 0.0
    %868 = vmatpush1.msra.mxu0 0.0
    %869 = vmatprep.subr.mxu0 0.0
    %870 = vmatpush1.msra.mxu0 0.0
    %871 = vmatprep.subr.mxu0 0.0
    %872 = vmatpush1.msra.mxu0 0.0
    %873 = vmatprep.subr.mxu0 0.0
    %874 = vmatpush1.msra.mxu0 0.0
    %875 = vmatprep.subr.mxu0 0.0
    %876 = vmatpush1.msra.mxu0 0.0
    %877 = vmatprep.subr.mxu0 0.0
    %878 = vmatpush1.msra.mxu0 0.0
    %879 = vmatprep.subr.mxu0 0.0
    %880 = vmatpush1.msra.mxu0 0.0
    %881 = vmatprep.subr.mxu0 0.0
    %882 = vmatpush1.msra.mxu0 0.0
    %883 = vmatprep.subr.mxu0 0.0
    %884 = vmatpush1.msra.mxu0 0.0
    %885 = vmatprep.subr.mxu0 0.0
    %886 = vmatpush1.msra.mxu0 0.0
    %887 = vmatprep.subr.mxu0 0.0
    %888 = vmatpush1.msra.mxu0 0.0
    %889 = vmatprep.subr.mxu0 0.0
    %890 = vmatpush1.msra.mxu0 0.0
    %891 = vmatprep.subr.mxu0 0.0
    %892 = vmatpush1.msra.mxu0 0.0
    %893 = vmatprep.subr.mxu0 0.0
    %894 = vmatpush1.msra.mxu0 0.0
    %895 = vmatprep.subr.mxu0 0.0
    %896 = vmatpush1.msra.mxu0 0.0
    %897 = vmatprep.subr.mxu0 0.0
    %898 = vmatpush1.msra.mxu0 0.0
    %899 = vmatprep.subr.mxu0 0.0
    %900 = vmatpush1.msra.mxu0 0.0
    %901 = vmatprep.subr.mxu0 0.0
    %902 = vmatpush1.msra.mxu0 0.0
    %903 = vmatprep.subr.mxu0 0.0
    %904 = vmatpush1.msra.mxu0 0.0
    %905 = vmatprep.subr.mxu0 0.0
    %906 = vmatpush1.msra.mxu0 0.0
    %907 = vmatprep.subr.mxu0 0.0
    %908 = vmatpush1.msra.mxu0 0.0
    %909 = vmatprep.subr.mxu0 0.0
    %910 = vmatpush1.msra.mxu0 0.0
    %911 = vmatprep.subr.mxu0 0.0
    %912 = vmatpush1.msra.mxu0 0.0
    %913 = vmatprep.subr.mxu0 0.0
    %914 = vmatpush1.msra.mxu0 0.0
    %915 = vmatprep.subr.mxu0 0.0
    %916 = vmatpush1.msra.mxu0 0.0
    %917 = vmatprep.subr.mxu0 0.0
    %918 = vmatpush1.msra.mxu0 0.0
    %919 = vmatprep.subr.mxu0 0.0
    %920 = vmatpush1.msra.mxu0 0.0
    %921 = vmatprep.subr.mxu0 0.0
    %922 = vmatpush1.msra.mxu0 0.0
    %923 = vmatprep.mubr.f32.mxu0 0.0
    %924 = vmatmul.mubr.f32.gmra.mrb[0].mxu0 %v857
    %v925 = vpop.f32.mrb[0].mxu0
    %v926 = vadd.f32 0.0, %v925
    %v927 = vpop.f32.mrb[0].mxu0
    %928 = vdwg.mxu0
    %v929 = vadd.f32 %v856, %v926
    %v930 = vxor.u32 %v929, 2147483648
    %v931 = vmul.f32 %v930, 1.442695
    %v932 = vpow.pop %v931
    %v933 = vadd.f32 %v932, 1.0
    %v934 = vrcp.pop %v933
    %v935 = vmul.f32 1.0, %v934
    %v936 = vtanh.pop %v929
    %v937 = vmul.f32 %v935, %v837
    %939 = vrot.lane.b32.xlu0 %v936, 64
    %v940 = vpop.permute.xlu0 %939
    %v942 = vmul.f32 %v935, %v940
    %944 = vrot.lane.b32.xlu0 %v942, 32
    %v945 = vpop.permute.xlu0 %944
    %v947 = vadd.f32 %v937, %v945
    %v948 = vtanh.pop %v947
    %950 = vrot.lane.b32.xlu0 %v948, 64
    %v951 = vpop.permute.xlu0 %950
    %v953 = vmul.f32 %v935, %v951
    %955 = vrot.lane.b32.xlu0 %v953, 32
    %v956 = vpop.permute.xlu0 %955
    %s958 = scalar_lea.vmem [#allocation3], 10
    %959 = vst.msk [vmem:[%s958] sm:$0x3] %vm408, %v956
    %960 = vrot.lane.b32.xlu0 %v953, 16
    %v961 = vpop.permute.xlu0 %960
    %s963 = scalar_lea.vmem [#allocation4], 4
    %964 = vst.msk [vmem:[%s963] sm:$0x3] %vm408, %v961
    %s965 = scalar_lea.vmem [#allocation2], 12
    %v966 = vld [vmem:[%s965] sm:$0x3]
    %v967 = vsel %vm301, %v956, 0
    %969 = vmatprep.subr.mxu0 0.0
    %970 = vmatpush1.msra.mxu0 %v294
    %971 = vmatprep.subr.mxu0 0.0
    %972 = vmatpush1.msra.mxu0 %v295
    %973 = vmatprep.subr.mxu0 0.0
    %974 = vmatpush1.msra.mxu0 %v296
    %975 = vmatprep.subr.mxu0 0.0
    %976 = vmatpush1.msra.mxu0 %v297
    %977 = vmatprep.subr.mxu0 0.0
    %978 = vmatpush1.msra.mxu0 0.0
    %979 = vmatprep.subr.mxu0 0.0
    %980 = vmatpush1.msra.mxu0 0.0
    %981 = vmatprep.subr.mxu0 0.0
    %982 = vmatpush1.msra.mxu0 0.0
    %983 = vmatprep.subr.mxu0 0.0
    %984 = vmatpush1.msra.mxu0 0.0
    %985 = vmatprep.subr.mxu0 0.0
    %986 = vmatpush1.msra.mxu0 0.0
    %987 = vmatprep.subr.mxu0 0.0
    %988 = vmatpush1.msra.mxu0 0.0
    %989 = vmatprep.subr.mxu0 0.0
    %990 = vmatpush1.msra.mxu0 0.0
    %991 = vmatprep.subr.mxu0 0.0
    %992 = vmatpush1.msra.mxu0 0.0
    %993 = vmatprep.subr.mxu0 0.0
    %994 = vmatpush1.msra.mxu0 0.0
    %995 = vmatprep.subr.mxu0 0.0
    %996 = vmatpush1.msra.mxu0 0.0
    %997 = vmatprep.subr.mxu0 0.0
    %998 = vmatpush1.msra.mxu0 0.0
    %999 = vmatprep.subr.mxu0 0.0
    %1000 = vmatpush1.msra.mxu0 0.0
    %1001 = vmatprep.subr.mxu0 0.0
    %1002 = vmatpush1.msra.mxu0 0.0
    %1003 = vmatprep.subr.mxu0 0.0
    %1004 = vmatpush1.msra.mxu0 0.0
    %1005 = vmatprep.subr.mxu0 0.0
    %1006 = vmatpush1.msra.mxu0 0.0
    %1007 = vmatprep.subr.mxu0 0.0
    %1008 = vmatpush1.msra.mxu0 0.0
    %1009 = vmatprep.subr.mxu0 0.0
    %1010 = vmatpush1.msra.mxu0 0.0
    %1011 = vmatprep.subr.mxu0 0.0
    %1012 = vmatpush1.msra.mxu0 0.0
    %1013 = vmatprep.subr.mxu0 0.0
    %1014 = vmatpush1.msra.mxu0 0.0
    %1015 = vmatprep.subr.mxu0 0.0
    %1016 = vmatpush1.msra.mxu0 0.0
    %1017 = vmatprep.subr.mxu0 0.0
    %1018 = vmatpush1.msra.mxu0 0.0
    %1019 = vmatprep.subr.mxu0 0.0
    %1020 = vmatpush1.msra.mxu0 0.0
    %1021 = vmatprep.subr.mxu0 0.0
    %1022 = vmatpush1.msra.mxu0 0.0
    %1023 = vmatprep.subr.mxu0 0.0
    %1024 = vmatpush1.msra.mxu0 0.0
    %1025 = vmatprep.subr.mxu0 0.0
    %1026 = vmatpush1.msra.mxu0 0.0
    %1027 = vmatprep.subr.mxu0 0.0
    %1028 = vmatpush1.msra.mxu0 0.0
    %1029 = vmatprep.subr.mxu0 0.0
    %1030 = vmatpush1.msra.mxu0 0.0
    %1031 = vmatprep.subr.mxu0 0.0
    %1032 = vmatpush1.msra.mxu0 0.0
    %1033 = vmatprep.mubr.f32.mxu0 0.0
    %1034 = vmatmul.mubr.f32.gmra.mrb[0].mxu0 %v967
    %v1035 = vpop.f32.mrb[0].mxu0
    %v1036 = vadd.f32 0.0, %v1035
    %v1037 = vpop.f32.mrb[0].mxu0
    %1038 = vdwg.mxu0
    %v1039 = vadd.f32 %v966, %v1036
    %v1040 = vxor.u32 %v1039, 2147483648
    %v1041 = vmul.f32 %v1040, 1.442695
    %v1042 = vpow.pop %v1041
    %v1043 = vadd.f32 %v1042, 1.0
    %v1044 = vrcp.pop %v1043
    %v1045 = vmul.f32 1.0, %v1044
    %v1046 = vtanh.pop %v1039
    %v1047 = vmul.f32 %v1045, %v947
    %1049 = vrot.lane.b32.xlu0 %v1046, 64
    %v1050 = vpop.permute.xlu0 %1049
    %v1052 = vmul.f32 %v1045, %v1050
    %1054 = vrot.lane.b32.xlu0 %v1052, 32
    %v1055 = vpop.permute.xlu0 %1054
    %v1057 = vadd.f32 %v1047, %v1055
    %v1058 = vtanh.pop %v1057
    %1060 = vrot.lane.b32.xlu0 %v1058, 64
    %v1061 = vpop.permute.xlu0 %1060
    %v1063 = vmul.f32 %v1045, %v1061
    %1065 = vrot.lane.b32.xlu0 %v1063, 32
    %v1066 = vpop.permute.xlu0 %1065
    %s1068 = scalar_lea.vmem [#allocation3], 12
    %1069 = vst.msk [vmem:[%s1068] sm:$0x3] %vm408, %v1066
    %1070 = vrot.lane.b32.xlu0 %v1063, 16
    %v1071 = vpop.permute.xlu0 %1070
    %s1073 = scalar_lea.vmem [#allocation4], 2
    %1074 = vst.msk [vmem:[%s1073] sm:$0x3] %vm408, %v1071
    %s1075 = scalar_lea.vmem [#allocation2], 14
    %v1076 = vld [vmem:[%s1075] sm:$0x3]
    %v1077 = vsel %vm301, %v1066, 0
    %1079 = vmatprep.subr.mxu0 0.0
    %1080 = vmatpush1.msra.mxu0 %v294
    %1081 = vmatprep.subr.mxu0 0.0
    %1082 = vmatpush1.msra.mxu0 %v295
    %1083 = vmatprep.subr.mxu0 0.0
    %1084 = vmatpush1.msra.mxu0 %v296
    %1085 = vmatprep.subr.mxu0 0.0
    %1086 = vmatpush1.msra.mxu0 %v297
    %1087 = vmatprep.subr.mxu0 0.0
    %1088 = vmatpush1.msra.mxu0 0.0
    %1089 = vmatprep.subr.mxu0 0.0
    %1090 = vmatpush1.msra.mxu0 0.0
    %1091 = vmatprep.subr.mxu0 0.0
    %1092 = vmatpush1.msra.mxu0 0.0
    %1093 = vmatprep.subr.mxu0 0.0
    %1094 = vmatpush1.msra.mxu0 0.0
    %1095 = vmatprep.subr.mxu0 0.0
    %1096 = vmatpush1.msra.mxu0 0.0
    %1097 = vmatprep.subr.mxu0 0.0
    %1098 = vmatpush1.msra.mxu0 0.0
    %1099 = vmatprep.subr.mxu0 0.0
    %1100 = vmatpush1.msra.mxu0 0.0
    %1101 = vmatprep.subr.mxu0 0.0
    %1102 = vmatpush1.msra.mxu0 0.0
    %1103 = vmatprep.subr.mxu0 0.0
    %1104 = vmatpush1.msra.mxu0 0.0
    %1105 = vmatprep.subr.mxu0 0.0
    %1106 = vmatpush1.msra.mxu0 0.0
    %1107 = vmatprep.subr.mxu0 0.0
    %1108 = vmatpush1.msra.mxu0 0.0
    %1109 = vmatprep.subr.mxu0 0.0
    %1110 = vmatpush1.msra.mxu0 0.0
    %1111 = vmatprep.subr.mxu0 0.0
    %1112 = vmatpush1.msra.mxu0 0.0
    %1113 = vmatprep.subr.mxu0 0.0
    %1114 = vmatpush1.msra.mxu0 0.0
    %1115 = vmatprep.subr.mxu0 0.0
    %1116 = vmatpush1.msra.mxu0 0.0
    %1117 = vmatprep.subr.mxu0 0.0
    %1118 = vmatpush1.msra.mxu0 0.0
    %1119 = vmatprep.subr.mxu0 0.0
    %1120 = vmatpush1.msra.mxu0 0.0
    %1121 = vmatprep.subr.mxu0 0.0
    %1122 = vmatpush1.msra.mxu0 0.0
    %1123 = vmatprep.subr.mxu0 0.0
    %1124 = vmatpush1.msra.mxu0 0.0
    %1125 = vmatprep.subr.mxu0 0.0
    %1126 = vmatpush1.msra.mxu0 0.0
    %1127 = vmatprep.subr.mxu0 0.0
    %1128 = vmatpush1.msra.mxu0 0.0
    %1129 = vmatprep.subr.mxu0 0.0
    %1130 = vmatpush1.msra.mxu0 0.0
    %1131 = vmatprep.subr.mxu0 0.0
    %1132 = vmatpush1.msra.mxu0 0.0
    %1133 = vmatprep.subr.mxu0 0.0
    %1134 = vmatpush1.msra.mxu0 0.0
    %1135 = vmatprep.subr.mxu0 0.0
    %1136 = vmatpush1.msra.mxu0 0.0
    %1137 = vmatprep.subr.mxu0 0.0
    %1138 = vmatpush1.msra.mxu0 0.0
    %1139 = vmatprep.subr.mxu0 0.0
    %1140 = vmatpush1.msra.mxu0 0.0
    %1141 = vmatprep.subr.mxu0 0.0
    %1142 = vmatpush1.msra.mxu0 0.0
    %1143 = vmatprep.mubr.f32.mxu0 0.0
    %1144 = vmatmul.mubr.f32.gmra.mrb[0].mxu0 %v1077
    %v1145 = vpop.f32.mrb[0].mxu0
    %v1146 = vadd.f32 0.0, %v1145
    %v1147 = vpop.f32.mrb[0].mxu0
    %1148 = vdwg.mxu0
    %v1149 = vadd.f32 %v1076, %v1146
    %v1150 = vxor.u32 %v1149, 2147483648
    %v1151 = vmul.f32 %v1150, 1.442695
    %v1152 = vpow.pop %v1151
    %v1153 = vadd.f32 %v1152, 1.0
    %v1154 = vrcp.pop %v1153
    %v1155 = vmul.f32 1.0, %v1154
    %v1156 = vtanh.pop %v1149
    %v1157 = vmul.f32 %v1155, %v1057
    %1159 = vrot.lane.b32.xlu0 %v1156, 64
    %v1160 = vpop.permute.xlu0 %1159
    %v1162 = vmul.f32 %v1155, %v1160
    %1164 = vrot.lane.b32.xlu0 %v1162, 32
    %v1165 = vpop.permute.xlu0 %1164
    %v1167 = vadd.f32 %v1157, %v1165
    %v1168 = vtanh.pop %v1167
    %1170 = vrot.lane.b32.xlu0 %v1168, 64
    %v1171 = vpop.permute.xlu0 %1170
    %v1173 = vmul.f32 %v1155, %v1171
    %1175 = vrot.lane.b32.xlu0 %v1173, 32
    %v1176 = vpop.permute.xlu0 %1175
    %s1178 = scalar_lea.vmem [#allocation3], 14
    %1179 = vst.msk [vmem:[%s1178] sm:$0x3] %vm408, %v1176
    %1180 = vrot.lane.b32.xlu0 %v1173, 16
    %v1181 = vpop.permute.xlu0 %1180
    %1183 = vst.msk [vmem:[#allocation4] sm:$0x3] %vm408, %v1181
    %v1184 = vld [vmem:[#allocation3] sm:$0x3]
    %v1185 = vld [vmem:[#allocation3 + $0x2] sm:$0x3]
    %v1186 = vld [vmem:[#allocation3 + $0x4] sm:$0x3]
    %v1187 = vld [vmem:[#allocation3 + $0x6] sm:$0x3]
    %v1188 = vld [vmem:[#allocation3 + $0x8] sm:$0x3]
    %v1189 = vld [vmem:[#allocation3 + $0xa] sm:$0x3]
    %v1190 = vld [vmem:[#allocation3 + $0xc] sm:$0x3]
    %v1191 = vld [vmem:[#allocation3 + $0xe] sm:$0x3]
    %v1192 = vld [vmem:[#allocation4] sm:$0x3]
    %v1193 = vld [vmem:[#allocation4 + $0x2] sm:$0x3]
    %v1194 = vld [vmem:[#allocation4 + $0x4] sm:$0x3]
    %v1195 = vld [vmem:[#allocation4 + $0x6] sm:$0x3]
    %v1196 = vld [vmem:[#allocation4 + $0x8] sm:$0x3]
    %v1197 = vld [vmem:[#allocation4 + $0xa] sm:$0x3]
    %v1198 = vld [vmem:[#allocation4 + $0xc] sm:$0x3]
    %v1199 = vld [vmem:[#allocation4 + $0xe] sm:$0x3]
    %1208 = vrot.lane.b32.xlu0 %v1192, 16
    %v1209 = vpop.permute.xlu0 %1208
    %1210 = vrot.lane.b32.xlu0 %v1193, 16
    %v1211 = vpop.permute.xlu0 %1210
    %1212 = vrot.lane.b32.xlu0 %v1194, 16
    %v1213 = vpop.permute.xlu0 %1212
    %1214 = vrot.lane.b32.xlu0 %v1195, 16
    %v1215 = vpop.permute.xlu0 %1214
    %1216 = vrot.lane.b32.xlu0 %v1196, 16
    %v1217 = vpop.permute.xlu0 %1216
    %1218 = vrot.lane.b32.xlu0 %v1197, 16
    %v1219 = vpop.permute.xlu0 %1218
    %1220 = vrot.lane.b32.xlu0 %v1198, 16
    %v1221 = vpop.permute.xlu0 %1220
    %1222 = vrot.lane.b32.xlu0 %v1199, 16
    %v1223 = vpop.permute.xlu0 %1222
    %v1232 = vsel %vm154, %v1184, %v1209
    %v1233 = vsel %vm154, %v1185, %v1211
    %v1234 = vsel %vm154, %v1186, %v1213
    %v1235 = vsel %vm154, %v1187, %v1215
    %v1236 = vsel %vm154, %v1188, %v1217
    %v1237 = vsel %vm154, %v1189, %v1219
    %v1238 = vsel %vm154, %v1190, %v1221
    %v1239 = vsel %vm154, %v1191, %v1223
    %v1240 = vld [vmem:[%s6] sm:$0xff]
    %v1241 = vld [vmem:[%s6 + $0x8] sm:$0xff]
    %v1242 = vld [vmem:[%s6 + $0x10] sm:$0xff]
    %v1243 = vld [vmem:[%s6 + $0x18] sm:$0xff]
    %v1244 = vld [vmem:[#allocation8] sm:$0x1]
    %v1246 = vlaneseq
    %v1247 = vshrl.u32 %v1246, 7
    %v1248 = vsub.s32 0, %v1247
    %v1249 = vrot.slane %v1244, %v1248
    %v1259 = vcombine.low %v1232, %v1233
    %v1260 = vcombine.low %v1234, %v1235
    %v1262 = vunpack.c.l.s4 1983009808
    %v1263 = vunpack.c.0.s8 %v1262
    %v1264 = vlaneseq
    %v1265 = vshrl.u32 %v1264, 7
    %v1266 = vsub.s32 %v1263, %v1265
    %v1267 = vrot.slane %v1259, %v1266
    %v1269 = vunpack.c.l.s4 1983009808
    %v1270 = vunpack.c.0.s8 %v1269
    %v1271 = vlaneseq
    %v1272 = vshrl.u32 %v1271, 7
    %v1273 = vsub.s32 %v1270, %v1272
    %v1274 = vrot.slane %v1260, %v1273
    %v1275 = vcombine.low %v1267, %v1274
    %v1276 = vcombine.low %v1236, %v1237
    %v1277 = vcombine.low %v1238, %v1239
    %v1279 = vunpack.c.l.s4 1983009808
    %v1280 = vunpack.c.0.s8 %v1279
    %v1281 = vlaneseq
    %v1282 = vshrl.u32 %v1281, 7
    %v1283 = vsub.s32 %v1280, %v1282
    %v1284 = vrot.slane %v1276, %v1283
    %v1286 = vunpack.c.l.s4 1983009808
    %v1287 = vunpack.c.0.s8 %v1286
    %v1288 = vlaneseq
    %v1289 = vshrl.u32 %v1288, 7
    %v1290 = vsub.s32 %v1287, %v1289
    %v1291 = vrot.slane %v1277, %v1290
    %v1292 = vcombine.low %v1284, %v1291
    %v1293 = vsel %vm301, %v1275, 0
    %v1295 = vsel %vm301, %v1292, 0
    %1297 = vmatprep.subr.mxu0 0.0
    %1298 = vmatpush1.msra.mxu0 %v1240
    %1299 = vmatprep.subr.mxu0 0.0
    %1300 = vmatpush1.msra.mxu0 %v1241
    %1301 = vmatprep.subr.mxu0 0.0
    %1302 = vmatpush1.msra.mxu0 %v1242
    %1303 = vmatprep.subr.mxu0 0.0
    %1304 = vmatpush1.msra.mxu0 %v1243
    %1305 = vmatprep.subr.mxu0 0.0
    %1306 = vmatpush1.msra.mxu0 0.0
    %1307 = vmatprep.subr.mxu0 0.0
    %1308 = vmatpush1.msra.mxu0 0.0
    %1309 = vmatprep.subr.mxu0 0.0
    %1310 = vmatpush1.msra.mxu0 0.0
    %1311 = vmatprep.subr.mxu0 0.0
    %1312 = vmatpush1.msra.mxu0 0.0
    %1313 = vmatprep.subr.mxu0 0.0
    %1314 = vmatpush1.msra.mxu0 0.0
    %1315 = vmatprep.subr.mxu0 0.0
    %1316 = vmatpush1.msra.mxu0 0.0
    %1317 = vmatprep.subr.mxu0 0.0
    %1318 = vmatpush1.msra.mxu0 0.0
    %1319 = vmatprep.subr.mxu0 0.0
    %1320 = vmatpush1.msra.mxu0 0.0
    %1321 = vmatprep.subr.mxu0 0.0
    %1322 = vmatpush1.msra.mxu0 0.0
    %1323 = vmatprep.subr.mxu0 0.0
    %1324 = vmatpush1.msra.mxu0 0.0
    %1325 = vmatprep.subr.mxu0 0.0
    %1326 = vmatpush1.msra.mxu0 0.0
    %1327 = vmatprep.subr.mxu0 0.0
    %1328 = vmatpush1.msra.mxu0 0.0
    %1329 = vmatprep.subr.mxu0 0.0
    %1330 = vmatpush1.msra.mxu0 0.0
    %1331 = vmatprep.subr.mxu0 0.0
    %1332 = vmatpush1.msra.mxu0 0.0
    %1333 = vmatprep.subr.mxu0 0.0
    %1334 = vmatpush1.msra.mxu0 0.0
    %1335 = vmatprep.subr.mxu0 0.0
    %1336 = vmatpush1.msra.mxu0 0.0
    %1337 = vmatprep.subr.mxu0 0.0
    %1338 = vmatpush1.msra.mxu0 0.0
    %1339 = vmatprep.subr.mxu0 0.0
    %1340 = vmatpush1.msra.mxu0 0.0
    %1341 = vmatprep.subr.mxu0 0.0
    %1342 = vmatpush1.msra.mxu0 0.0
    %1343 = vmatprep.subr.mxu0 0.0
    %1344 = vmatpush1.msra.mxu0 0.0
    %1345 = vmatprep.subr.mxu0 0.0
    %1346 = vmatpush1.msra.mxu0 0.0
    %1347 = vmatprep.subr.mxu0 0.0
    %1348 = vmatpush1.msra.mxu0 0.0
    %1349 = vmatprep.subr.mxu0 0.0
    %1350 = vmatpush1.msra.mxu0 0.0
    %1351 = vmatprep.subr.mxu0 0.0
    %1352 = vmatpush1.msra.mxu0 0.0
    %1353 = vmatprep.subr.mxu0 0.0
    %1354 = vmatpush1.msra.mxu0 0.0
    %1355 = vmatprep.subr.mxu0 0.0
    %1356 = vmatpush1.msra.mxu0 0.0
    %1357 = vmatprep.subr.mxu0 0.0
    %1358 = vmatpush1.msra.mxu0 0.0
    %1359 = vmatprep.subr.mxu0 0.0
    %1360 = vmatpush1.msra.mxu0 0.0
    %1361 = vmatprep.mubr.f32.mxu0 0.0
    %1362 = vmatmul.mubr.f32.gmra.mrb[0].mxu0 %v1293
    %v1363 = vpop.f32.mrb[0].mxu0
    %v1364 = vadd.f32 %v1249, %v1363
    %v1365 = vpop.f32.mrb[0].mxu0
    %1366 = vmatprep.mubr.f32.mxu0 0.0
    %1367 = vmatmul.mubr.f32.gmra.mrb[0].mxu0 %v1295
    %v1368 = vpop.f32.mrb[0].mxu0
    %v1369 = vadd.f32 %v1249, %v1368
    %v1370 = vpop.f32.mrb[0].mxu0
    %1371 = vdwg.mxu0
    %v1374 = vcombine.high %v1364, %v1364
    %v1376 = vunpack.c.l.s4 1983009808
    %v1377 = vunpack.c.0.s8 %v1376
    %v1378 = vlaneseq
    %v1379 = vshrl.u32 %v1378, 7
    %v1380 = vsub.s32 %v1377, %v1379
    %v1381 = vrot.slane %v1364, %v1380
    %v1383 = vunpack.c.l.s4 1983009808
    %v1384 = vunpack.c.0.s8 %v1383
    %v1385 = vlaneseq
    %v1386 = vshrl.u32 %v1385, 7
    %v1387 = vsub.s32 %v1384, %v1386
    %v1388 = vrot.slane %v1374, %v1387
    %v1389 = vcombine.high %v1381, %v1381
    %v1390 = vcombine.high %v1388, %v1388
    %v1391 = vcombine.high %v1369, %v1369
    %v1393 = vunpack.c.l.s4 1983009808
    %v1394 = vunpack.c.0.s8 %v1393
    %v1395 = vlaneseq
    %v1396 = vshrl.u32 %v1395, 7
    %v1397 = vsub.s32 %v1394, %v1396
    %v1398 = vrot.slane %v1369, %v1397
    %v1400 = vunpack.c.l.s4 1983009808
    %v1401 = vunpack.c.0.s8 %v1400
    %v1402 = vlaneseq
    %v1403 = vshrl.u32 %v1402, 7
    %v1404 = vsub.s32 %v1401, %v1403
    %v1405 = vrot.slane %v1391, %v1404
    %v1406 = vcombine.high %v1398, %v1398
    %v1407 = vcombine.high %v1405, %v1405
    %v1416 = vsel %vm94, %v1381, %v1407
    %v1417 = vsel %vm94, %v1389, %v1405
    %v1418 = vsel %vm94, %v1388, %v1406
    %v1419 = vsel %vm94, %v1390, %v1398
    %v1420 = vsel %vm94, %v1398, %v1390
    %v1421 = vsel %vm94, %v1406, %v1388
    %v1422 = vsel %vm94, %v1405, %v1389
    %v1423 = vsel %vm94, %v1407, %v1381
    %1424 = vst [vmem:[#allocation2] sm:$0x3] %v1416
    %1425 = vst [vmem:[#allocation2 + $0x2] sm:$0x3] %v1417
    %1426 = vst [vmem:[#allocation2 + $0x4] sm:$0x3] %v1418
    %1427 = vst [vmem:[#allocation2 + $0x6] sm:$0x3] %v1419
    %1428 = vst [vmem:[#allocation2 + $0x8] sm:$0x3] %v1420
    %1429 = vst [vmem:[#allocation2 + $0xa] sm:$0x3] %v1421
    %1430 = vst [vmem:[#allocation2 + $0xc] sm:$0x3] %v1422
    %1431 = vst [vmem:[#allocation2 + $0xe] sm:$0x3] %v1423
    %v1432 = vld [vmem:[%s7] sm:$0xff]
    %v1433 = vld [vmem:[%s7 + $0x8] sm:$0xff]
    %v1434 = vld [vmem:[%s7 + $0x10] sm:$0xff]
    %v1435 = vld [vmem:[%s7 + $0x18] sm:$0xff]
    %s1436 = scalar_lea.vmem %s1, 2
    %v1437 = vld [vmem:[%s1436] sm:$0x3]
    %s1438 = scalar_lea.vmem %s2, 2
    %v1439 = vld [vmem:[%s1438] sm:$0x3]
    %v1440 = vld [vmem:[#allocation2] sm:$0x3]
    %v1442 = vsel %vm301, %v1437, 0
    %1444 = vmatprep.subr.mxu0 0.0
    %1445 = vmatpush1.msra.mxu0 %v1432
    %1446 = vmatprep.subr.mxu0 0.0
    %1447 = vmatpush1.msra.mxu0 %v1433
    %1448 = vmatprep.subr.mxu0 0.0
    %1449 = vmatpush1.msra.mxu0 %v1434
    %1450 = vmatprep.subr.mxu0 0.0
    %1451 = vmatpush1.msra.mxu0 %v1435
    %1452 = vmatprep.subr.mxu0 0.0
    %1453 = vmatpush1.msra.mxu0 0.0
    %1454 = vmatprep.subr.mxu0 0.0
    %1455 = vmatpush1.msra.mxu0 0.0
    %1456 = vmatprep.subr.mxu0 0.0
    %1457 = vmatpush1.msra.mxu0 0.0
    %1458 = vmatprep.subr.mxu0 0.0
    %1459 = vmatpush1.msra.mxu0 0.0
    %1460 = vmatprep.subr.mxu0 0.0
    %1461 = vmatpush1.msra.mxu0 0.0
    %1462 = vmatprep.subr.mxu0 0.0
    %1463 = vmatpush1.msra.mxu0 0.0
    %1464 = vmatprep.subr.mxu0 0.0
    %1465 = vmatpush1.msra.mxu0 0.0
    %1466 = vmatprep.subr.mxu0 0.0
    %1467 = vmatpush1.msra.mxu0 0.0
    %1468 = vmatprep.subr.mxu0 0.0
    %1469 = vmatpush1.msra.mxu0 0.0
    %1470 = vmatprep.subr.mxu0 0.0
    %1471 = vmatpush1.msra.mxu0 0.0
    %1472 = vmatprep.subr.mxu0 0.0
    %1473 = vmatpush1.msra.mxu0 0.0
    %1474 = vmatprep.subr.mxu0 0.0
    %1475 = vmatpush1.msra.mxu0 0.0
    %1476 = vmatprep.subr.mxu0 0.0
    %1477 = vmatpush1.msra.mxu0 0.0
    %1478 = vmatprep.subr.mxu0 0.0
    %1479 = vmatpush1.msra.mxu0 0.0
    %1480 = vmatprep.subr.mxu0 0.0
    %1481 = vmatpush1.msra.mxu0 0.0
    %1482 = vmatprep.subr.mxu0 0.0
    %1483 = vmatpush1.msra.mxu0 0.0
    %1484 = vmatprep.subr.mxu0 0.0
    %1485 = vmatpush1.msra.mxu0 0.0
    %1486 = vmatprep.subr.mxu0 0.0
    %1487 = vmatpush1.msra.mxu0 0.0
    %1488 = vmatprep.subr.mxu0 0.0
    %1489 = vmatpush1.msra.mxu0 0.0
    %1490 = vmatprep.subr.mxu0 0.0
    %1491 = vmatpush1.msra.mxu0 0.0
    %1492 = vmatprep.subr.mxu0 0.0
    %1493 = vmatpush1.msra.mxu0 0.0
    %1494 = vmatprep.subr.mxu0 0.0
    %1495 = vmatpush1.msra.mxu0 0.0
    %1496 = vmatprep.subr.mxu0 0.0
    %1497 = vmatpush1.msra.mxu0 0.0
    %1498 = vmatprep.subr.mxu0 0.0
    %1499 = vmatpush1.msra.mxu0 0.0
    %1500 = vmatprep.subr.mxu0 0.0
    %1501 = vmatpush1.msra.mxu0 0.0
    %1502 = vmatprep.subr.mxu0 0.0
    %1503 = vmatpush1.msra.mxu0 0.0
    %1504 = vmatprep.subr.mxu0 0.0
    %1505 = vmatpush1.msra.mxu0 0.0
    %1506 = vmatprep.subr.mxu0 0.0
    %1507 = vmatpush1.msra.mxu0 0.0
    %1508 = vmatprep.mubr.f32.mxu0 0.0
    %1509 = vmatmul.mubr.f32.gmra.mrb[0].mxu0 %v1442
    %v1510 = vpop.f32.mrb[0].mxu0
    %v1511 = vadd.f32 0.0, %v1510
    %v1512 = vpop.f32.mrb[0].mxu0
    %1513 = vdwg.mxu0
    %v1514 = vadd.f32 %v1440, %v1511
    %v1515 = vxor.u32 %v1514, 2147483648
    %v1516 = vmul.f32 %v1515, 1.442695
    %v1517 = vpow.pop %v1516
    %v1518 = vadd.f32 %v1517, 1.0
    %v1519 = vrcp.pop %v1518
    %v1520 = vmul.f32 1.0, %v1519
    %v1521 = vtanh.pop %v1514
    %1523 = vrot.lane.b32.xlu0 %v1439, 32
    %v1524 = vpop.permute.xlu0 %1523
    %v1526 = vmul.f32 %v1520, %v1524
    %1528 = vrot.lane.b32.xlu0 %v1521, 64
    %v1529 = vpop.permute.xlu0 %1528
    %v1531 = vmul.f32 %v1520, %v1529
    %1533 = vrot.lane.b32.xlu0 %v1531, 32
    %v1534 = vpop.permute.xlu0 %1533
    %v1536 = vadd.f32 %v1526, %v1534
    %v1537 = vtanh.pop %v1536
    %1539 = vrot.lane.b32.xlu0 %v1537, 64
    %v1540 = vpop.permute.xlu0 %1539
    %v1542 = vmul.f32 %v1520, %v1540
    %1544 = vrot.lane.b32.xlu0 %v1542, 32
    %v1545 = vpop.permute.xlu0 %1544
    %1547 = vst.msk [vmem:[#allocation3] sm:$0x3] %vm408, %v1545
    %1548 = vrot.lane.b32.xlu0 %v1542, 16
    %v1549 = vpop.permute.xlu0 %1548
    %1551 = vst.msk [vmem:[%s413] sm:$0x3] %vm408, %v1549
    %v1552 = vld [vmem:[%s415] sm:$0x3]
    %v1553 = vsel %vm301, %v1545, 0
    %1555 = vmatprep.subr.mxu0 0.0
    %1556 = vmatpush1.msra.mxu0 %v1432
    %1557 = vmatprep.subr.mxu0 0.0
    %1558 = vmatpush1.msra.mxu0 %v1433
    %1559 = vmatprep.subr.mxu0 0.0
    %1560 = vmatpush1.msra.mxu0 %v1434
    %1561 = vmatprep.subr.mxu0 0.0
    %1562 = vmatpush1.msra.mxu0 %v1435
    %1563 = vmatprep.subr.mxu0 0.0
    %1564 = vmatpush1.msra.mxu0 0.0
    %1565 = vmatprep.subr.mxu0 0.0
    %1566 = vmatpush1.msra.mxu0 0.0
    %1567 = vmatprep.subr.mxu0 0.0
    %1568 = vmatpush1.msra.mxu0 0.0
    %1569 = vmatprep.subr.mxu0 0.0
    %1570 = vmatpush1.msra.mxu0 0.0
    %1571 = vmatprep.subr.mxu0 0.0
    %1572 = vmatpush1.msra.mxu0 0.0
    %1573 = vmatprep.subr.mxu0 0.0
    %1574 = vmatpush1.msra.mxu0 0.0
    %1575 = vmatprep.subr.mxu0 0.0
    %1576 = vmatpush1.msra.mxu0 0.0
    %1577 = vmatprep.subr.mxu0 0.0
    %1578 = vmatpush1.msra.mxu0 0.0
    %1579 = vmatprep.subr.mxu0 0.0
    %1580 = vmatpush1.msra.mxu0 0.0
    %1581 = vmatprep.subr.mxu0 0.0
    %1582 = vmatpush1.msra.mxu0 0.0
    %1583 = vmatprep.subr.mxu0 0.0
    %1584 = vmatpush1.msra.mxu0 0.0
    %1585 = vmatprep.subr.mxu0 0.0
    %1586 = vmatpush1.msra.mxu0 0.0
    %1587 = vmatprep.subr.mxu0 0.0
    %1588 = vmatpush1.msra.mxu0 0.0
    %1589 = vmatprep.subr.mxu0 0.0
    %1590 = vmatpush1.msra.mxu0 0.0
    %1591 = vmatprep.subr.mxu0 0.0
    %1592 = vmatpush1.msra.mxu0 0.0
    %1593 = vmatprep.subr.mxu0 0.0
    %1594 = vmatpush1.msra.mxu0 0.0
    %1595 = vmatprep.subr.mxu0 0.0
    %1596 = vmatpush1.msra.mxu0 0.0
    %1597 = vmatprep.subr.mxu0 0.0
    %1598 = vmatpush1.msra.mxu0 0.0
    %1599 = vmatprep.subr.mxu0 0.0
    %1600 = vmatpush1.msra.mxu0 0.0
    %1601 = vmatprep.subr.mxu0 0.0
    %1602 = vmatpush1.msra.mxu0 0.0
    %1603 = vmatprep.subr.mxu0 0.0
    %1604 = vmatpush1.msra.mxu0 0.0
    %1605 = vmatprep.subr.mxu0 0.0
    %1606 = vmatpush1.msra.mxu0 0.0
    %1607 = vmatprep.subr.mxu0 0.0
    %1608 = vmatpush1.msra.mxu0 0.0
    %1609 = vmatprep.subr.mxu0 0.0
    %1610 = vmatpush1.msra.mxu0 0.0
    %1611 = vmatprep.subr.mxu0 0.0
    %1612 = vmatpush1.msra.mxu0 0.0
    %1613 = vmatprep.subr.mxu0 0.0
    %1614 = vmatpush1.msra.mxu0 0.0
    %1615 = vmatprep.subr.mxu0 0.0
    %1616 = vmatpush1.msra.mxu0 0.0
    %1617 = vmatprep.subr.mxu0 0.0
    %1618 = vmatpush1.msra.mxu0 0.0
    %1619 = vmatprep.mubr.f32.mxu0 0.0
    %1620 = vmatmul.mubr.f32.gmra.mrb[0].mxu0 %v1553
    %v1621 = vpop.f32.mrb[0].mxu0
    %v1622 = vadd.f32 0.0, %v1621
    %v1623 = vpop.f32.mrb[0].mxu0
    %1624 = vdwg.mxu0
    %v1625 = vadd.f32 %v1552, %v1622
    %v1626 = vxor.u32 %v1625, 2147483648
    %v1627 = vmul.f32 %v1626, 1.442695
    %v1628 = vpow.pop %v1627
    %v1629 = vadd.f32 %v1628, 1.0
    %v1630 = vrcp.pop %v1629
    %v1631 = vmul.f32 1.0, %v1630
    %v1632 = vtanh.pop %v1625
    %v1633 = vmul.f32 %v1631, %v1536
    %1635 = vrot.lane.b32.xlu0 %v1632, 64
    %v1636 = vpop.permute.xlu0 %1635
    %v1638 = vmul.f32 %v1631, %v1636
    %1640 = vrot.lane.b32.xlu0 %v1638, 32
    %v1641 = vpop.permute.xlu0 %1640
    %v1643 = vadd.f32 %v1633, %v1641
    %v1644 = vtanh.pop %v1643
    %1646 = vrot.lane.b32.xlu0 %v1644, 64
    %v1647 = vpop.permute.xlu0 %1646
    %v1649 = vmul.f32 %v1631, %v1647
    %1651 = vrot.lane.b32.xlu0 %v1649, 32
    %v1652 = vpop.permute.xlu0 %1651
    %1654 = vst.msk [vmem:[%s518] sm:$0x3] %vm408, %v1652
    %1655 = vrot.lane.b32.xlu0 %v1649, 16
    %v1656 = vpop.permute.xlu0 %1655
    %1658 = vst.msk [vmem:[%s523] sm:$0x3] %vm408, %v1656
    %v1659 = vld [vmem:[%s525] sm:$0x3]
    %v1660 = vsel %vm301, %v1652, 0
    %1662 = vmatprep.subr.mxu0 0.0
    %1663 = vmatpush1.msra.mxu0 %v1432
    %1664 = vmatprep.subr.mxu0 0.0
    %1665 = vmatpush1.msra.mxu0 %v1433
    %1666 = vmatprep.subr.mxu0 0.0
    %1667 = vmatpush1.msra.mxu0 %v1434
    %1668 = vmatprep.subr.mxu0 0.0
    %1669 = vmatpush1.msra.mxu0 %v1435
    %1670 = vmatprep.subr.mxu0 0.0
    %1671 = vmatpush1.msra.mxu0 0.0
    %1672 = vmatprep.subr.mxu0 0.0
    %1673 = vmatpush1.msra.mxu0 0.0
    %1674 = vmatprep.subr.mxu0 0.0
    %1675 = vmatpush1.msra.mxu0 0.0
    %1676 = vmatprep.subr.mxu0 0.0
    %1677 = vmatpush1.msra.mxu0 0.0
    %1678 = vmatprep.subr.mxu0 0.0
    %1679 = vmatpush1.msra.mxu0 0.0
    %1680 = vmatprep.subr.mxu0 0.0
    %1681 = vmatpush1.msra.mxu0 0.0
    %1682 = vmatprep.subr.mxu0 0.0
    %1683 = vmatpush1.msra.mxu0 0.0
    %1684 = vmatprep.subr.mxu0 0.0
    %1685 = vmatpush1.msra.mxu0 0.0
    %1686 = vmatprep.subr.mxu0 0.0
    %1687 = vmatpush1.msra.mxu0 0.0
    %1688 = vmatprep.subr.mxu0 0.0
    %1689 = vmatpush1.msra.mxu0 0.0
    %1690 = vmatprep.subr.mxu0 0.0
    %1691 = vmatpush1.msra.mxu0 0.0
    %1692 = vmatprep.subr.mxu0 0.0
    %1693 = vmatpush1.msra.mxu0 0.0
    %1694 = vmatprep.subr.mxu0 0.0
    %1695 = vmatpush1.msra.mxu0 0.0
    %1696 = vmatprep.subr.mxu0 0.0
    %1697 = vmatpush1.msra.mxu0 0.0
    %1698 = vmatprep.subr.mxu0 0.0
    %1699 = vmatpush1.msra.mxu0 0.0
    %1700 = vmatprep.subr.mxu0 0.0
    %1701 = vmatpush1.msra.mxu0 0.0
    %1702 = vmatprep.subr.mxu0 0.0
    %1703 = vmatpush1.msra.mxu0 0.0
    %1704 = vmatprep.subr.mxu0 0.0
    %1705 = vmatpush1.msra.mxu0 0.0
    %1706 = vmatprep.subr.mxu0 0.0
    %1707 = vmatpush1.msra.mxu0 0.0
    %1708 = vmatprep.subr.mxu0 0.0
    %1709 = vmatpush1.msra.mxu0 0.0
    %1710 = vmatprep.subr.mxu0 0.0
    %1711 = vmatpush1.msra.mxu0 0.0
    %1712 = vmatprep.subr.mxu0 0.0
    %1713 = vmatpush1.msra.mxu0 0.0
    %1714 = vmatprep.subr.mxu0 0.0
    %1715 = vmatpush1.msra.mxu0 0.0
    %1716 = vmatprep.subr.mxu0 0.0
    %1717 = vmatpush1.msra.mxu0 0.0
    %1718 = vmatprep.subr.mxu0 0.0
    %1719 = vmatpush1.msra.mxu0 0.0
    %1720 = vmatprep.subr.mxu0 0.0
    %1721 = vmatpush1.msra.mxu0 0.0
    %1722 = vmatprep.subr.mxu0 0.0
    %1723 = vmatpush1.msra.mxu0 0.0
    %1724 = vmatprep.subr.mxu0 0.0
    %1725 = vmatpush1.msra.mxu0 0.0
    %1726 = vmatprep.mubr.f32.mxu0 0.0
    %1727 = vmatmul.mubr.f32.gmra.mrb[0].mxu0 %v1660
    %v1728 = vpop.f32.mrb[0].mxu0
    %v1729 = vadd.f32 0.0, %v1728
    %v1730 = vpop.f32.mrb[0].mxu0
    %1731 = vdwg.mxu0
    %v1732 = vadd.f32 %v1659, %v1729
    %v1733 = vxor.u32 %v1732, 2147483648
    %v1734 = vmul.f32 %v1733, 1.442695
    %v1735 = vpow.pop %v1734
    %v1736 = vadd.f32 %v1735, 1.0
    %v1737 = vrcp.pop %v1736
    %v1738 = vmul.f32 1.0, %v1737
    %v1739 = vtanh.pop %v1732
    %v1740 = vmul.f32 %v1738, %v1643
    %1742 = vrot.lane.b32.xlu0 %v1739, 64
    %v1743 = vpop.permute.xlu0 %1742
    %v1745 = vmul.f32 %v1738, %v1743
    %1747 = vrot.lane.b32.xlu0 %v1745, 32
    %v1748 = vpop.permute.xlu0 %1747
    %v1750 = vadd.f32 %v1740, %v1748
    %v1751 = vtanh.pop %v1750
    %1753 = vrot.lane.b32.xlu0 %v1751, 64
    %v1754 = vpop.permute.xlu0 %1753
    %v1756 = vmul.f32 %v1738, %v1754
    %1758 = vrot.lane.b32.xlu0 %v1756, 32
    %v1759 = vpop.permute.xlu0 %1758
    %1761 = vst.msk [vmem:[%s628] sm:$0x3] %vm408, %v1759
    %1762 = vrot.lane.b32.xlu0 %v1756, 16
    %v1763 = vpop.permute.xlu0 %1762
    %1765 = vst.msk [vmem:[%s633] sm:$0x3] %vm408, %v1763
    %v1766 = vld [vmem:[%s635] sm:$0x3]
    %v1767 = vsel %vm301, %v1759, 0
    %1769 = vmatprep.subr.mxu0 0.0
    %1770 = vmatpush1.msra.mxu0 %v1432
    %1771 = vmatprep.subr.mxu0 0.0
    %1772 = vmatpush1.msra.mxu0 %v1433
    %1773 = vmatprep.subr.mxu0 0.0
    %1774 = vmatpush1.msra.mxu0 %v1434
    %1775 = vmatprep.subr.mxu0 0.0
    %1776 = vmatpush1.msra.mxu0 %v1435
    %1777 = vmatprep.subr.mxu0 0.0
    %1778 = vmatpush1.msra.mxu0 0.0
    %1779 = vmatprep.subr.mxu0 0.0
    %1780 = vmatpush1.msra.mxu0 0.0
    %1781 = vmatprep.subr.mxu0 0.0
    %1782 = vmatpush1.msra.mxu0 0.0
    %1783 = vmatprep.subr.mxu0 0.0
    %1784 = vmatpush1.msra.mxu0 0.0
    %1785 = vmatprep.subr.mxu0 0.0
    %1786 = vmatpush1.msra.mxu0 0.0
    %1787 = vmatprep.subr.mxu0 0.0
    %1788 = vmatpush1.msra.mxu0 0.0
    %1789 = vmatprep.subr.mxu0 0.0
    %1790 = vmatpush1.msra.mxu0 0.0
    %1791 = vmatprep.subr.mxu0 0.0
    %1792 = vmatpush1.msra.mxu0 0.0
    %1793 = vmatprep.subr.mxu0 0.0
    %1794 = vmatpush1.msra.mxu0 0.0
    %1795 = vmatprep.subr.mxu0 0.0
    %1796 = vmatpush1.msra.mxu0 0.0
    %1797 = vmatprep.subr.mxu0 0.0
    %1798 = vmatpush1.msra.mxu0 0.0
    %1799 = vmatprep.subr.mxu0 0.0
    %1800 = vmatpush1.msra.mxu0 0.0
    %1801 = vmatprep.subr.mxu0 0.0
    %1802 = vmatpush1.msra.mxu0 0.0
    %1803 = vmatprep.subr.mxu0 0.0
    %1804 = vmatpush1.msra.mxu0 0.0
    %1805 = vmatprep.subr.mxu0 0.0
    %1806 = vmatpush1.msra.mxu0 0.0
    %1807 = vmatprep.subr.mxu0 0.0
    %1808 = vmatpush1.msra.mxu0 0.0
    %1809 = vmatprep.subr.mxu0 0.0
    %1810 = vmatpush1.msra.mxu0 0.0
    %1811 = vmatprep.subr.mxu0 0.0
    %1812 = vmatpush1.msra.mxu0 0.0
    %1813 = vmatprep.subr.mxu0 0.0
    %1814 = vmatpush1.msra.mxu0 0.0
    %1815 = vmatprep.subr.mxu0 0.0
    %1816 = vmatpush1.msra.mxu0 0.0
    %1817 = vmatprep.subr.mxu0 0.0
    %1818 = vmatpush1.msra.mxu0 0.0
    %1819 = vmatprep.subr.mxu0 0.0
    %1820 = vmatpush1.msra.mxu0 0.0
    %1821 = vmatprep.subr.mxu0 0.0
    %1822 = vmatpush1.msra.mxu0 0.0
    %1823 = vmatprep.subr.mxu0 0.0
    %1824 = vmatpush1.msra.mxu0 0.0
    %1825 = vmatprep.subr.mxu0 0.0
    %1826 = vmatpush1.msra.mxu0 0.0
    %1827 = vmatprep.subr.mxu0 0.0
    %1828 = vmatpush1.msra.mxu0 0.0
    %1829 = vmatprep.subr.mxu0 0.0
    %1830 = vmatpush1.msra.mxu0 0.0
    %1831 = vmatprep.subr.mxu0 0.0
    %1832 = vmatpush1.msra.mxu0 0.0
    %1833 = vmatprep.mubr.f32.mxu0 0.0
    %1834 = vmatmul.mubr.f32.gmra.mrb[0].mxu0 %v1767
    %v1835 = vpop.f32.mrb[0].mxu0
    %v1836 = vadd.f32 0.0, %v1835
    %v1837 = vpop.f32.mrb[0].mxu0
    %1838 = vdwg.mxu0
    %v1839 = vadd.f32 %v1766, %v1836
    %v1840 = vxor.u32 %v1839, 2147483648
    %v1841 = vmul.f32 %v1840, 1.442695
    %v1842 = vpow.pop %v1841
    %v1843 = vadd.f32 %v1842, 1.0
    %v1844 = vrcp.pop %v1843
    %v1845 = vmul.f32 1.0, %v1844
    %v1846 = vtanh.pop %v1839
    %v1847 = vmul.f32 %v1845, %v1750
    %1849 = vrot.lane.b32.xlu0 %v1846, 64
    %v1850 = vpop.permute.xlu0 %1849
    %v1852 = vmul.f32 %v1845, %v1850
    %1854 = vrot.lane.b32.xlu0 %v1852, 32
    %v1855 = vpop.permute.xlu0 %1854
    %v1857 = vadd.f32 %v1847, %v1855
    %v1858 = vtanh.pop %v1857
    %1860 = vrot.lane.b32.xlu0 %v1858, 64
    %v1861 = vpop.permute.xlu0 %1860
    %v1863 = vmul.f32 %v1845, %v1861
    %1865 = vrot.lane.b32.xlu0 %v1863, 32
    %v1866 = vpop.permute.xlu0 %1865
    %1868 = vst.msk [vmem:[%s738] sm:$0x3] %vm408, %v1866
    %1869 = vrot.lane.b32.xlu0 %v1863, 16
    %v1870 = vpop.permute.xlu0 %1869
    %1872 = vst.msk [vmem:[%s743] sm:$0x3] %vm408, %v1870
    %v1873 = vld [vmem:[%s745] sm:$0x3]
    %v1874 = vsel %vm301, %v1866, 0
    %1876 = vmatprep.subr.mxu0 0.0
    %1877 = vmatpush1.msra.mxu0 %v1432
    %1878 = vmatprep.subr.mxu0 0.0
    %1879 = vmatpush1.msra.mxu0 %v1433
    %1880 = vmatprep.subr.mxu0 0.0
    %1881 = vmatpush1.msra.mxu0 %v1434
    %1882 = vmatprep.subr.mxu0 0.0
    %1883 = vmatpush1.msra.mxu0 %v1435
    %1884 = vmatprep.subr.mxu0 0.0
    %1885 = vmatpush1.msra.mxu0 0.0
    %1886 = vmatprep.subr.mxu0 0.0
    %1887 = vmatpush1.msra.mxu0 0.0
    %1888 = vmatprep.subr.mxu0 0.0
    %1889 = vmatpush1.msra.mxu0 0.0
    %1890 = vmatprep.subr.mxu0 0.0
    %1891 = vmatpush1.msra.mxu0 0.0
    %1892 = vmatprep.subr.mxu0 0.0
    %1893 = vmatpush1.msra.mxu0 0.0
    %1894 = vmatprep.subr.mxu0 0.0
    %1895 = vmatpush1.msra.mxu0 0.0
    %1896 = vmatprep.subr.mxu0 0.0
    %1897 = vmatpush1.msra.mxu0 0.0
    %1898 = vmatprep.subr.mxu0 0.0
    %1899 = vmatpush1.msra.mxu0 0.0
    %1900 = vmatprep.subr.mxu0 0.0
    %1901 = vmatpush1.msra.mxu0 0.0
    %1902 = vmatprep.subr.mxu0 0.0
    %1903 = vmatpush1.msra.mxu0 0.0
    %1904 = vmatprep.subr.mxu0 0.0
    %1905 = vmatpush1.msra.mxu0 0.0
    %1906 = vmatprep.subr.mxu0 0.0
    %1907 = vmatpush1.msra.mxu0 0.0
    %1908 = vmatprep.subr.mxu0 0.0
    %1909 = vmatpush1.msra.mxu0 0.0
    %1910 = vmatprep.subr.mxu0 0.0
    %1911 = vmatpush1.msra.mxu0 0.0
    %1912 = vmatprep.subr.mxu0 0.0
    %1913 = vmatpush1.msra.mxu0 0.0
    %1914 = vmatprep.subr.mxu0 0.0
    %1915 = vmatpush1.msra.mxu0 0.0
    %1916 = vmatprep.subr.mxu0 0.0
    %1917 = vmatpush1.msra.mxu0 0.0
    %1918 = vmatprep.subr.mxu0 0.0
    %1919 = vmatpush1.msra.mxu0 0.0
    %1920 = vmatprep.subr.mxu0 0.0
    %1921 = vmatpush1.msra.mxu0 0.0
    %1922 = vmatprep.subr.mxu0 0.0
    %1923 = vmatpush1.msra.mxu0 0.0
    %1924 = vmatprep.subr.mxu0 0.0
    %1925 = vmatpush1.msra.mxu0 0.0
    %1926 = vmatprep.subr.mxu0 0.0
    %1927 = vmatpush1.msra.mxu0 0.0
    %1928 = vmatprep.subr.mxu0 0.0
    %1929 = vmatpush1.msra.mxu0 0.0
    %1930 = vmatprep.subr.mxu0 0.0
    %1931 = vmatpush1.msra.mxu0 0.0
    %1932 = vmatprep.subr.mxu0 0.0
    %1933 = vmatpush1.msra.mxu0 0.0
    %1934 = vmatprep.subr.mxu0 0.0
    %1935 = vmatpush1.msra.mxu0 0.0
    %1936 = vmatprep.subr.mxu0 0.0
    %1937 = vmatpush1.msra.mxu0 0.0
    %1938 = vmatprep.subr.mxu0 0.0
    %1939 = vmatpush1.msra.mxu0 0.0
    %1940 = vmatprep.mubr.f32.mxu0 0.0
    %1941 = vmatmul.mubr.f32.gmra.mrb[0].mxu0 %v1874
    %v1942 = vpop.f32.mrb[0].mxu0
    %v1943 = vadd.f32 0.0, %v1942
    %v1944 = vpop.f32.mrb[0].mxu0
    %1945 = vdwg.mxu0
    %v1946 = vadd.f32 %v1873, %v1943
    %v1947 = vxor.u32 %v1946, 2147483648
    %v1948 = vmul.f32 %v1947, 1.442695
    %v1949 = vpow.pop %v1948
    %v1950 = vadd.f32 %v1949, 1.0
    %v1951 = vrcp.pop %v1950
    %v1952 = vmul.f32 1.0, %v1951
    %v1953 = vtanh.pop %v1946
    %v1954 = vmul.f32 %v1952, %v1857
    %1956 = vrot.lane.b32.xlu0 %v1953, 64
    %v1957 = vpop.permute.xlu0 %1956
    %v1959 = vmul.f32 %v1952, %v1957
    %1961 = vrot.lane.b32.xlu0 %v1959, 32
    %v1962 = vpop.permute.xlu0 %1961
    %v1964 = vadd.f32 %v1954, %v1962
    %v1965 = vtanh.pop %v1964
    %1967 = vrot.lane.b32.xlu0 %v1965, 64
    %v1968 = vpop.permute.xlu0 %1967
    %v1970 = vmul.f32 %v1952, %v1968
    %1972 = vrot.lane.b32.xlu0 %v1970, 32
    %v1973 = vpop.permute.xlu0 %1972
    %1975 = vst.msk [vmem:[%s848] sm:$0x3] %vm408, %v1973
    %1976 = vrot.lane.b32.xlu0 %v1970, 16
    %v1977 = vpop.permute.xlu0 %1976
    %1979 = vst.msk [vmem:[%s853] sm:$0x3] %vm408, %v1977
    %v1980 = vld [vmem:[%s855] sm:$0x3]
    %v1981 = vsel %vm301, %v1973, 0
    %1983 = vmatprep.subr.mxu0 0.0
    %1984 = vmatpush1.msra.mxu0 %v1432
    %1985 = vmatprep.subr.mxu0 0.0
    %1986 = vmatpush1.msra.mxu0 %v1433
    %1987 = vmatprep.subr.mxu0 0.0
    %1988 = vmatpush1.msra.mxu0 %v1434
    %1989 = vmatprep.subr.mxu0 0.0
    %1990 = vmatpush1.msra.mxu0 %v1435
    %1991 = vmatprep.subr.mxu0 0.0
    %1992 = vmatpush1.msra.mxu0 0.0
    %1993 = vmatprep.subr.mxu0 0.0
    %1994 = vmatpush1.msra.mxu0 0.0
    %1995 = vmatprep.subr.mxu0 0.0
    %1996 = vmatpush1.msra.mxu0 0.0
    %1997 = vmatprep.subr.mxu0 0.0
    %1998 = vmatpush1.msra.mxu0 0.0
    %1999 = vmatprep.subr.mxu0 0.0
    %2000 = vmatpush1.msra.mxu0 0.0
    %2001 = vmatprep.subr.mxu0 0.0
    %2002 = vmatpush1.msra.mxu0 0.0
    %2003 = vmatprep.subr.mxu0 0.0
    %2004 = vmatpush1.msra.mxu0 0.0
    %2005 = vmatprep.subr.mxu0 0.0
    %2006 = vmatpush1.msra.mxu0 0.0
    %2007 = vmatprep.subr.mxu0 0.0
    %2008 = vmatpush1.msra.mxu0 0.0
    %2009 = vmatprep.subr.mxu0 0.0
    %2010 = vmatpush1.msra.mxu0 0.0
    %2011 = vmatprep.subr.mxu0 0.0
    %2012 = vmatpush1.msra.mxu0 0.0
    %2013 = vmatprep.subr.mxu0 0.0
    %2014 = vmatpush1.msra.mxu0 0.0
    %2015 = vmatprep.subr.mxu0 0.0
    %2016 = vmatpush1.msra.mxu0 0.0
    %2017 = vmatprep.subr.mxu0 0.0
    %2018 = vmatpush1.msra.mxu0 0.0
    %2019 = vmatprep.subr.mxu0 0.0
    %2020 = vmatpush1.msra.mxu0 0.0
    %2021 = vmatprep.subr.mxu0 0.0
    %2022 = vmatpush1.msra.mxu0 0.0
    %2023 = vmatprep.subr.mxu0 0.0
    %2024 = vmatpush1.msra.mxu0 0.0
    %2025 = vmatprep.subr.mxu0 0.0
    %2026 = vmatpush1.msra.mxu0 0.0
    %2027 = vmatprep.subr.mxu0 0.0
    %2028 = vmatpush1.msra.mxu0 0.0
    %2029 = vmatprep.subr.mxu0 0.0
    %2030 = vmatpush1.msra.mxu0 0.0
    %2031 = vmatprep.subr.mxu0 0.0
    %2032 = vmatpush1.msra.mxu0 0.0
    %2033 = vmatprep.subr.mxu0 0.0
    %2034 = vmatpush1.msra.mxu0 0.0
    %2035 = vmatprep.subr.mxu0 0.0
    %2036 = vmatpush1.msra.mxu0 0.0
    %2037 = vmatprep.subr.mxu0 0.0
    %2038 = vmatpush1.msra.mxu0 0.0
    %2039 = vmatprep.subr.mxu0 0.0
    %2040 = vmatpush1.msra.mxu0 0.0
    %2041 = vmatprep.subr.mxu0 0.0
    %2042 = vmatpush1.msra.mxu0 0.0
    %2043 = vmatprep.subr.mxu0 0.0
    %2044 = vmatpush1.msra.mxu0 0.0
    %2045 = vmatprep.subr.mxu0 0.0
    %2046 = vmatpush1.msra.mxu0 0.0
    %2047 = vmatprep.mubr.f32.mxu0 0.0
    %2048 = vmatmul.mubr.f32.gmra.mrb[0].mxu0 %v1981
    %v2049 = vpop.f32.mrb[0].mxu0
    %v2050 = vadd.f32 0.0, %v2049
    %v2051 = vpop.f32.mrb[0].mxu0
    %2052 = vdwg.mxu0
    %v2053 = vadd.f32 %v1980, %v2050
    %v2054 = vxor.u32 %v2053, 2147483648
    %v2055 = vmul.f32 %v2054, 1.442695
    %v2056 = vpow.pop %v2055
    %v2057 = vadd.f32 %v2056, 1.0
    %v2058 = vrcp.pop %v2057
    %v2059 = vmul.f32 1.0, %v2058
    %v2060 = vtanh.pop %v2053
    %v2061 = vmul.f32 %v2059, %v1964
    %2063 = vrot.lane.b32.xlu0 %v2060, 64
    %v2064 = vpop.permute.xlu0 %2063
    %v2066 = vmul.f32 %v2059, %v2064
    %2068 = vrot.lane.b32.xlu0 %v2066, 32
    %v2069 = vpop.permute.xlu0 %2068
    %v2071 = vadd.f32 %v2061, %v2069
    %v2072 = vtanh.pop %v2071
    %2074 = vrot.lane.b32.xlu0 %v2072, 64
    %v2075 = vpop.permute.xlu0 %2074
    %v2077 = vmul.f32 %v2059, %v2075
    %2079 = vrot.lane.b32.xlu0 %v2077, 32
    %v2080 = vpop.permute.xlu0 %2079
    %2082 = vst.msk [vmem:[%s958] sm:$0x3] %vm408, %v2080
    %2083 = vrot.lane.b32.xlu0 %v2077, 16
    %v2084 = vpop.permute.xlu0 %2083
    %2086 = vst.msk [vmem:[%s963] sm:$0x3] %vm408, %v2084
    %v2087 = vld [vmem:[%s965] sm:$0x3]
    %v2088 = vsel %vm301, %v2080, 0
    %2090 = vmatprep.subr.mxu0 0.0
    %2091 = vmatpush1.msra.mxu0 %v1432
    %2092 = vmatprep.subr.mxu0 0.0
    %2093 = vmatpush1.msra.mxu0 %v1433
    %2094 = vmatprep.subr.mxu0 0.0
    %2095 = vmatpush1.msra.mxu0 %v1434
    %2096 = vmatprep.subr.mxu0 0.0
    %2097 = vmatpush1.msra.mxu0 %v1435
    %2098 = vmatprep.subr.mxu0 0.0
    %2099 = vmatpush1.msra.mxu0 0.0
    %2100 = vmatprep.subr.mxu0 0.0
    %2101 = vmatpush1.msra.mxu0 0.0
    %2102 = vmatprep.subr.mxu0 0.0
    %2103 = vmatpush1.msra.mxu0 0.0
    %2104 = vmatprep.subr.mxu0 0.0
    %2105 = vmatpush1.msra.mxu0 0.0
    %2106 = vmatprep.subr.mxu0 0.0
    %2107 = vmatpush1.msra.mxu0 0.0
    %2108 = vmatprep.subr.mxu0 0.0
    %2109 = vmatpush1.msra.mxu0 0.0
    %2110 = vmatprep.subr.mxu0 0.0
    %2111 = vmatpush1.msra.mxu0 0.0
    %2112 = vmatprep.subr.mxu0 0.0
    %2113 = vmatpush1.msra.mxu0 0.0
    %2114 = vmatprep.subr.mxu0 0.0
    %2115 = vmatpush1.msra.mxu0 0.0
    %2116 = vmatprep.subr.mxu0 0.0
    %2117 = vmatpush1.msra.mxu0 0.0
    %2118 = vmatprep.subr.mxu0 0.0
    %2119 = vmatpush1.msra.mxu0 0.0
    %2120 = vmatprep.subr.mxu0 0.0
    %2121 = vmatpush1.msra.mxu0 0.0
    %2122 = vmatprep.subr.mxu0 0.0
    %2123 = vmatpush1.msra.mxu0 0.0
    %2124 = vmatprep.subr.mxu0 0.0
    %2125 = vmatpush1.msra.mxu0 0.0
    %2126 = vmatprep.subr.mxu0 0.0
    %2127 = vmatpush1.msra.mxu0 0.0
    %2128 = vmatprep.subr.mxu0 0.0
    %2129 = vmatpush1.msra.mxu0 0.0
    %2130 = vmatprep.subr.mxu0 0.0
    %2131 = vmatpush1.msra.mxu0 0.0
    %2132 = vmatprep.subr.mxu0 0.0
    %2133 = vmatpush1.msra.mxu0 0.0
    %2134 = vmatprep.subr.mxu0 0.0
    %2135 = vmatpush1.msra.mxu0 0.0
    %2136 = vmatprep.subr.mxu0 0.0
    %2137 = vmatpush1.msra.mxu0 0.0
    %2138 = vmatprep.subr.mxu0 0.0
    %2139 = vmatpush1.msra.mxu0 0.0
    %2140 = vmatprep.subr.mxu0 0.0
    %2141 = vmatpush1.msra.mxu0 0.0
    %2142 = vmatprep.subr.mxu0 0.0
    %2143 = vmatpush1.msra.mxu0 0.0
    %2144 = vmatprep.subr.mxu0 0.0
    %2145 = vmatpush1.msra.mxu0 0.0
    %2146 = vmatprep.subr.mxu0 0.0
    %2147 = vmatpush1.msra.mxu0 0.0
    %2148 = vmatprep.subr.mxu0 0.0
    %2149 = vmatpush1.msra.mxu0 0.0
    %2150 = vmatprep.subr.mxu0 0.0
    %2151 = vmatpush1.msra.mxu0 0.0
    %2152 = vmatprep.subr.mxu0 0.0
    %2153 = vmatpush1.msra.mxu0 0.0
    %2154 = vmatprep.mubr.f32.mxu0 0.0
    %2155 = vmatmul.mubr.f32.gmra.mrb[0].mxu0 %v2088
    %v2156 = vpop.f32.mrb[0].mxu0
    %v2157 = vadd.f32 0.0, %v2156
    %v2158 = vpop.f32.mrb[0].mxu0
    %2159 = vdwg.mxu0
    %v2160 = vadd.f32 %v2087, %v2157
    %v2161 = vxor.u32 %v2160, 2147483648
    %v2162 = vmul.f32 %v2161, 1.442695
    %v2163 = vpow.pop %v2162
    %v2164 = vadd.f32 %v2163, 1.0
    %v2165 = vrcp.pop %v2164
    %v2166 = vmul.f32 1.0, %v2165
    %v2167 = vtanh.pop %v2160
    %v2168 = vmul.f32 %v2166, %v2071
    %2170 = vrot.lane.b32.xlu0 %v2167, 64
    %v2171 = vpop.permute.xlu0 %2170
    %v2173 = vmul.f32 %v2166, %v2171
    %2175 = vrot.lane.b32.xlu0 %v2173, 32
    %v2176 = vpop.permute.xlu0 %2175
    %v2178 = vadd.f32 %v2168, %v2176
    %v2179 = vtanh.pop %v2178
    %2181 = vrot.lane.b32.xlu0 %v2179, 64
    %v2182 = vpop.permute.xlu0 %2181
    %v2184 = vmul.f32 %v2166, %v2182
    %2186 = vrot.lane.b32.xlu0 %v2184, 32
    %v2187 = vpop.permute.xlu0 %2186
    %2189 = vst.msk [vmem:[%s1068] sm:$0x3] %vm408, %v2187
    %2190 = vrot.lane.b32.xlu0 %v2184, 16
    %v2191 = vpop.permute.xlu0 %2190
    %2193 = vst.msk [vmem:[%s1073] sm:$0x3] %vm408, %v2191
    %v2194 = vld [vmem:[%s1075] sm:$0x3]
    %v2195 = vsel %vm301, %v2187, 0
    %2197 = vmatprep.subr.mxu0 0.0
    %2198 = vmatpush1.msra.mxu0 %v1432
    %2199 = vmatprep.subr.mxu0 0.0
    %2200 = vmatpush1.msra.mxu0 %v1433
    %2201 = vmatprep.subr.mxu0 0.0
    %2202 = vmatpush1.msra.mxu0 %v1434
    %2203 = vmatprep.subr.mxu0 0.0
    %2204 = vmatpush1.msra.mxu0 %v1435
    %2205 = vmatprep.subr.mxu0 0.0
    %2206 = vmatpush1.msra.mxu0 0.0
    %2207 = vmatprep.subr.mxu0 0.0
    %2208 = vmatpush1.msra.mxu0 0.0
    %2209 = vmatprep.subr.mxu0 0.0
    %2210 = vmatpush1.msra.mxu0 0.0
    %2211 = vmatprep.subr.mxu0 0.0
    %2212 = vmatpush1.msra.mxu0 0.0
    %2213 = vmatprep.subr.mxu0 0.0
    %2214 = vmatpush1.msra.mxu0 0.0
    %2215 = vmatprep.subr.mxu0 0.0
    %2216 = vmatpush1.msra.mxu0 0.0
    %2217 = vmatprep.subr.mxu0 0.0
    %2218 = vmatpush1.msra.mxu0 0.0
    %2219 = vmatprep.subr.mxu0 0.0
    %2220 = vmatpush1.msra.mxu0 0.0
    %2221 = vmatprep.subr.mxu0 0.0
    %2222 = vmatpush1.msra.mxu0 0.0
    %2223 = vmatprep.subr.mxu0 0.0
    %2224 = vmatpush1.msra.mxu0 0.0
    %2225 = vmatprep.subr.mxu0 0.0
    %2226 = vmatpush1.msra.mxu0 0.0
    %2227 = vmatprep.subr.mxu0 0.0
    %2228 = vmatpush1.msra.mxu0 0.0
    %2229 = vmatprep.subr.mxu0 0.0
    %2230 = vmatpush1.msra.mxu0 0.0
    %2231 = vmatprep.subr.mxu0 0.0
    %2232 = vmatpush1.msra.mxu0 0.0
    %2233 = vmatprep.subr.mxu0 0.0
    %2234 = vmatpush1.msra.mxu0 0.0
    %2235 = vmatprep.subr.mxu0 0.0
    %2236 = vmatpush1.msra.mxu0 0.0
    %2237 = vmatprep.subr.mxu0 0.0
    %2238 = vmatpush1.msra.mxu0 0.0
    %2239 = vmatprep.subr.mxu0 0.0
    %2240 = vmatpush1.msra.mxu0 0.0
    %2241 = vmatprep.subr.mxu0 0.0
    %2242 = vmatpush1.msra.mxu0 0.0
    %2243 = vmatprep.subr.mxu0 0.0
    %2244 = vmatpush1.msra.mxu0 0.0
    %2245 = vmatprep.subr.mxu0 0.0
    %2246 = vmatpush1.msra.mxu0 0.0
    %2247 = vmatprep.subr.mxu0 0.0
    %2248 = vmatpush1.msra.mxu0 0.0
    %2249 = vmatprep.subr.mxu0 0.0
    %2250 = vmatpush1.msra.mxu0 0.0
    %2251 = vmatprep.subr.mxu0 0.0
    %2252 = vmatpush1.msra.mxu0 0.0
    %2253 = vmatprep.subr.mxu0 0.0
    %2254 = vmatpush1.msra.mxu0 0.0
    %2255 = vmatprep.subr.mxu0 0.0
    %2256 = vmatpush1.msra.mxu0 0.0
    %2257 = vmatprep.subr.mxu0 0.0
    %2258 = vmatpush1.msra.mxu0 0.0
    %2259 = vmatprep.subr.mxu0 0.0
    %2260 = vmatpush1.msra.mxu0 0.0
    %2261 = vmatprep.mubr.f32.mxu0 0.0
    %2262 = vmatmul.mubr.f32.gmra.mrb[0].mxu0 %v2195
    %v2263 = vpop.f32.mrb[0].mxu0
    %v2264 = vadd.f32 0.0, %v2263
    %v2265 = vpop.f32.mrb[0].mxu0
    %2266 = vdwg.mxu0
    %v2267 = vadd.f32 %v2194, %v2264
    %v2268 = vxor.u32 %v2267, 2147483648
    %v2269 = vmul.f32 %v2268, 1.442695
    %v2270 = vpow.pop %v2269
    %v2271 = vadd.f32 %v2270, 1.0
    %v2272 = vrcp.pop %v2271
    %v2273 = vmul.f32 1.0, %v2272
    %v2274 = vtanh.pop %v2267
    %v2275 = vmul.f32 %v2273, %v2178
    %2277 = vrot.lane.b32.xlu0 %v2274, 64
    %v2278 = vpop.permute.xlu0 %2277
    %v2280 = vmul.f32 %v2273, %v2278
    %2282 = vrot.lane.b32.xlu0 %v2280, 32
    %v2283 = vpop.permute.xlu0 %2282
    %v2285 = vadd.f32 %v2275, %v2283
    %v2286 = vtanh.pop %v2285
    %2288 = vrot.lane.b32.xlu0 %v2286, 64
    %v2289 = vpop.permute.xlu0 %2288
    %v2291 = vmul.f32 %v2273, %v2289
    %2293 = vrot.lane.b32.xlu0 %v2291, 32
    %v2294 = vpop.permute.xlu0 %2293
    %2296 = vst.msk [vmem:[%s1178] sm:$0x3] %vm408, %v2294
    %2297 = vrot.lane.b32.xlu0 %v2291, 16
    %v2298 = vpop.permute.xlu0 %2297
    %2300 = vst.msk [vmem:[#allocation4] sm:$0x3] %vm408, %v2298
    %v2301 = vld [vmem:[#allocation3] sm:$0x3]
    %v2302 = vld [vmem:[#allocation3 + $0x2] sm:$0x3]
    %v2303 = vld [vmem:[#allocation3 + $0x4] sm:$0x3]
    %v2304 = vld [vmem:[#allocation3 + $0x6] sm:$0x3]
    %v2305 = vld [vmem:[#allocation3 + $0x8] sm:$0x3]
    %v2306 = vld [vmem:[#allocation3 + $0xa] sm:$0x3]
    %v2307 = vld [vmem:[#allocation3 + $0xc] sm:$0x3]
    %v2308 = vld [vmem:[#allocation3 + $0xe] sm:$0x3]
    %v2309 = vld [vmem:[#allocation4] sm:$0x3]
    %v2310 = vld [vmem:[#allocation4 + $0x2] sm:$0x3]
    %v2311 = vld [vmem:[#allocation4 + $0x4] sm:$0x3]
    %v2312 = vld [vmem:[#allocation4 + $0x6] sm:$0x3]
    %v2313 = vld [vmem:[#allocation4 + $0x8] sm:$0x3]
    %v2314 = vld [vmem:[#allocation4 + $0xa] sm:$0x3]
    %v2315 = vld [vmem:[#allocation4 + $0xc] sm:$0x3]
    %v2316 = vld [vmem:[#allocation4 + $0xe] sm:$0x3]
    %2325 = vrot.lane.b32.xlu0 %v2309, 16
    %v2326 = vpop.permute.xlu0 %2325
    %2327 = vrot.lane.b32.xlu0 %v2310, 16
    %v2328 = vpop.permute.xlu0 %2327
    %2329 = vrot.lane.b32.xlu0 %v2311, 16
    %v2330 = vpop.permute.xlu0 %2329
    %2331 = vrot.lane.b32.xlu0 %v2312, 16
    %v2332 = vpop.permute.xlu0 %2331
    %2333 = vrot.lane.b32.xlu0 %v2313, 16
    %v2334 = vpop.permute.xlu0 %2333
    %2335 = vrot.lane.b32.xlu0 %v2314, 16
    %v2336 = vpop.permute.xlu0 %2335
    %2337 = vrot.lane.b32.xlu0 %v2315, 16
    %v2338 = vpop.permute.xlu0 %2337
    %2339 = vrot.lane.b32.xlu0 %v2316, 16
    %v2340 = vpop.permute.xlu0 %2339
    %v2349 = vsel %vm154, %v2301, %v2326
    %v2350 = vsel %vm154, %v2302, %v2328
    %v2351 = vsel %vm154, %v2303, %v2330
    %v2352 = vsel %vm154, %v2304, %v2332
    %v2353 = vsel %vm154, %v2305, %v2334
    %v2354 = vsel %vm154, %v2306, %v2336
    %v2355 = vsel %vm154, %v2307, %v2338
    %v2356 = vsel %vm154, %v2308, %v2340
    %v2357 = vld [vmem:[%s9] sm:$0xff]
    %v2358 = vld [vmem:[%s9 + $0x8] sm:$0xff]
    %v2359 = vld [vmem:[%s9 + $0x10] sm:$0xff]
    %v2360 = vld [vmem:[%s9 + $0x18] sm:$0xff]
    %v2361 = vld [vmem:[#allocation10] sm:$0x1]
    %v2363 = vlaneseq
    %v2364 = vshrl.u32 %v2363, 7
    %v2365 = vsub.s32 0, %v2364
    %v2366 = vrot.slane %v2361, %v2365
    %v2376 = vcombine.low %v2349, %v2350
    %v2377 = vcombine.low %v2351, %v2352
    %v2379 = vunpack.c.l.s4 1983009808
    %v2380 = vunpack.c.0.s8 %v2379
    %v2381 = vlaneseq
    %v2382 = vshrl.u32 %v2381, 7
    %v2383 = vsub.s32 %v2380, %v2382
    %v2384 = vrot.slane %v2376, %v2383
    %v2386 = vunpack.c.l.s4 1983009808
    %v2387 = vunpack.c.0.s8 %v2386
    %v2388 = vlaneseq
    %v2389 = vshrl.u32 %v2388, 7
    %v2390 = vsub.s32 %v2387, %v2389
    %v2391 = vrot.slane %v2377, %v2390
    %v2392 = vcombine.low %v2384, %v2391
    %v2393 = vcombine.low %v2353, %v2354
    %v2394 = vcombine.low %v2355, %v2356
    %v2396 = vunpack.c.l.s4 1983009808
    %v2397 = vunpack.c.0.s8 %v2396
    %v2398 = vlaneseq
    %v2399 = vshrl.u32 %v2398, 7
    %v2400 = vsub.s32 %v2397, %v2399
    %v2401 = vrot.slane %v2393, %v2400
    %v2403 = vunpack.c.l.s4 1983009808
    %v2404 = vunpack.c.0.s8 %v2403
    %v2405 = vlaneseq
    %v2406 = vshrl.u32 %v2405, 7
    %v2407 = vsub.s32 %v2404, %v2406
    %v2408 = vrot.slane %v2394, %v2407
    %v2409 = vcombine.low %v2401, %v2408
    %v2410 = vsel %vm301, %v2392, 0
    %v2412 = vsel %vm301, %v2409, 0
    %2414 = vmatprep.subr.mxu0 0.0
    %2415 = vmatpush1.msra.mxu0 %v2357
    %2416 = vmatprep.subr.mxu0 0.0
    %2417 = vmatpush1.msra.mxu0 %v2358
    %2418 = vmatprep.subr.mxu0 0.0
    %2419 = vmatpush1.msra.mxu0 %v2359
    %2420 = vmatprep.subr.mxu0 0.0
    %2421 = vmatpush1.msra.mxu0 %v2360
    %2422 = vmatprep.subr.mxu0 0.0
    %2423 = vmatpush1.msra.mxu0 0.0
    %2424 = vmatprep.subr.mxu0 0.0
    %2425 = vmatpush1.msra.mxu0 0.0
    %2426 = vmatprep.subr.mxu0 0.0
    %2427 = vmatpush1.msra.mxu0 0.0
    %2428 = vmatprep.subr.mxu0 0.0
    %2429 = vmatpush1.msra.mxu0 0.0
    %2430 = vmatprep.subr.mxu0 0.0
    %2431 = vmatpush1.msra.mxu0 0.0
    %2432 = vmatprep.subr.mxu0 0.0
    %2433 = vmatpush1.msra.mxu0 0.0
    %2434 = vmatprep.subr.mxu0 0.0
    %2435 = vmatpush1.msra.mxu0 0.0
    %2436 = vmatprep.subr.mxu0 0.0
    %2437 = vmatpush1.msra.mxu0 0.0
    %2438 = vmatprep.subr.mxu0 0.0
    %2439 = vmatpush1.msra.mxu0 0.0
    %2440 = vmatprep.subr.mxu0 0.0
    %2441 = vmatpush1.msra.mxu0 0.0
    %2442 = vmatprep.subr.mxu0 0.0
    %2443 = vmatpush1.msra.mxu0 0.0
    %2444 = vmatprep.subr.mxu0 0.0
    %2445 = vmatpush1.msra.mxu0 0.0
    %2446 = vmatprep.subr.mxu0 0.0
    %2447 = vmatpush1.msra.mxu0 0.0
    %2448 = vmatprep.subr.mxu0 0.0
    %2449 = vmatpush1.msra.mxu0 0.0
    %2450 = vmatprep.subr.mxu0 0.0
    %2451 = vmatpush1.msra.mxu0 0.0
    %2452 = vmatprep.subr.mxu0 0.0
    %2453 = vmatpush1.msra.mxu0 0.0
    %2454 = vmatprep.subr.mxu0 0.0
    %2455 = vmatpush1.msra.mxu0 0.0
    %2456 = vmatprep.subr.mxu0 0.0
    %2457 = vmatpush1.msra.mxu0 0.0
    %2458 = vmatprep.subr.mxu0 0.0
    %2459 = vmatpush1.msra.mxu0 0.0
    %2460 = vmatprep.subr.mxu0 0.0
    %2461 = vmatpush1.msra.mxu0 0.0
    %2462 = vmatprep.subr.mxu0 0.0
    %2463 = vmatpush1.msra.mxu0 0.0
    %2464 = vmatprep.subr.mxu0 0.0
    %2465 = vmatpush1.msra.mxu0 0.0
    %2466 = vmatprep.subr.mxu0 0.0
    %2467 = vmatpush1.msra.mxu0 0.0
    %2468 = vmatprep.subr.mxu0 0.0
    %2469 = vmatpush1.msra.mxu0 0.0
    %2470 = vmatprep.subr.mxu0 0.0
    %2471 = vmatpush1.msra.mxu0 0.0
    %2472 = vmatprep.subr.mxu0 0.0
    %2473 = vmatpush1.msra.mxu0 0.0
    %2474 = vmatprep.subr.mxu0 0.0
    %2475 = vmatpush1.msra.mxu0 0.0
    %2476 = vmatprep.subr.mxu0 0.0
    %2477 = vmatpush1.msra.mxu0 0.0
    %2478 = vmatprep.mubr.f32.mxu0 0.0
    %2479 = vmatmul.mubr.f32.gmra.mrb[0].mxu0 %v2410
    %v2480 = vpop.f32.mrb[0].mxu0
    %v2481 = vadd.f32 %v2366, %v2480
    %v2482 = vpop.f32.mrb[0].mxu0
    %2483 = vmatprep.mubr.f32.mxu0 0.0
    %2484 = vmatmul.mubr.f32.gmra.mrb[0].mxu0 %v2412
    %v2485 = vpop.f32.mrb[0].mxu0
    %v2486 = vadd.f32 %v2366, %v2485
    %v2487 = vpop.f32.mrb[0].mxu0
    %2488 = vdwg.mxu0
    %v2489 = vtanh.pop %v2481
    %v2490 = vtanh.pop %v2486
    %v2493 = vcombine.high %v2489, %v2489
    %v2495 = vunpack.c.l.s4 1983009808
    %v2496 = vunpack.c.0.s8 %v2495
    %v2497 = vlaneseq
    %v2498 = vshrl.u32 %v2497, 7
    %v2499 = vsub.s32 %v2496, %v2498
    %v2500 = vrot.slane %v2489, %v2499
    %v2502 = vunpack.c.l.s4 1983009808
    %v2503 = vunpack.c.0.s8 %v2502
    %v2504 = vlaneseq
    %v2505 = vshrl.u32 %v2504, 7
    %v2506 = vsub.s32 %v2503, %v2505
    %v2507 = vrot.slane %v2493, %v2506
    %v2508 = vcombine.high %v2500, %v2500
    %v2509 = vcombine.high %v2507, %v2507
    %v2510 = vcombine.high %v2490, %v2490
    %v2512 = vunpack.c.l.s4 1983009808
    %v2513 = vunpack.c.0.s8 %v2512
    %v2514 = vlaneseq
    %v2515 = vshrl.u32 %v2514, 7
    %v2516 = vsub.s32 %v2513, %v2515
    %v2517 = vrot.slane %v2490, %v2516
    %v2519 = vunpack.c.l.s4 1983009808
    %v2520 = vunpack.c.0.s8 %v2519
    %v2521 = vlaneseq
    %v2522 = vshrl.u32 %v2521, 7
    %v2523 = vsub.s32 %v2520, %v2522
    %v2524 = vrot.slane %v2510, %v2523
    %v2525 = vcombine.high %v2517, %v2517
    %v2526 = vcombine.high %v2524, %v2524
    %v2535 = vld [vmem:[#allocation11] sm:$0x1]
    %v2537 = vlaneseq
    %v2538 = vshrl.u32 %v2537, 7
    %v2539 = vsub.s32 0, %v2538
    %v2540 = vrot.slane %v2535, %v2539
    %v2542 = vmul.f32 %v2500, %v2540
    %v2543 = vmul.f32 %v2508, %v2540
    %v2544 = vmul.f32 %v2507, %v2540
    %v2545 = vmul.f32 %v2509, %v2540
    %v2546 = vmul.f32 %v2517, %v2540
    %v2547 = vmul.f32 %v2525, %v2540
    %v2548 = vmul.f32 %v2524, %v2540
    %v2549 = vmul.f32 %v2526, %v2540
    %vm2550 = vcmask 254976
    %v2551 = vsel %vm2550, %v2542, 0.0
    %2552 = vadd.xlane.f32.xlu0 %v2551
    %v2553 = vpop.xlane.xlu0 %2552
    %v2554 = vsel %vm2550, %v2543, 0.0
    %2555 = vadd.xlane.f32.xlu0 %v2554
    %v2556 = vpop.xlane.xlu0 %2555
    %v2557 = vsel %vm2550, %v2544, 0.0
    %2558 = vadd.xlane.f32.xlu0 %v2557
    %v2559 = vpop.xlane.xlu0 %2558
    %v2560 = vsel %vm2550, %v2545, 0.0
    %2561 = vadd.xlane.f32.xlu0 %v2560
    %v2562 = vpop.xlane.xlu0 %2561
    %v2563 = vsel %vm2550, %v2546, 0.0
    %2564 = vadd.xlane.f32.xlu0 %v2563
    %v2565 = vpop.xlane.xlu0 %2564
    %v2566 = vsel %vm2550, %v2547, 0.0
    %2567 = vadd.xlane.f32.xlu0 %v2566
    %v2568 = vpop.xlane.xlu0 %2567
    %v2569 = vsel %vm2550, %v2548, 0.0
    %2570 = vadd.xlane.f32.xlu0 %v2569
    %v2571 = vpop.xlane.xlu0 %2570
    %v2572 = vsel %vm2550, %v2549, 0.0
    %2573 = vadd.xlane.f32.xlu0 %v2572
    %v2574 = vpop.xlane.xlu0 %2573
    %vm2575 = vcmask 1041408
    %v2576 = vsel %vm2575, %v2553, -inf
    %v2577 = vsel %vm2575, %v2556, -inf
    %v2578 = vsel %vm2575, %v2559, -inf
    %v2579 = vsel %vm2575, %v2562, -inf
    %v2580 = vsel %vm2575, %v2565, -inf
    %v2581 = vmax.f32 %v2576, %v2580
    %v2582 = vsel %vm2575, %v2568, -inf
    %v2583 = vmax.f32 %v2577, %v2582
    %v2584 = vsel %vm2575, %v2571, -inf
    %v2585 = vmax.f32 %v2578, %v2584
    %v2586 = vsel %vm2575, %v2574, -inf
    %v2587 = vmax.f32 %v2579, %v2586
    %v2588 = vmax.f32 %v2581, %v2583
    %v2589 = vmax.f32 %v2585, %v2587
    %v2590 = vmax.f32 %v2588, %v2589
    %v2591 = vsub.f32 %v2553, %v2590
    %v2592 = vsub.f32 %v2556, %v2590
    %v2593 = vsub.f32 %v2559, %v2590
    %v2594 = vsub.f32 %v2562, %v2590
    %v2595 = vsub.f32 %v2565, %v2590
    %v2596 = vsub.f32 %v2568, %v2590
    %v2597 = vsub.f32 %v2571, %v2590
    %v2598 = vsub.f32 %v2574, %v2590
    %v2599 = vmul.f32 %v2591, 1.442695
    %v2600 = vpow.pop %v2599
    %v2601 = vmul.f32 %v2592, 1.442695
    %v2602 = vpow.pop %v2601
    %v2603 = vmul.f32 %v2593, 1.442695
    %v2604 = vpow.pop %v2603
    %v2605 = vmul.f32 %v2594, 1.442695
    %v2606 = vpow.pop %v2605
    %v2607 = vmul.f32 %v2595, 1.442695
    %v2608 = vpow.pop %v2607
    %v2609 = vmul.f32 %v2596, 1.442695
    %v2610 = vpow.pop %v2609
    %v2611 = vmul.f32 %v2597, 1.442695
    %v2612 = vpow.pop %v2611
    %v2613 = vmul.f32 %v2598, 1.442695
    %v2614 = vpow.pop %v2613
    %v2615 = vsel %vm2575, %v2600, 0.0
    %v2616 = vsel %vm2575, %v2602, 0.0
    %v2617 = vadd.f32 %v2615, %v2616
    %v2618 = vsel %vm2575, %v2604, 0.0
    %v2619 = vadd.f32 %v2617, %v2618
    %v2620 = vsel %vm2575, %v2606, 0.0
    %v2621 = vadd.f32 %v2619, %v2620
    %v2622 = vsel %vm2575, %v2608, 0.0
    %v2623 = vadd.f32 %v2621, %v2622
    %v2624 = vsel %vm2575, %v2610, 0.0
    %v2625 = vadd.f32 %v2623, %v2624
    %v2626 = vsel %vm2575, %v2612, 0.0
    %v2627 = vadd.f32 %v2625, %v2626
    %v2628 = vsel %vm2575, %v2614, 0.0
    %v2629 = vadd.f32 %v2627, %v2628
    %v2630 = vrcp.pop %v2629
    %v2631 = vmul.f32 %v2600, %v2630
    %v2632 = vmul.f32 %v2602, %v2630
    %v2633 = vmul.f32 %v2604, %v2630
    %v2634 = vmul.f32 %v2606, %v2630
    %v2635 = vmul.f32 %v2608, %v2630
    %v2636 = vmul.f32 %v2610, %v2630
    %v2637 = vmul.f32 %v2612, %v2630
    %v2638 = vmul.f32 %v2614, %v2630
    %v2639 = vmul.f32 %v2631, %v2500
    %v2640 = vmul.f32 %v2632, %v2508
    %v2641 = vmul.f32 %v2633, %v2507
    %v2642 = vmul.f32 %v2634, %v2509
    %v2643 = vmul.f32 %v2635, %v2517
    %v2644 = vmul.f32 %v2636, %v2525
    %v2645 = vmul.f32 %v2637, %v2524
    %v2646 = vmul.f32 %v2638, %v2526
    %v2647 = vsel %vm2550, %v2639, 0.0
    %v2648 = vsel %vm2550, %v2640, 0.0
    %v2649 = vadd.f32 %v2647, %v2648
    %v2650 = vsel %vm2550, %v2641, 0.0
    %v2651 = vadd.f32 %v2649, %v2650
    %v2652 = vsel %vm2550, %v2642, 0.0
    %v2653 = vadd.f32 %v2651, %v2652
    %v2654 = vsel %vm2550, %v2643, 0.0
    %v2655 = vadd.f32 %v2653, %v2654
    %v2656 = vsel %vm2550, %v2644, 0.0
    %v2657 = vadd.f32 %v2655, %v2656
    %v2658 = vsel %vm2550, %v2645, 0.0
    %v2659 = vadd.f32 %v2657, %v2658
    %v2660 = vsel %vm2550, %v2646, 0.0
    %v2661 = vadd.f32 %v2659, %v2660
    %2662 = vst.msk [vmem:[#allocation13] sm:$0x3] %vm2550, %v2661
    // Predicated region
    $region66: #{sequence_encoder_forward.1} parent=1 // pred_check
      _
    $region67: #{sequence_encoder_forward.1} parent=1 // pred_check_branch
      %2664 = sbr.rel (0) target = $region69
    $region68: #{sequence_encoder_forward.1} parent=1 // pred_region
      %s2666 = ssub.s32 32, 32
      %2667 = vsyncadd [#allocation7], %s2666
      %s2669 = sshll.u32 [#allocation13], 4
      %s2670 = int_to_ptr.vmem [resolvable:$true] %s2669
      %2672 = dma.vmem_to_hbm [thread:$0]  %s2670, 32, %s12, [#allocation7]
    $region69: #{sequence_encoder_forward.1} parent=1 // pred_fallthru
      _
    // Predicated region
    $region70: #{sequence_encoder_forward.1} parent=1 // pred_check
      _
    $region71: #{sequence_encoder_forward.1} parent=1 // pred_check_branch
      %2674 = sbr.rel (0) target = $region73
    $region72: #{sequence_encoder_forward.1} parent=1 // pred_region
      %2675 = dma.done [#allocation7], 32
    $region73: #{sequence_encoder_forward.1} parent=1 // pred_fallthru
      _
    %2676 = vsyncpa [#allocation6], 1
    %2677 = vsyncpa [#allocation9], 1
    %2678 = vsyncpa [#allocation12], 1
    %2679 = vsyncpa [#allocation7], 1

</llo_original>
